<compile_context>
chip_gen: v7x
topology: tpu7x:2x2x1
jax: 0.10.0
libtpu: 0.0.40
codegen_flags: <defaults>
</compile_context>

<pallas_src>
import functools

import jax
import jax.numpy as jnp
from jax.experimental import pallas as pl
from jax.experimental.pallas import tpu as pltpu


def _round_up(x, m):
    return ((x + m - 1) // m) * m


def _tpu_generation():
    try:
        kind = jax.devices()[0].device_kind.lower()
    except Exception:
        return "unknown"
    for tag in ("v7", "v6", "v5"):
        if tag in kind:
            return tag
    return "unknown"


def _vmem_budget_and_limit():
    gen = _tpu_generation()
    if gen in ("v5", "v6"):
        return 96 << 20, 100 << 20     # 128 MiB physical VMEM
    return 40 << 20, 48 << 20          # v7x (64 MiB physical) / unknown: conservative


def _choose_oc_tile(OCp, per_tn_bytes, fixed_bytes, budget):
    """Largest OC tile (multiple of 128, divisor of OCp) fitting the VMEM budget."""
    cands = sorted({t for t in (OCp, 512, 256, 128) if t <= OCp and OCp % t == 0},
                   reverse=True)
    for tn in cands:
        if fixed_bytes + per_tn_bytes * tn <= budget:
            return tn
    return cands[-1]


# ---------------- Fused im2col + matmul conv kernel (hot path) -------------- #

def _fused_conv_kernel(x_ref, w_ref, out_ref, *, K, stride, dilation, OH, OW):
    """Direct convolution for one (image, OC-tile) grid step.

    x_ref   : (Hp, Wp, C)    compute dtype — whole padded image, channels in lanes
    w_ref   : (K, K, C, tn)  compute dtype — masked weight tile, OC in lanes
    out_ref : (OH, OW, tn)   float32       — lane-dense output block
    """
    tn = out_ref.shape[-1]
    C = x_ref.shape[-1]
    first = True
    for kh in range(K):
        for kw in range(K):
            h0 = kh * dilation
            w0 = kw * dilation
            hs = pl.ds(h0, OH) if stride == 1 else pl.ds(h0, OH, stride)
            ws = pl.ds(w0, OW) if stride == 1 else pl.ds(w0, OW, stride)
            patch = x_ref[hs, ws, :]                                    # (OH, OW, C)
            contrib = jnp.dot(patch.reshape(OH * OW, C),
                              w_ref[kh, kw, :, :],
                              preferred_element_type=jnp.float32)       # (OH*OW, tn)
            contrib = contrib.reshape(OH, OW, tn)
            if first:
                out_ref[...] = contrib
                first = False
            else:
                out_ref[...] += contrib


def _fused_conv(x_pad, w_kkco, *, K, stride, dilation, OH, OW):
    """x_pad: (N, Hp, Wp, C) compute dtype; w_kkco: (K, K, C, OCp) compute dtype
    -> (N, OH, OW, OCp) f32 (NHWC)."""
    N, Hp, Wp, C = x_pad.shape
    OCp = w_kkco.shape[-1]
    itemsize = jnp.dtype(x_pad.dtype).itemsize

    budget, limit_cap = _vmem_budget_and_limit()
    fixed = 2 * Hp * Wp * C * itemsize                       # x slab, double-buffered
    per_tn = 2 * K * K * C * itemsize + 2 * OH * OW * 4      # weight tile + f32 out block
    tn = _choose_oc_tile(OCp, per_tn, fixed, budget)
    num_oc = OCp // tn
    need = fixed + per_tn * tn
    vmem_limit = int(min(max(need * 2 + (8 << 20), 32 << 20), limit_cap))
    # TODO(synk): very large spatial inputs (non-AlexNet scale) would need an
    # additional OH-tile grid axis with halo handling instead of whole-image slabs.

    kernel = functools.partial(_fused_conv_kernel, K=K, stride=stride,
                               dilation=dilation, OH=OH, OW=OW)
    return pl.pallas_call(
        kernel,
        out_shape=jax.ShapeDtypeStruct((N, OH, OW, OCp), jnp.float32),
        grid_spec=pltpu.PrefetchScalarGridSpec(
            num_scalar_prefetch=0,
            # N innermost: the weight tile index only depends on the outer axis,
            # so it is fetched once per OC tile and stays resident across images.
            grid=(num_oc, N),
            in_specs=[
                pl.BlockSpec((None, Hp, Wp, C), lambda oc, n: (n, 0, 0, 0)),
                pl.BlockSpec((K, K, C, tn), lambda oc, n: (0, 0, 0, oc)),
            ],
            out_specs=pl.BlockSpec((None, OH, OW, tn), lambda oc, n: (n, 0, 0, oc)),
        ),
        compiler_params=pltpu.CompilerParams(
            dimension_semantics=("parallel", "parallel"),
            vmem_limit_bytes=vmem_limit),
    )(x_pad, w_kkco)


# ------------------------------- JAX glue ----------------------------------- #

def l0_conv2d_forward(x, weight, mask_weight=None, *, temp=1.0, stride=1,
                      padding=0, dilation=1, groups=1, l0=True, training=True,
                      mask_trainable=True, ablate_mask=None,
                      compute_dtype=jnp.bfloat16):
    """L0Conv2d.forward. NCHW in, NCHW out.

    compute_dtype: dtype fed to the MXU (accumulation is always f32). Use
    jnp.float32 for layers where the bf16 input cast is not acceptable.
    """
    N, C, H, W = x.shape
    OC, IC, K, K2 = weight.shape
    assert K == K2
    assert IC == C and groups == 1, "groups != 1 not implemented"
    # TODO(synk): groups != 1 and ablate_mask == 'random' (needs random_weight
    # buffer) paths are not implemented in the Pallas path.

    # ---- mask + masked weight: weight-sized elementwise work, left to XLA so
    # it fuses with the transpose/pad/cast below; temp is a runtime value (no
    # kernel recompile when annealed). ----
    if l0:
        assert mask_weight is not None
        if training and mask_trainable:
            mask = jax.nn.sigmoid(jnp.asarray(temp, weight.dtype) * mask_weight)
        elif ablate_mask is None:
            mask = (mask_weight > 0).astype(weight.dtype)
        else:
            mask = (mask_weight <= 0).astype(weight.dtype)
        masked_w = weight * mask
    else:
        masked_w = weight

    OH = (H + 2 * padding - dilation * (K - 1) - 1) // stride + 1
    OW = (W + 2 * padding - dilation * (K - 1) - 1) // stride + 1

    gen = _tpu_generation()
    OCp = _round_up(OC, 128)           # lane-dense output stores
    if gen in ("v6", "v7") and OCp > 256 and OCp % 256 != 0:
        OCp = _round_up(OC, 256)       # match 2x256x256 MXU passes on v6e/v7x

    # weight: (OC, C, K, K) -> (K, K, C, OCp), zero-padded OC columns.
    w_kkco = jnp.pad(masked_w.transpose(2, 3, 1, 0),
                     ((0, 0), (0, 0), (0, 0), (0, OCp - OC))).astype(compute_dtype)

    # x: NCHW -> spatially padded NHWC in compute dtype (one pass over x; this
    # replaces the old K*K-amplified im2col materialization entirely).
    x_pad = jnp.pad(x.transpose(0, 2, 3, 1).astype(compute_dtype),
                    ((0, 0), (padding, padding), (padding, padding), (0, 0)))

    out_nhwc = _fused_conv(x_pad, w_kkco, K=K, stride=stride,
                           dilation=dilation, OH=OH, OW=OW)   # (N, OH, OW, OCp) f32

    # Module semantics return NCHW; consumers that accept NHWC can instead take
    # out_nhwc[..., :OC] directly and skip this epilogue pass.
    return out_nhwc[..., :OC].transpose(0, 3, 1, 2)


# -------------------------------- Demo --------------------------------------- #

if __name__ == "__main__":
    # Small shapes consistent with an AlexNet-style conv layer.
    N, C, H, W = 2, 4, 16, 16
    OC, K = 8, 3
    stride, padding, dilation = 1, 1, 1
    temp = 1.0

    key = jax.random.PRNGKey(0)
    kx, kw, km = jax.random.split(key, 3)

    x = jax.random.normal(kx, (N, C, H, W), dtype=jnp.float32)

    # kaiming_uniform_(a=sqrt(5)) equivalent: U(-b, b), b = 1/sqrt(fan_in)
    fan_in = C * K * K
    bound = 1.0 / jnp.sqrt(jnp.float32(fan_in))
    weight = jax.random.uniform(kw, (OC, C, K, K), jnp.float32, -bound, bound)
    # mask_weight: module inits to constant mask_init_value; use random values
    # so the sigmoid mask path is exercised non-trivially (still deterministic).
    mask_weight = jax.random.normal(km, (OC, C, K, K), dtype=jnp.float32)

    out = l0_conv2d_forward(x, weight, mask_weight, temp=temp,
                            stride=stride, padding=padding, dilation=dilation)
    out = jax.block_until_ready(out)

    # Reference check against XLA conv with the same masked weight (f32).
    # Tolerance loosened because the kernel feeds the MXU bf16 inputs
    # (f32 accumulation); pass compute_dtype=jnp.float32 for exact-ish math.
    masked_w_ref = weight * jax.nn.sigmoid(temp * mask_weight)
    ref = jax.lax.conv_general_dilated(
        x, masked_w_ref,
        window_strides=(stride, stride),
        padding=[(padding, padding), (padding, padding)],
        rhs_dilation=(dilation, dilation),
        dimension_numbers=("NCHW", "OIHW", "NCHW"),
    )
    assert out.shape == (N, OC, H, W)
    err = float(jnp.max(jnp.abs(out - ref)))
    assert jnp.allclose(out, ref, atol=5e-2, rtol=5e-2), err

    print("KERNEL_OK")
</pallas_src>

<mosaic_0001>
module attributes {stable_mosaic.version = 11 : i64} {
  func.func @_fused_conv_kernel(%arg0: i32, %arg1: i32, %arg2: memref<1x18x18x4xbf16, #tpu.memory_space<vmem>>, %arg3: memref<3x3x4x128xbf16, #tpu.memory_space<vmem>>, %arg4: memref<1x16x16x128xf32, #tpu.memory_space<vmem>>) attributes {dimension_semantics = [#tpu.dimension_semantics<parallel>, #tpu.dimension_semantics<parallel>], iteration_bounds = array<i64: 1, 2>, scalar_prefetch = 0 : i64, scratch_operands = 0 : i64, tpu.core_type = #tpu.core_type<tc>, window_params = [{transform_indices = @transform_0, window_bounds = array<i64: 1, 18, 18, 4>}, {transform_indices = @transform_1, window_bounds = array<i64: 3, 3, 4, 128>}, {transform_indices = @transform_2, window_bounds = array<i64: 1, 16, 16, 128>}]} {
    %c0 = arith.constant 0 : index
    %c0_0 = arith.constant 0 : index
    %c0_1 = arith.constant 0 : index
    %c0_2 = arith.constant 0 : index
    %0 = vector.load %arg2[%c0, %c0_0, %c0_1, %c0_2] : memref<1x18x18x4xbf16, #tpu.memory_space<vmem>>, vector<1x16x16x4xbf16>
    %1 = vector.shape_cast %0 : vector<1x16x16x4xbf16> to vector<16x16x4xbf16>
    %2 = vector.shape_cast %1 : vector<16x16x4xbf16> to vector<256x4xbf16>
    %c0_3 = arith.constant 0 : index
    %c0_4 = arith.constant 0 : index
    %c0_5 = arith.constant 0 : index
    %c0_6 = arith.constant 0 : index
    %3 = vector.load %arg3[%c0_3, %c0_4, %c0_5, %c0_6] : memref<3x3x4x128xbf16, #tpu.memory_space<vmem>>, vector<1x1x4x128xbf16>
    %4 = vector.shape_cast %3 : vector<1x1x4x128xbf16> to vector<4x128xbf16>
    %cst = arith.constant dense<0.000000e+00> : vector<256x128xf32>
    %5 = tpu.matmul %2, %4, %cst {dimension_numbers = #tpu.dot_dimension_numbers<[1], [0], [0], [1], [0, 0, 1, 1], [], []>} : vector<256x4xbf16>, vector<4x128xbf16>, vector<256x128xf32> -> vector<256x128xf32>
    %6 = vector.shape_cast %5 : vector<256x128xf32> to vector<16x16x128xf32>
    %c0_7 = arith.constant 0 : index
    %c0_8 = arith.constant 0 : index
    %c0_9 = arith.constant 0 : index
    %c0_10 = arith.constant 0 : index
    %7 = vector.load %arg4[%c0_7, %c0_8, %c0_9, %c0_10] : memref<1x16x16x128xf32, #tpu.memory_space<vmem>>, vector<1x16x16x128xf32>
    %8 = vector.shape_cast %7 : vector<1x16x16x128xf32> to vector<16x16x128xf32>
    %9 = vector.shape_cast %6 : vector<16x16x128xf32> to vector<1x16x16x128xf32>
    tpu.vector_store %arg4[%c0_7, %c0_8, %c0_9, %c0_10], %9 {strides = array<i32>} : memref<1x16x16x128xf32, #tpu.memory_space<vmem>>, vector<1x16x16x128xf32>,
    %c0_11 = arith.constant 0 : index
    %c0_12 = arith.constant 0 : index
    %c1 = arith.constant 1 : index
    %c0_13 = arith.constant 0 : index
    %10 = vector.load %arg2[%c0_11, %c0_12, %c1, %c0_13] : memref<1x18x18x4xbf16, #tpu.memory_space<vmem>>, vector<1x16x16x4xbf16>
    %11 = vector.shape_cast %10 : vector<1x16x16x4xbf16> to vector<16x16x4xbf16>
    %12 = vector.shape_cast %11 : vector<16x16x4xbf16> to vector<256x4xbf16>
    %c0_14 = arith.constant 0 : index
    %c1_15 = arith.constant 1 : index
    %c0_16 = arith.constant 0 : index
    %c0_17 = arith.constant 0 : index
    %13 = vector.load %arg3[%c0_14, %c1_15, %c0_16, %c0_17] : memref<3x3x4x128xbf16, #tpu.memory_space<vmem>>, vector<1x1x4x128xbf16>
    %14 = vector.shape_cast %13 : vector<1x1x4x128xbf16> to vector<4x128xbf16>
    %cst_18 = arith.constant dense<0.000000e+00> : vector<256x128xf32>
    %15 = tpu.matmul %12, %14, %cst_18 {dimension_numbers = #tpu.dot_dimension_numbers<[1], [0], [0], [1], [0, 0, 1, 1], [], []>} : vector<256x4xbf16>, vector<4x128xbf16>, vector<256x128xf32> -> vector<256x128xf32>
    %16 = vector.shape_cast %15 : vector<256x128xf32> to vector<16x16x128xf32>
    %c0_19 = arith.constant 0 : index
    %c0_20 = arith.constant 0 : index
    %c0_21 = arith.constant 0 : index
    %c0_22 = arith.constant 0 : index
    %17 = vector.load %arg4[%c0_19, %c0_20, %c0_21, %c0_22] : memref<1x16x16x128xf32, #tpu.memory_space<vmem>>, vector<1x16x16x128xf32>
    %18 = vector.shape_cast %17 : vector<1x16x16x128xf32> to vector<16x16x128xf32>
    %19 = arith.addf %18, %16 : vector<16x16x128xf32>
    %c0_23 = arith.constant 0 : index
    %c0_24 = arith.constant 0 : index
    %c0_25 = arith.constant 0 : index
    %c0_26 = arith.constant 0 : index
    %20 = vector.load %arg4[%c0_23, %c0_24, %c0_25, %c0_26] : memref<1x16x16x128xf32, #tpu.memory_space<vmem>>, vector<1x16x16x128xf32>
    %21 = vector.shape_cast %20 : vector<1x16x16x128xf32> to vector<16x16x128xf32>
    %22 = vector.shape_cast %19 : vector<16x16x128xf32> to vector<1x16x16x128xf32>
    tpu.vector_store %arg4[%c0_23, %c0_24, %c0_25, %c0_26], %22 {strides = array<i32>} : memref<1x16x16x128xf32, #tpu.memory_space<vmem>>, vector<1x16x16x128xf32>,
    %c0_27 = arith.constant 0 : index
    %c0_28 = arith.constant 0 : index
    %c2 = arith.constant 2 : index
    %c0_29 = arith.constant 0 : index
    %23 = vector.load %arg2[%c0_27, %c0_28, %c2, %c0_29] : memref<1x18x18x4xbf16, #tpu.memory_space<vmem>>, vector<1x16x16x4xbf16>
    %24 = vector.shape_cast %23 : vector<1x16x16x4xbf16> to vector<16x16x4xbf16>
    %25 = vector.shape_cast %24 : vector<16x16x4xbf16> to vector<256x4xbf16>
    %c0_30 = arith.constant 0 : index
    %c2_31 = arith.constant 2 : index
    %c0_32 = arith.constant 0 : index
    %c0_33 = arith.constant 0 : index
    %26 = vector.load %arg3[%c0_30, %c2_31, %c0_32, %c0_33] : memref<3x3x4x128xbf16, #tpu.memory_space<vmem>>, vector<1x1x4x128xbf16>
    %27 = vector.shape_cast %26 : vector<1x1x4x128xbf16> to vector<4x128xbf16>
    %cst_34 = arith.constant dense<0.000000e+00> : vector<256x128xf32>
    %28 = tpu.matmul %25, %27, %cst_34 {dimension_numbers = #tpu.dot_dimension_numbers<[1], [0], [0], [1], [0, 0, 1, 1], [], []>} : vector<256x4xbf16>, vector<4x128xbf16>, vector<256x128xf32> -> vector<256x128xf32>
    %29 = vector.shape_cast %28 : vector<256x128xf32> to vector<16x16x128xf32>
    %c0_35 = arith.constant 0 : index
    %c0_36 = arith.constant 0 : index
    %c0_37 = arith.constant 0 : index
    %c0_38 = arith.constant 0 : index
    %30 = vector.load %arg4[%c0_35, %c0_36, %c0_37, %c0_38] : memref<1x16x16x128xf32, #tpu.memory_space<vmem>>, vector<1x16x16x128xf32>
    %31 = vector.shape_cast %30 : vector<1x16x16x128xf32> to vector<16x16x128xf32>
    %32 = arith.addf %31, %29 : vector<16x16x128xf32>
    %c0_39 = arith.constant 0 : index
    %c0_40 = arith.constant 0 : index
    %c0_41 = arith.constant 0 : index
    %c0_42 = arith.constant 0 : index
    %33 = vector.load %arg4[%c0_39, %c0_40, %c0_41, %c0_42] : memref<1x16x16x128xf32, #tpu.memory_space<vmem>>, vector<1x16x16x128xf32>
    %34 = vector.shape_cast %33 : vector<1x16x16x128xf32> to vector<16x16x128xf32>
    %35 = vector.shape_cast %32 : vector<16x16x128xf32> to vector<1x16x16x128xf32>
    tpu.vector_store %arg4[%c0_39, %c0_40, %c0_41, %c0_42], %35 {strides = array<i32>} : memref<1x16x16x128xf32, #tpu.memory_space<vmem>>, vector<1x16x16x128xf32>,
    %c0_43 = arith.constant 0 : index
    %c1_44 = arith.constant 1 : index
    %c0_45 = arith.constant 0 : index
    %c0_46 = arith.constant 0 : index
    %36 = vector.load %arg2[%c0_43, %c1_44, %c0_45, %c0_46] : memref<1x18x18x4xbf16, #tpu.memory_space<vmem>>, vector<1x16x16x4xbf16>
    %37 = vector.shape_cast %36 : vector<1x16x16x4xbf16> to vector<16x16x4xbf16>
    %38 = vector.shape_cast %37 : vector<16x16x4xbf16> to vector<256x4xbf16>
    %c1_47 = arith.constant 1 : index
    %c0_48 = arith.constant 0 : index
    %c0_49 = arith.constant 0 : index
    %c0_50 = arith.constant 0 : index
    %39 = vector.load %arg3[%c1_47, %c0_48, %c0_49, %c0_50] : memref<3x3x4x128xbf16, #tpu.memory_space<vmem>>, vector<1x1x4x128xbf16>
    %40 = vector.shape_cast %39 : vector<1x1x4x128xbf16> to vector<4x128xbf16>
    %cst_51 = arith.constant dense<0.000000e+00> : vector<256x128xf32>
    %41 = tpu.matmul %38, %40, %cst_51 {dimension_numbers = #tpu.dot_dimension_numbers<[1], [0], [0], [1], [0, 0, 1, 1], [], []>} : vector<256x4xbf16>, vector<4x128xbf16>, vector<256x128xf32> -> vector<256x128xf32>
    %42 = vector.shape_cast %41 : vector<256x128xf32> to vector<16x16x128xf32>
    %c0_52 = arith.constant 0 : index
    %c0_53 = arith.constant 0 : index
    %c0_54 = arith.constant 0 : index
    %c0_55 = arith.constant 0 : index
    %43 = vector.load %arg4[%c0_52, %c0_53, %c0_54, %c0_55] : memref<1x16x16x128xf32, #tpu.memory_space<vmem>>, vector<1x16x16x128xf32>
    %44 = vector.shape_cast %43 : vector<1x16x16x128xf32> to vector<16x16x128xf32>
    %45 = arith.addf %44, %42 : vector<16x16x128xf32>
    %c0_56 = arith.constant 0 : index
    %c0_57 = arith.constant 0 : index
    %c0_58 = arith.constant 0 : index
    %c0_59 = arith.constant 0 : index
    %46 = vector.load %arg4[%c0_56, %c0_57, %c0_58, %c0_59] : memref<1x16x16x128xf32, #tpu.memory_space<vmem>>, vector<1x16x16x128xf32>
    %47 = vector.shape_cast %46 : vector<1x16x16x128xf32> to vector<16x16x128xf32>
    %48 = vector.shape_cast %45 : vector<16x16x128xf32> to vector<1x16x16x128xf32>
    tpu.vector_store %arg4[%c0_56, %c0_57, %c0_58, %c0_59], %48 {strides = array<i32>} : memref<1x16x16x128xf32, #tpu.memory_space<vmem>>, vector<1x16x16x128xf32>,
    %c0_60 = arith.constant 0 : index
    %c1_61 = arith.constant 1 : index
    %c1_62 = arith.constant 1 : index
    %c0_63 = arith.constant 0 : index
    %49 = vector.load %arg2[%c0_60, %c1_61, %c1_62, %c0_63] : memref<1x18x18x4xbf16, #tpu.memory_space<vmem>>, vector<1x16x16x4xbf16>
    %50 = vector.shape_cast %49 : vector<1x16x16x4xbf16> to vector<16x16x4xbf16>
    %51 = vector.shape_cast %50 : vector<16x16x4xbf16> to vector<256x4xbf16>
    %c1_64 = arith.constant 1 : index
    %c1_65 = arith.constant 1 : index
    %c0_66 = arith.constant 0 : index
    %c0_67 = arith.constant 0 : index
    %52 = vector.load %arg3[%c1_64, %c1_65, %c0_66, %c0_67] : memref<3x3x4x128xbf16, #tpu.memory_space<vmem>>, vector<1x1x4x128xbf16>
    %53 = vector.shape_cast %52 : vector<1x1x4x128xbf16> to vector<4x128xbf16>
    %cst_68 = arith.constant dense<0.000000e+00> : vector<256x128xf32>
    %54 = tpu.matmul %51, %53, %cst_68 {dimension_numbers = #tpu.dot_dimension_numbers<[1], [0], [0], [1], [0, 0, 1, 1], [], []>} : vector<256x4xbf16>, vector<4x128xbf16>, vector<256x128xf32> -> vector<256x128xf32>
    %55 = vector.shape_cast %54 : vector<256x128xf32> to vector<16x16x128xf32>
    %c0_69 = arith.constant 0 : index
    %c0_70 = arith.constant 0 : index
    %c0_71 = arith.constant 0 : index
    %c0_72 = arith.constant 0 : index
    %56 = vector.load %arg4[%c0_69, %c0_70, %c0_71, %c0_72] : memref<1x16x16x128xf32, #tpu.memory_space<vmem>>, vector<1x16x16x128xf32>
    %57 = vector.shape_cast %56 : vector<1x16x16x128xf32> to vector<16x16x128xf32>
    %58 = arith.addf %57, %55 : vector<16x16x128xf32>
    %c0_73 = arith.constant 0 : index
    %c0_74 = arith.constant 0 : index
    %c0_75 = arith.constant 0 : index
    %c0_76 = arith.constant 0 : index
    %59 = vector.load %arg4[%c0_73, %c0_74, %c0_75, %c0_76] : memref<1x16x16x128xf32, #tpu.memory_space<vmem>>, vector<1x16x16x128xf32>
    %60 = vector.shape_cast %59 : vector<1x16x16x128xf32> to vector<16x16x128xf32>
    %61 = vector.shape_cast %58 : vector<16x16x128xf32> to vector<1x16x16x128xf32>
    tpu.vector_store %arg4[%c0_73, %c0_74, %c0_75, %c0_76], %61 {strides = array<i32>} : memref<1x16x16x128xf32, #tpu.memory_space<vmem>>, vector<1x16x16x128xf32>,
    %c0_77 = arith.constant 0 : index
    %c1_78 = arith.constant 1 : index
    %c2_79 = arith.constant 2 : index
    %c0_80 = arith.constant 0 : index
    %62 = vector.load %arg2[%c0_77, %c1_78, %c2_79, %c0_80] : memref<1x18x18x4xbf16, #tpu.memory_space<vmem>>, vector<1x16x16x4xbf16>
    %63 = vector.shape_cast %62 : vector<1x16x16x4xbf16> to vector<16x16x4xbf16>
    %64 = vector.shape_cast %63 : vector<16x16x4xbf16> to vector<256x4xbf16>
    %c1_81 = arith.constant 1 : index
    %c2_82 = arith.constant 2 : index
    %c0_83 = arith.constant 0 : index
    %c0_84 = arith.constant 0 : index
    %65 = vector.load %arg3[%c1_81, %c2_82, %c0_83, %c0_84] : memref<3x3x4x128xbf16, #tpu.memory_space<vmem>>, vector<1x1x4x128xbf16>
    %66 = vector.shape_cast %65 : vector<1x1x4x128xbf16> to vector<4x128xbf16>
    %cst_85 = arith.constant dense<0.000000e+00> : vector<256x128xf32>
    %67 = tpu.matmul %64, %66, %cst_85 {dimension_numbers = #tpu.dot_dimension_numbers<[1], [0], [0], [1], [0, 0, 1, 1], [], []>} : vector<256x4xbf16>, vector<4x128xbf16>, vector<256x128xf32> -> vector<256x128xf32>
    %68 = vector.shape_cast %67 : vector<256x128xf32> to vector<16x16x128xf32>
    %c0_86 = arith.constant 0 : index
    %c0_87 = arith.constant 0 : index
    %c0_88 = arith.constant 0 : index
    %c0_89 = arith.constant 0 : index
    %69 = vector.load %arg4[%c0_86, %c0_87, %c0_88, %c0_89] : memref<1x16x16x128xf32, #tpu.memory_space<vmem>>, vector<1x16x16x128xf32>
    %70 = vector.shape_cast %69 : vector<1x16x16x128xf32> to vector<16x16x128xf32>
    %71 = arith.addf %70, %68 : vector<16x16x128xf32>
    %c0_90 = arith.constant 0 : index
    %c0_91 = arith.constant 0 : index
    %c0_92 = arith.constant 0 : index
    %c0_93 = arith.constant 0 : index
    %72 = vector.load %arg4[%c0_90, %c0_91, %c0_92, %c0_93] : memref<1x16x16x128xf32, #tpu.memory_space<vmem>>, vector<1x16x16x128xf32>
    %73 = vector.shape_cast %72 : vector<1x16x16x128xf32> to vector<16x16x128xf32>
    %74 = vector.shape_cast %71 : vector<16x16x128xf32> to vector<1x16x16x128xf32>
    tpu.vector_store %arg4[%c0_90, %c0_91, %c0_92, %c0_93], %74 {strides = array<i32>} : memref<1x16x16x128xf32, #tpu.memory_space<vmem>>, vector<1x16x16x128xf32>,
    %c0_94 = arith.constant 0 : index
    %c2_95 = arith.constant 2 : index
    %c0_96 = arith.constant 0 : index
    %c0_97 = arith.constant 0 : index
    %75 = vector.load %arg2[%c0_94, %c2_95, %c0_96, %c0_97] : memref<1x18x18x4xbf16, #tpu.memory_space<vmem>>, vector<1x16x16x4xbf16>
    %76 = vector.shape_cast %75 : vector<1x16x16x4xbf16> to vector<16x16x4xbf16>
    %77 = vector.shape_cast %76 : vector<16x16x4xbf16> to vector<256x4xbf16>
    %c2_98 = arith.constant 2 : index
    %c0_99 = arith.constant 0 : index
    %c0_100 = arith.constant 0 : index
    %c0_101 = arith.constant 0 : index
    %78 = vector.load %arg3[%c2_98, %c0_99, %c0_100, %c0_101] : memref<3x3x4x128xbf16, #tpu.memory_space<vmem>>, vector<1x1x4x128xbf16>
    %79 = vector.shape_cast %78 : vector<1x1x4x128xbf16> to vector<4x128xbf16>
    %cst_102 = arith.constant dense<0.000000e+00> : vector<256x128xf32>
    %80 = tpu.matmul %77, %79, %cst_102 {dimension_numbers = #tpu.dot_dimension_numbers<[1], [0], [0], [1], [0, 0, 1, 1], [], []>} : vector<256x4xbf16>, vector<4x128xbf16>, vector<256x128xf32> -> vector<256x128xf32>
    %81 = vector.shape_cast %80 : vector<256x128xf32> to vector<16x16x128xf32>
    %c0_103 = arith.constant 0 : index
    %c0_104 = arith.constant 0 : index
    %c0_105 = arith.constant 0 : index
    %c0_106 = arith.constant 0 : index
    %82 = vector.load %arg4[%c0_103, %c0_104, %c0_105, %c0_106] : memref<1x16x16x128xf32, #tpu.memory_space<vmem>>, vector<1x16x16x128xf32>
    %83 = vector.shape_cast %82 : vector<1x16x16x128xf32> to vector<16x16x128xf32>
    %84 = arith.addf %83, %81 : vector<16x16x128xf32>
    %c0_107 = arith.constant 0 : index
    %c0_108 = arith.constant 0 : index
    %c0_109 = arith.constant 0 : index
    %c0_110 = arith.constant 0 : index
    %85 = vector.load %arg4[%c0_107, %c0_108, %c0_109, %c0_110] : memref<1x16x16x128xf32, #tpu.memory_space<vmem>>, vector<1x16x16x128xf32>
    %86 = vector.shape_cast %85 : vector<1x16x16x128xf32> to vector<16x16x128xf32>
    %87 = vector.shape_cast %84 : vector<16x16x128xf32> to vector<1x16x16x128xf32>
    tpu.vector_store %arg4[%c0_107, %c0_108, %c0_109, %c0_110], %87 {strides = array<i32>} : memref<1x16x16x128xf32, #tpu.memory_space<vmem>>, vector<1x16x16x128xf32>,
    %c0_111 = arith.constant 0 : index
    %c2_112 = arith.constant 2 : index
    %c1_113 = arith.constant 1 : index
    %c0_114 = arith.constant 0 : index
    %88 = vector.load %arg2[%c0_111, %c2_112, %c1_113, %c0_114] : memref<1x18x18x4xbf16, #tpu.memory_space<vmem>>, vector<1x16x16x4xbf16>
    %89 = vector.shape_cast %88 : vector<1x16x16x4xbf16> to vector<16x16x4xbf16>
    %90 = vector.shape_cast %89 : vector<16x16x4xbf16> to vector<256x4xbf16>
    %c2_115 = arith.constant 2 : index
    %c1_116 = arith.constant 1 : index
    %c0_117 = arith.constant 0 : index
    %c0_118 = arith.constant 0 : index
    %91 = vector.load %arg3[%c2_115, %c1_116, %c0_117, %c0_118] : memref<3x3x4x128xbf16, #tpu.memory_space<vmem>>, vector<1x1x4x128xbf16>
    %92 = vector.shape_cast %91 : vector<1x1x4x128xbf16> to vector<4x128xbf16>
    %cst_119 = arith.constant dense<0.000000e+00> : vector<256x128xf32>
    %93 = tpu.matmul %90, %92, %cst_119 {dimension_numbers = #tpu.dot_dimension_numbers<[1], [0], [0], [1], [0, 0, 1, 1], [], []>} : vector<256x4xbf16>, vector<4x128xbf16>, vector<256x128xf32> -> vector<256x128xf32>
    %94 = vector.shape_cast %93 : vector<256x128xf32> to vector<16x16x128xf32>
    %c0_120 = arith.constant 0 : index
    %c0_121 = arith.constant 0 : index
    %c0_122 = arith.constant 0 : index
    %c0_123 = arith.constant 0 : index
    %95 = vector.load %arg4[%c0_120, %c0_121, %c0_122, %c0_123] : memref<1x16x16x128xf32, #tpu.memory_space<vmem>>, vector<1x16x16x128xf32>
    %96 = vector.shape_cast %95 : vector<1x16x16x128xf32> to vector<16x16x128xf32>
    %97 = arith.addf %96, %94 : vector<16x16x128xf32>
    %c0_124 = arith.constant 0 : index
    %c0_125 = arith.constant 0 : index
    %c0_126 = arith.constant 0 : index
    %c0_127 = arith.constant 0 : index
    %98 = vector.load %arg4[%c0_124, %c0_125, %c0_126, %c0_127] : memref<1x16x16x128xf32, #tpu.memory_space<vmem>>, vector<1x16x16x128xf32>
    %99 = vector.shape_cast %98 : vector<1x16x16x128xf32> to vector<16x16x128xf32>
    %100 = vector.shape_cast %97 : vector<16x16x128xf32> to vector<1x16x16x128xf32>
    tpu.vector_store %arg4[%c0_124, %c0_125, %c0_126, %c0_127], %100 {strides = array<i32>} : memref<1x16x16x128xf32, #tpu.memory_space<vmem>>, vector<1x16x16x128xf32>,
    %c0_128 = arith.constant 0 : index
    %c2_129 = arith.constant 2 : index
    %c2_130 = arith.constant 2 : index
    %c0_131 = arith.constant 0 : index
    %101 = vector.load %arg2[%c0_128, %c2_129, %c2_130, %c0_131] : memref<1x18x18x4xbf16, #tpu.memory_space<vmem>>, vector<1x16x16x4xbf16>
    %102 = vector.shape_cast %101 : vector<1x16x16x4xbf16> to vector<16x16x4xbf16>
    %103 = vector.shape_cast %102 : vector<16x16x4xbf16> to vector<256x4xbf16>
    %c2_132 = arith.constant 2 : index
    %c2_133 = arith.constant 2 : index
    %c0_134 = arith.constant 0 : index
    %c0_135 = arith.constant 0 : index
    %104 = vector.load %arg3[%c2_132, %c2_133, %c0_134, %c0_135] : memref<3x3x4x128xbf16, #tpu.memory_space<vmem>>, vector<1x1x4x128xbf16>
    %105 = vector.shape_cast %104 : vector<1x1x4x128xbf16> to vector<4x128xbf16>
    %cst_136 = arith.constant dense<0.000000e+00> : vector<256x128xf32>
    %106 = tpu.matmul %103, %105, %cst_136 {dimension_numbers = #tpu.dot_dimension_numbers<[1], [0], [0], [1], [0, 0, 1, 1], [], []>} : vector<256x4xbf16>, vector<4x128xbf16>, vector<256x128xf32> -> vector<256x128xf32>
    %107 = vector.shape_cast %106 : vector<256x128xf32> to vector<16x16x128xf32>
    %c0_137 = arith.constant 0 : index
    %c0_138 = arith.constant 0 : index
    %c0_139 = arith.constant 0 : index
    %c0_140 = arith.constant 0 : index
    %108 = vector.load %arg4[%c0_137, %c0_138, %c0_139, %c0_140] : memref<1x16x16x128xf32, #tpu.memory_space<vmem>>, vector<1x16x16x128xf32>
    %109 = vector.shape_cast %108 : vector<1x16x16x128xf32> to vector<16x16x128xf32>
    %110 = arith.addf %109, %107 : vector<16x16x128xf32>
    %c0_141 = arith.constant 0 : index
    %c0_142 = arith.constant 0 : index
    %c0_143 = arith.constant 0 : index
    %c0_144 = arith.constant 0 : index
    %111 = vector.load %arg4[%c0_141, %c0_142, %c0_143, %c0_144] : memref<1x16x16x128xf32, #tpu.memory_space<vmem>>, vector<1x16x16x128xf32>
    %112 = vector.shape_cast %111 : vector<1x16x16x128xf32> to vector<16x16x128xf32>
    %113 = vector.shape_cast %110 : vector<16x16x128xf32> to vector<1x16x16x128xf32>
    tpu.vector_store %arg4[%c0_141, %c0_142, %c0_143, %c0_144], %113 {strides = array<i32>} : memref<1x16x16x128xf32, #tpu.memory_space<vmem>>, vector<1x16x16x128xf32>,
    return
  }
  func.func @transform_0(%arg0: i32, %arg1: i32) -> (i32, i32, i32, i32) {
    %c0_i32 = arith.constant 0 : i32
    %c0_i32_0 = arith.constant 0 : i32
    %c0_i32_1 = arith.constant 0 : i32
    %c0_i32_2 = arith.constant 0 : i32
    return %arg1, %c0_i32, %c0_i32_0, %c0_i32_1 : i32, i32, i32, i32
  }
  func.func @transform_1(%arg0: i32, %arg1: i32) -> (i32, i32, i32, i32) {
    %c0_i32 = arith.constant 0 : i32
    %c0_i32_0 = arith.constant 0 : i32
    %c0_i32_1 = arith.constant 0 : i32
    %c0_i32_2 = arith.constant 0 : i32
    return %c0_i32, %c0_i32_0, %c0_i32_1, %arg0 : i32, i32, i32, i32
  }
  func.func @transform_2(%arg0: i32, %arg1: i32) -> (i32, i32, i32, i32) {
    %c0_i32 = arith.constant 0 : i32
    %c0_i32_0 = arith.constant 0 : i32
    %c0_i32_1 = arith.constant 0 : i32
    return %arg1, %c0_i32, %c0_i32_0, %arg0 : i32, i32, i32, i32
  }
}

</mosaic_0001>

<llo_original>
// kernel: tpu_custom_call.1
$region0: #{tpu_custom_call.1}
  #allocation0 [shape = 'u32[]', space=smem, size = 0x4, offset = 0x4, fixed_abs, tag = 'smem constant byte address 0x4 - core index']
  #allocation1 [shape = 'u32[144,128]{1,0:T(1,128)}', space=vmem, size = 0x12000, scoped, tag = 'internal scratch']
  %s0 = inlined_call_operand.vmem [shape: bf16[2,18,18,4], index: 0, kind: input, shape index: {}]
  %s1 = inlined_call_operand.vmem [shape: bf16[3,3,4,128], index: 1, kind: input, shape index: {}]
  %s2 = inlined_call_operand.hbm [shape: f32[2,16,16,128], index: 2, kind: output, shape index: {}]
  %s3 = sld [smem:[#allocation0]]
  $region41: #{tpu_custom_call.1} parent=0
    _
  %s5 = ssub.s32 1, %s3
  %s6 = scalar_select 0, %s5, %s3
  $region1: #{tpu_custom_call.1} parent=0
    #allocation2 [shape = 'u8[262144]{0}', space=vmem, size = 0x40000, scoped, tag = 'output window, operand 0']
    #allocation3 [shape = 's32[2]{0}', space=sflag, size = 0x8, scoped, tag = 'scoped memory for tpu_custom_call.1']
    %7 = vsyncpa [#allocation3], 0
    %s8 = scalar_lea.sflag [#allocation3], 1
    %9 = vsyncpa %s8, 0
    loop: start=0, step=1, limit=4
    $region2: #{tpu_custom_call.1} parent=1 // loop_pre_header
      _
    $region3: #{tpu_custom_call.1} parent=1 // loop_header
      %s11 = sphi 0, %s15
      %p12 = scmp.ge.s32.totalorder %s11, 4
      %s18 = sphi 0, %s30
      %s19 = sphi 0, %s26
      %s20 = sphi 0, %s18
      %s21 = sphi 0, %s19
      %s22 = sphi 0, %s20
      %s23 = sphi 0, %s21
      %s33 = sphi 0, %s35
      %s36 = sphi 0, %s33
      %s37 = sphi 0, %s36
      %s53 = sphi 0, %s37
      %s59 = sphi 0, %s61
      %s62 = sphi 0, %s59
      %s63 = sphi 0, %s62
      %s79 = sphi 0, %s63
      %s87 = sphi 0, %s89
      %s90 = sphi 0, %s87
      %s91 = sphi 0, %s90
      %s107 = sphi 0, %s91
    $region4: #{tpu_custom_call.1} parent=1 // loop_header_branch
      %14 = sbr.rel (%p12) target = $region8
    $region5: #{tpu_custom_call.1} parent=1 // loop_body
      %s16 = ssub.s32 %s11, 1
      %s17 = ssub.s32 %s11, 2
      %s24 = sadd.s32 1, %s19
      %p25 = scmp.ge.s32.totalorder %s24, 2
      %s26 = scalar_select %p25, 0, %s24
      %s27 = sadd.s32 1, %s18
      %s28 = scalar_select %p25, %s27, %s18
      %p29 = scmp.ge.s32.totalorder %s28, 1
      %s30 = scalar_select %p29, 0, %s28
      %s31 = ssub.s32 %s19, %s26
      %p32 = scmp.eq.s32.totalorder %s31, 0
      %s34 = sadd.s32 %s33, 1
      %s35 = scalar_select %p32, %s33, %s34
      %p38 = pneg %p32
      %p39 = scmp.eq.s32.totalorder %s11, 1
      %p40 = por %p38, %p39
      %p41 = scmp.ne.s32.totalorder %s33, %s36
      %p42 = scmp.eq.s32.totalorder %s11, 0
      %p43 = por %p41, %p42
      %p44 = scmp.ne.s32.totalorder %s33, %s36
      %p45 = scmp.eq.s32.totalorder %s16, 1
      %p46 = por %p44, %p45
      %p47 = scmp.ne.s32.totalorder %s36, %s37
      %p48 = scmp.eq.s32.totalorder %s16, 0
      %p49 = por %p47, %p48
      %p50 = scmp.ne.s32.totalorder %s36, %s37
      %p51 = scmp.eq.s32.totalorder %s17, 1
      %p52 = por %p50, %p51
      %p54 = scmp.ne.s32.totalorder %s37, %s53
      %p55 = scmp.eq.s32.totalorder %s17, 0
      %p56 = por %p54, %p55
      %s57 = ssub.s32 %s18, %s30
      %p58 = scmp.eq.s32.totalorder %s57, 0
      %s60 = sadd.s32 %s59, 1
      %s61 = scalar_select %p58, %s59, %s60
      %p64 = pneg %p58
      %p65 = scmp.eq.s32.totalorder %s11, 1
      %p66 = por %p64, %p65
      %p67 = scmp.ne.s32.totalorder %s59, %s62
      %p68 = scmp.eq.s32.totalorder %s11, 0
      %p69 = por %p67, %p68
      %p70 = scmp.ne.s32.totalorder %s59, %s62
      %p71 = scmp.eq.s32.totalorder %s16, 1
      %p72 = por %p70, %p71
      %p73 = scmp.ne.s32.totalorder %s62, %s63
      %p74 = scmp.eq.s32.totalorder %s16, 0
      %p75 = por %p73, %p74
      %p76 = scmp.ne.s32.totalorder %s62, %s63
      %p77 = scmp.eq.s32.totalorder %s17, 1
      %p78 = por %p76, %p77
      %p80 = scmp.ne.s32.totalorder %s63, %s79
      %p81 = scmp.eq.s32.totalorder %s17, 0
      %p82 = por %p80, %p81
      %s83 = ssub.s32 %s19, %s26
      %s84 = ssub.s32 %s18, %s30
      %s85 = sor.u32 %s83, %s84
      %p86 = scmp.eq.s32.totalorder %s85, 0
      %s88 = sadd.s32 %s87, 1
      %s89 = scalar_select %p86, %s87, %s88
      %p92 = pneg %p86
      %p93 = scmp.eq.s32.totalorder %s11, 1
      %p94 = por %p92, %p93
      %p95 = scmp.ne.s32.totalorder %s87, %s90
      %p96 = scmp.eq.s32.totalorder %s11, 0
      %p97 = por %p95, %p96
      %p98 = scmp.ne.s32.totalorder %s87, %s90
      %p99 = scmp.eq.s32.totalorder %s16, 1
      %p100 = por %p98, %p99
      %p101 = scmp.ne.s32.totalorder %s90, %s91
      %p102 = scmp.eq.s32.totalorder %s16, 0
      %p103 = por %p101, %p102
      %p104 = scmp.ne.s32.totalorder %s90, %s91
      %p105 = scmp.eq.s32.totalorder %s17, 1
      %p106 = por %p104, %p105
      %p108 = scmp.ne.s32.totalorder %s91, %s107
      %p109 = scmp.eq.s32.totalorder %s17, 0
      %p110 = por %p108, %p109
      %p111 = scmp.le.s32.totalorder 1, %s11
      %p112 = scmp.lt.s32.totalorder %s11, 3
      %p113 = pnand %p111, %p112
      %p114 = pneg %p113
      // Predicated region
      $region9: #{tpu_custom_call.1} parent=5 // pred_check
        _
      $region10: #{tpu_custom_call.1} parent=5 // pred_check_branch
        %116 = sbr.rel (%p113) target = $region12
      $region11: #{tpu_custom_call.1} parent=5 // pred_region
        %s117 = ssub.s32 %s11, 1
        // Predicated region
        $region13: #{tpu_custom_call.1} parent=11 // pred_check
          %p118 = pneg %p75
        $region14: #{tpu_custom_call.1} parent=11 // pred_check_branch
          %120 = sbr.rel (%p118) target = $region16
        $region15: #{tpu_custom_call.1} parent=11 // pred_region
          %p121 = scmp.lt.s32.totalorder %s20, 0
          %s122 = scalar_select %p121, %s20, 0
          %s123 = smul.addr %s122, 2
          %s124 = scalar_lea.vmem %s1, %s123
        $region16: #{tpu_custom_call.1} parent=11 // pred_fallthru
          _
      $region12: #{tpu_custom_call.1} parent=5 // pred_fallthru
        _
      %p125 = scmp.lt.s32.totalorder %s11, 2
      // Predicated region
      $region17: #{tpu_custom_call.1} parent=5 // pred_check
        %p126 = pneg %p125
      $region18: #{tpu_custom_call.1} parent=5 // pred_check_branch
        %128 = sbr.rel (%p126) target = $region20
      $region19: #{tpu_custom_call.1} parent=5 // pred_region
        // Predicated region
        $region21: #{tpu_custom_call.1} parent=19 // pred_check
          %p129 = pneg %p43
        $region22: #{tpu_custom_call.1} parent=19 // pred_check_branch
          %131 = sbr.rel (%p129) target = $region24
        $region23: #{tpu_custom_call.1} parent=19 // pred_region
          %p132 = scmp.lt.s32.totalorder %s19, 1
          %s133 = scalar_select %p132, %s19, 1
          %s134 = smul.addr %s133, 54
          %s135 = smul.addr %s134, 4
          %s136 = scalar_lea.vmem %s0, %s135
        $region24: #{tpu_custom_call.1} parent=19 // pred_fallthru
          _
      $region20: #{tpu_custom_call.1} parent=5 // pred_fallthru
        _
      %p137 = scmp.le.s32.totalorder 1, %s11
      %p138 = scmp.lt.s32.totalorder %s11, 3
      %p139 = pnand %p137, %p138
      %p140 = pneg %p139
      // Predicated region
      $region25: #{tpu_custom_call.1} parent=5 // pred_check
        _
      $region26: #{tpu_custom_call.1} parent=5 // pred_check_branch
        %142 = sbr.rel (%p139) target = $region28
      $region27: #{tpu_custom_call.1} parent=5 // pred_region
        %s143 = ssub.s32 %s11, 1
        %p144 = scmp.lt.s32.totalorder %s21, 1
        %s145 = scalar_select %p144, %s21, 1
        %s146 = smul.addr %s145, 54
        %s147 = smul.addr %s146, 4
        %s148 = scalar_lea.vmem %s0, %s147
        %p149 = pneg %p49
        %p150 = pneg %p46
        %p151 = scmp.lt.s32.totalorder %s20, 0
        %s152 = scalar_select %p151, %s20, 0
        %s153 = smul.addr %s152, 2
        %s154 = scalar_lea.vmem %s1, %s153
        %p155 = pneg %p75
        %p156 = pneg %p72
        %p157 = pneg %p103
        %p158 = pneg %p100
        %s159 = sand.u32 %s90, 1
        %s160 = scalar_lea.sflag [#allocation3], %s159
        %s161 = sand.u32 %s90, 1
        %s162 = smul.addr %s161, 256
        %s163 = scalar_lea.vmem [#allocation2], %s162
        %p164 = scmp.lt.s32.totalorder %s21, 1
        %s165 = scalar_select %p164, %s21, 1
        %s166 = smul.addr %s165, 54
        %s167 = smul.addr %s166, 4
        %s168 = scalar_lea.vmem %s0, %s167
        %p169 = scmp.lt.s32.totalorder %s20, 0
        %s170 = scalar_select %p169, %s20, 0
        %s171 = smul.addr %s170, 2
        %s172 = scalar_lea.vmem %s1, %s171
        %v174 = vld [vmem:[%s168] sm:$0xf]
        %v175 = vld [vmem:[%s168 + $0x4] sm:$0xf]
        %v176 = vld [vmem:[%s168 + $0xc] sm:$0xf]
        %v177 = vld [vmem:[%s168 + $0x10] sm:$0xf]
        %v178 = vld [vmem:[%s168 + $0x18] sm:$0xf]
        %v179 = vld [vmem:[%s168 + $0x1c] sm:$0xf]
        %v180 = vld [vmem:[%s168 + $0x24] sm:$0xf]
        %v181 = vld [vmem:[%s168 + $0x28] sm:$0xf]
        %v182 = vld [vmem:[%s168 + $0x30] sm:$0xf]
        %v183 = vld [vmem:[%s168 + $0x34] sm:$0xf]
        %v184 = vld [vmem:[%s168 + $0x3c] sm:$0xf]
        %v185 = vld [vmem:[%s168 + $0x40] sm:$0xf]
        %v186 = vld [vmem:[%s168 + $0x48] sm:$0xf]
        %v187 = vld [vmem:[%s168 + $0x4c] sm:$0xf]
        %v188 = vld [vmem:[%s168 + $0x54] sm:$0xf]
        %v189 = vld [vmem:[%s168 + $0x58] sm:$0xf]
        %v190 = vld [vmem:[%s168 + $0x60] sm:$0xf]
        %v191 = vld [vmem:[%s168 + $0x64] sm:$0xf]
        %v192 = vld [vmem:[%s168 + $0x6c] sm:$0xf]
        %v193 = vld [vmem:[%s168 + $0x70] sm:$0xf]
        %v194 = vld [vmem:[%s168 + $0x78] sm:$0xf]
        %v195 = vld [vmem:[%s168 + $0x7c] sm:$0xf]
        %v196 = vld [vmem:[%s168 + $0x84] sm:$0xf]
        %v197 = vld [vmem:[%s168 + $0x88] sm:$0xf]
        %v198 = vld [vmem:[%s168 + $0x90] sm:$0xf]
        %v199 = vld [vmem:[%s168 + $0x94] sm:$0xf]
        %v200 = vld [vmem:[%s168 + $0x9c] sm:$0xf]
        %v201 = vld [vmem:[%s168 + $0xa0] sm:$0xf]
        %v202 = vld [vmem:[%s168 + $0xa8] sm:$0xf]
        %v203 = vld [vmem:[%s168 + $0xac] sm:$0xf]
        %v204 = vld [vmem:[%s168 + $0xb4] sm:$0xf]
        %v205 = vld [vmem:[%s168 + $0xb8] sm:$0xf]
        %v206 = vld [vmem:[%s172] sm:$0x3]
        %v239 = vunpack.c.l.b16 %v174
        %v240 = vunpack.c.l.b16 %v175
        %v241 = vunpack.c.l.b16 %v176
        %v242 = vunpack.c.l.b16 %v177
        %v243 = vunpack.c.l.b16 %v178
        %v244 = vunpack.c.l.b16 %v179
        %v245 = vunpack.c.l.b16 %v180
        %v246 = vunpack.c.l.b16 %v181
        %v247 = vunpack.c.l.b16 %v182
        %v248 = vunpack.c.l.b16 %v183
        %v249 = vunpack.c.l.b16 %v184
        %v250 = vunpack.c.l.b16 %v185
        %v251 = vunpack.c.l.b16 %v186
        %v252 = vunpack.c.l.b16 %v187
        %v253 = vunpack.c.l.b16 %v188
        %v254 = vunpack.c.l.b16 %v189
        %v255 = vunpack.c.l.b16 %v190
        %v256 = vunpack.c.l.b16 %v191
        %v257 = vunpack.c.l.b16 %v192
        %v258 = vunpack.c.l.b16 %v193
        %v259 = vunpack.c.l.b16 %v194
        %v260 = vunpack.c.l.b16 %v195
        %v261 = vunpack.c.l.b16 %v196
        %v262 = vunpack.c.l.b16 %v197
        %v263 = vunpack.c.l.b16 %v198
        %v264 = vunpack.c.l.b16 %v199
        %v265 = vunpack.c.l.b16 %v200
        %v266 = vunpack.c.l.b16 %v201
        %v267 = vunpack.c.l.b16 %v202
        %v268 = vunpack.c.l.b16 %v203
        %v269 = vunpack.c.l.b16 %v204
        %v270 = vunpack.c.l.b16 %v205
        %v271 = vpack.c.b16 %v240, %v239
        %v272 = vpack.c.b16 %v242, %v241
        %v273 = vpack.c.b16 %v244, %v243
        %v274 = vpack.c.b16 %v246, %v245
        %v275 = vpack.c.b16 %v248, %v247
        %v276 = vpack.c.b16 %v250, %v249
        %v277 = vpack.c.b16 %v252, %v251
        %v278 = vpack.c.b16 %v254, %v253
        %v279 = vpack.c.b16 %v256, %v255
        %v280 = vpack.c.b16 %v258, %v257
        %v281 = vpack.c.b16 %v260, %v259
        %v282 = vpack.c.b16 %v262, %v261
        %v283 = vpack.c.b16 %v264, %v263
        %v284 = vpack.c.b16 %v266, %v265
        %v285 = vpack.c.b16 %v268, %v267
        %v286 = vpack.c.b16 %v270, %v269
        %vm287 = vcmask 31744
        %v289 = vsel %vm287, %v271, 0
        %v292 = vsel %vm287, %v272, 0
        %v295 = vsel %vm287, %v273, 0
        %v298 = vsel %vm287, %v274, 0
        %v301 = vsel %vm287, %v275, 0
        %v304 = vsel %vm287, %v276, 0
        %v307 = vsel %vm287, %v277, 0
        %v310 = vsel %vm287, %v278, 0
        %v313 = vsel %vm287, %v279, 0
        %v316 = vsel %vm287, %v280, 0
        %v319 = vsel %vm287, %v281, 0
        %v322 = vsel %vm287, %v282, 0
        %v325 = vsel %vm287, %v283, 0
        %v328 = vsel %vm287, %v284, 0
        %v331 = vsel %vm287, %v285, 0
        %v334 = vsel %vm287, %v286, 0
        %vm336 = vcmask 1041408
        %v338 = vsel %vm336, %v206, 0
        %340 = vmatprep.subr.bf16.mxu0 0
        %341 = vmatpush1.bf16.msra.mxu0 %v338
        %342 = vmatprep.subr.bf16.mxu0 0
        %343 = vmatpush1.bf16.msra.mxu0 0
        %344 = vmatprep.subr.bf16.mxu0 0
        %345 = vmatpush1.bf16.msra.mxu0 0
        %346 = vmatprep.subr.bf16.mxu0 0
        %347 = vmatpush1.bf16.msra.mxu0 0
        %348 = vmatprep.subr.bf16.mxu0 0
        %349 = vmatpush1.bf16.msra.mxu0 0
        %350 = vmatprep.subr.bf16.mxu0 0
        %351 = vmatpush1.bf16.msra.mxu0 0
        %352 = vmatprep.subr.bf16.mxu0 0
        %353 = vmatpush1.bf16.msra.mxu0 0
        %354 = vmatprep.subr.bf16.mxu0 0
        %355 = vmatpush1.bf16.msra.mxu0 0
        %356 = vmatprep.subr.bf16.mxu0 0
        %357 = vmatpush1.bf16.msra.mxu0 0
        %358 = vmatprep.subr.bf16.mxu0 0
        %359 = vmatpush1.bf16.msra.mxu0 0
        %360 = vmatprep.subr.bf16.mxu0 0
        %361 = vmatpush1.bf16.msra.mxu0 0
        %362 = vmatprep.subr.bf16.mxu0 0
        %363 = vmatpush1.bf16.msra.mxu0 0
        %364 = vmatprep.subr.bf16.mxu0 0
        %365 = vmatpush1.bf16.msra.mxu0 0
        %366 = vmatprep.subr.bf16.mxu0 0
        %367 = vmatpush1.bf16.msra.mxu0 0
        %368 = vmatprep.subr.bf16.mxu0 0
        %369 = vmatpush1.bf16.msra.mxu0 0
        %370 = vmatprep.subr.bf16.mxu0 0
        %371 = vmatpush1.bf16.msra.mxu0 0
        %372 = vmatprep.mubr.bf16.mxu0 0
        %373 = vmatmul.mubr.bf16.gmra.mrb[0].mxu0 %v289
        %v374 = vpop.f32.mrb[0].mxu0
        %v375 = vadd.f32 0.0, %v374
        %v376 = vpop.f32.mrb[0].mxu0
        %v377 = vpop.f32.mrb[0].mxu0
        %v378 = vadd.f32 0.0, %v377
        %v379 = vpop.f32.mrb[0].mxu0
        %380 = vmatprep.mubr.bf16.mxu0 0
        %381 = vmatmul.mubr.bf16.gmra.mrb[0].mxu0 %v292
        %v382 = vpop.f32.mrb[0].mxu0
        %v383 = vadd.f32 0.0, %v382
        %v384 = vpop.f32.mrb[0].mxu0
        %v385 = vpop.f32.mrb[0].mxu0
        %v386 = vadd.f32 0.0, %v385
        %v387 = vpop.f32.mrb[0].mxu0
        %388 = vmatprep.mubr.bf16.mxu0 0
        %389 = vmatmul.mubr.bf16.gmra.mrb[0].mxu0 %v295
        %v390 = vpop.f32.mrb[0].mxu0
        %v391 = vadd.f32 0.0, %v390
        %v392 = vpop.f32.mrb[0].mxu0
        %v393 = vpop.f32.mrb[0].mxu0
        %v394 = vadd.f32 0.0, %v393
        %v395 = vpop.f32.mrb[0].mxu0
        %396 = vmatprep.mubr.bf16.mxu0 0
        %397 = vmatmul.mubr.bf16.gmra.mrb[0].mxu0 %v298
        %v398 = vpop.f32.mrb[0].mxu0
        %v399 = vadd.f32 0.0, %v398
        %v400 = vpop.f32.mrb[0].mxu0
        %v401 = vpop.f32.mrb[0].mxu0
        %v402 = vadd.f32 0.0, %v401
        %v403 = vpop.f32.mrb[0].mxu0
        %404 = vmatprep.mubr.bf16.mxu0 0
        %405 = vmatmul.mubr.bf16.gmra.mrb[0].mxu0 %v301
        %v406 = vpop.f32.mrb[0].mxu0
        %v407 = vadd.f32 0.0, %v406
        %v408 = vpop.f32.mrb[0].mxu0
        %v409 = vpop.f32.mrb[0].mxu0
        %v410 = vadd.f32 0.0, %v409
        %v411 = vpop.f32.mrb[0].mxu0
        %412 = vmatprep.mubr.bf16.mxu0 0
        %413 = vmatmul.mubr.bf16.gmra.mrb[0].mxu0 %v304
        %v414 = vpop.f32.mrb[0].mxu0
        %v415 = vadd.f32 0.0, %v414
        %v416 = vpop.f32.mrb[0].mxu0
        %v417 = vpop.f32.mrb[0].mxu0
        %v418 = vadd.f32 0.0, %v417
        %v419 = vpop.f32.mrb[0].mxu0
        %420 = vmatprep.mubr.bf16.mxu0 0
        %421 = vmatmul.mubr.bf16.gmra.mrb[0].mxu0 %v307
        %v422 = vpop.f32.mrb[0].mxu0
        %v423 = vadd.f32 0.0, %v422
        %v424 = vpop.f32.mrb[0].mxu0
        %v425 = vpop.f32.mrb[0].mxu0
        %v426 = vadd.f32 0.0, %v425
        %v427 = vpop.f32.mrb[0].mxu0
        %428 = vmatprep.mubr.bf16.mxu0 0
        %429 = vmatmul.mubr.bf16.gmra.mrb[0].mxu0 %v310
        %v430 = vpop.f32.mrb[0].mxu0
        %v431 = vadd.f32 0.0, %v430
        %v432 = vpop.f32.mrb[0].mxu0
        %v433 = vpop.f32.mrb[0].mxu0
        %v434 = vadd.f32 0.0, %v433
        %v435 = vpop.f32.mrb[0].mxu0
        %436 = vmatprep.mubr.bf16.mxu0 0
        %437 = vmatmul.mubr.bf16.gmra.mrb[0].mxu0 %v313
        %v438 = vpop.f32.mrb[0].mxu0
        %v439 = vadd.f32 0.0, %v438
        %v440 = vpop.f32.mrb[0].mxu0
        %v441 = vpop.f32.mrb[0].mxu0
        %v442 = vadd.f32 0.0, %v441
        %v443 = vpop.f32.mrb[0].mxu0
        %444 = vmatprep.mubr.bf16.mxu0 0
        %445 = vmatmul.mubr.bf16.gmra.mrb[0].mxu0 %v316
        %v446 = vpop.f32.mrb[0].mxu0
        %v447 = vadd.f32 0.0, %v446
        %v448 = vpop.f32.mrb[0].mxu0
        %v449 = vpop.f32.mrb[0].mxu0
        %v450 = vadd.f32 0.0, %v449
        %v451 = vpop.f32.mrb[0].mxu0
        %452 = vmatprep.mubr.bf16.mxu0 0
        %453 = vmatmul.mubr.bf16.gmra.mrb[0].mxu0 %v319
        %v454 = vpop.f32.mrb[0].mxu0
        %v455 = vadd.f32 0.0, %v454
        %v456 = vpop.f32.mrb[0].mxu0
        %v457 = vpop.f32.mrb[0].mxu0
        %v458 = vadd.f32 0.0, %v457
        %v459 = vpop.f32.mrb[0].mxu0
        %460 = vmatprep.mubr.bf16.mxu0 0
        %461 = vmatmul.mubr.bf16.gmra.mrb[0].mxu0 %v322
        %v462 = vpop.f32.mrb[0].mxu0
        %v463 = vadd.f32 0.0, %v462
        %v464 = vpop.f32.mrb[0].mxu0
        %v465 = vpop.f32.mrb[0].mxu0
        %v466 = vadd.f32 0.0, %v465
        %v467 = vpop.f32.mrb[0].mxu0
        %468 = vmatprep.mubr.bf16.mxu0 0
        %469 = vmatmul.mubr.bf16.gmra.mrb[0].mxu0 %v325
        %v470 = vpop.f32.mrb[0].mxu0
        %v471 = vadd.f32 0.0, %v470
        %v472 = vpop.f32.mrb[0].mxu0
        %v473 = vpop.f32.mrb[0].mxu0
        %v474 = vadd.f32 0.0, %v473
        %v475 = vpop.f32.mrb[0].mxu0
        %476 = vmatprep.mubr.bf16.mxu0 0
        %477 = vmatmul.mubr.bf16.gmra.mrb[0].mxu0 %v328
        %v478 = vpop.f32.mrb[0].mxu0
        %v479 = vadd.f32 0.0, %v478
        %v480 = vpop.f32.mrb[0].mxu0
        %v481 = vpop.f32.mrb[0].mxu0
        %v482 = vadd.f32 0.0, %v481
        %v483 = vpop.f32.mrb[0].mxu0
        %484 = vmatprep.mubr.bf16.mxu0 0
        %485 = vmatmul.mubr.bf16.gmra.mrb[0].mxu0 %v331
        %v486 = vpop.f32.mrb[0].mxu0
        %v487 = vadd.f32 0.0, %v486
        %v488 = vpop.f32.mrb[0].mxu0
        %v489 = vpop.f32.mrb[0].mxu0
        %v490 = vadd.f32 0.0, %v489
        %v491 = vpop.f32.mrb[0].mxu0
        %492 = vmatprep.mubr.bf16.mxu0 0
        %493 = vmatmul.mubr.bf16.gmra.mrb[0].mxu0 %v334
        %v494 = vpop.f32.mrb[0].mxu0
        %v495 = vadd.f32 0.0, %v494
        %v496 = vpop.f32.mrb[0].mxu0
        %v497 = vpop.f32.mrb[0].mxu0
        %v498 = vadd.f32 0.0, %v497
        %v499 = vpop.f32.mrb[0].mxu0
        %500 = vdwg.mxu0
        %501 = vst [vmem:[%s163] sm:$0xff] %v375
        %502 = vst [vmem:[%s163 + $0x8] sm:$0xff] %v378
        %503 = vst [vmem:[%s163 + $0x10] sm:$0xff] %v383
        %504 = vst [vmem:[%s163 + $0x18] sm:$0xff] %v386
        %505 = vst [vmem:[%s163 + $0x20] sm:$0xff] %v391
        %506 = vst [vmem:[%s163 + $0x28] sm:$0xff] %v394
        %507 = vst [vmem:[%s163 + $0x30] sm:$0xff] %v399
        %508 = vst [vmem:[%s163 + $0x38] sm:$0xff] %v402
        %509 = vst [vmem:[%s163 + $0x40] sm:$0xff] %v407
        %510 = vst [vmem:[%s163 + $0x48] sm:$0xff] %v410
        %511 = vst [vmem:[%s163 + $0x50] sm:$0xff] %v415
        %512 = vst [vmem:[%s163 + $0x58] sm:$0xff] %v418
        %513 = vst [vmem:[%s163 + $0x60] sm:$0xff] %v423
        %514 = vst [vmem:[%s163 + $0x68] sm:$0xff] %v426
        %515 = vst [vmem:[%s163 + $0x70] sm:$0xff] %v431
        %516 = vst [vmem:[%s163 + $0x78] sm:$0xff] %v434
        %517 = vst [vmem:[%s163 + $0x80] sm:$0xff] %v439
        %518 = vst [vmem:[%s163 + $0x88] sm:$0xff] %v442
        %519 = vst [vmem:[%s163 + $0x90] sm:$0xff] %v447
        %520 = vst [vmem:[%s163 + $0x98] sm:$0xff] %v450
        %521 = vst [vmem:[%s163 + $0xa0] sm:$0xff] %v455
        %522 = vst [vmem:[%s163 + $0xa8] sm:$0xff] %v458
        %523 = vst [vmem:[%s163 + $0xb0] sm:$0xff] %v463
        %524 = vst [vmem:[%s163 + $0xb8] sm:$0xff] %v466
        %525 = vst [vmem:[%s163 + $0xc0] sm:$0xff] %v471
        %526 = vst [vmem:[%s163 + $0xc8] sm:$0xff] %v474
        %527 = vst [vmem:[%s163 + $0xd0] sm:$0xff] %v479
        %528 = vst [vmem:[%s163 + $0xd8] sm:$0xff] %v482
        %529 = vst [vmem:[%s163 + $0xe0] sm:$0xff] %v487
        %530 = vst [vmem:[%s163 + $0xe8] sm:$0xff] %v490
        %531 = vst [vmem:[%s163 + $0xf0] sm:$0xff] %v495
        %532 = vst [vmem:[%s163 + $0xf8] sm:$0xff] %v498
        %v533 = vld [vmem:[%s168] sm:$0xf]
        %v534 = vld [vmem:[%s168 + $0x4] sm:$0xf]
        %v535 = vld [vmem:[%s168 + $0x8] sm:$0x1]
        %v536 = vld [vmem:[%s168 + $0xc] sm:$0xf]
        %v537 = vld [vmem:[%s168 + $0x10] sm:$0xf]
        %v538 = vld [vmem:[%s168 + $0x14] sm:$0x1]
        %v539 = vld [vmem:[%s168 + $0x18] sm:$0xf]
        %v540 = vld [vmem:[%s168 + $0x1c] sm:$0xf]
        %v541 = vld [vmem:[%s168 + $0x20] sm:$0x1]
        %v542 = vld [vmem:[%s168 + $0x24] sm:$0xf]
        %v543 = vld [vmem:[%s168 + $0x28] sm:$0xf]
        %v544 = vld [vmem:[%s168 + $0x2c] sm:$0x1]
        %v545 = vld [vmem:[%s168 + $0x30] sm:$0xf]
        %v546 = vld [vmem:[%s168 + $0x34] sm:$0xf]
        %v547 = vld [vmem:[%s168 + $0x38] sm:$0x1]
        %v548 = vld [vmem:[%s168 + $0x3c] sm:$0xf]
        %v549 = vld [vmem:[%s168 + $0x40] sm:$0xf]
        %v550 = vld [vmem:[%s168 + $0x44] sm:$0x1]
        %v551 = vld [vmem:[%s168 + $0x48] sm:$0xf]
        %v552 = vld [vmem:[%s168 + $0x4c] sm:$0xf]
        %v553 = vld [vmem:[%s168 + $0x50] sm:$0x1]
        %v554 = vld [vmem:[%s168 + $0x54] sm:$0xf]
        %v555 = vld [vmem:[%s168 + $0x58] sm:$0xf]
        %v556 = vld [vmem:[%s168 + $0x5c] sm:$0x1]
        %v557 = vld [vmem:[%s168 + $0x60] sm:$0xf]
        %v558 = vld [vmem:[%s168 + $0x64] sm:$0xf]
        %v559 = vld [vmem:[%s168 + $0x68] sm:$0x1]
        %v560 = vld [vmem:[%s168 + $0x6c] sm:$0xf]
        %v561 = vld [vmem:[%s168 + $0x70] sm:$0xf]
        %v562 = vld [vmem:[%s168 + $0x74] sm:$0x1]
        %v563 = vld [vmem:[%s168 + $0x78] sm:$0xf]
        %v564 = vld [vmem:[%s168 + $0x7c] sm:$0xf]
        %v565 = vld [vmem:[%s168 + $0x80] sm:$0x1]
        %v566 = vld [vmem:[%s168 + $0x84] sm:$0xf]
        %v567 = vld [vmem:[%s168 + $0x88] sm:$0xf]
        %v568 = vld [vmem:[%s168 + $0x8c] sm:$0x1]
        %v569 = vld [vmem:[%s168 + $0x90] sm:$0xf]
        %v570 = vld [vmem:[%s168 + $0x94] sm:$0xf]
        %v571 = vld [vmem:[%s168 + $0x98] sm:$0x1]
        %v572 = vld [vmem:[%s168 + $0x9c] sm:$0xf]
        %v573 = vld [vmem:[%s168 + $0xa0] sm:$0xf]
        %v574 = vld [vmem:[%s168 + $0xa4] sm:$0x1]
        %v575 = vld [vmem:[%s168 + $0xa8] sm:$0xf]
        %v576 = vld [vmem:[%s168 + $0xac] sm:$0xf]
        %v577 = vld [vmem:[%s168 + $0xb0] sm:$0x1]
        %v578 = vld [vmem:[%s168 + $0xb4] sm:$0xf]
        %v579 = vld [vmem:[%s168 + $0xb8] sm:$0xf]
        %v580 = vld [vmem:[%s168 + $0xbc] sm:$0x1]
        %vm581 = vsmask.f32 3328
        %vm582 = vsmask.f32 7440
        %vm583 = vmor %vm581, %vm582
        %v585 = vshrl.u32 %v533, 16
        %v587 = vrot.slane %v585, 4
        %v588 = vshll.u32 %v533, 16
        %v590 = vrot.slane %v588, 5
        %v591 = vor.u32 %v587, %v590
        %v592 = vrot.slane %v591, 4
        %v594 = vshll.u32 %v534, 16
        %v596 = vrot.slane %v594, 5
        %v597 = vsel %vm583, %v592, %v596
        %v598 = vshrl.u32 %v534, 16
        %v600 = vrot.slane %v598, 4
        %v601 = vor.u32 %v600, %v596
        %v602 = vrot.slane %v601, 4
        %v604 = vshll.u32 %v535, 16
        %v606 = vrot.slane %v604, 5
        %v607 = vsel %vm583, %v602, %v606
        %v609 = vshrl.u32 %v536, 16
        %v611 = vrot.slane %v609, 4
        %v612 = vshll.u32 %v536, 16
        %v614 = vrot.slane %v612, 5
        %v615 = vor.u32 %v611, %v614
        %v616 = vrot.slane %v615, 4
        %v618 = vshll.u32 %v537, 16
        %v620 = vrot.slane %v618, 5
        %v621 = vsel %vm583, %v616, %v620
        %v622 = vshrl.u32 %v537, 16
        %v624 = vrot.slane %v622, 4
        %v625 = vor.u32 %v624, %v620
        %v626 = vrot.slane %v625, 4
        %v628 = vshll.u32 %v538, 16
        %v630 = vrot.slane %v628, 5
        %v631 = vsel %vm583, %v626, %v630
        %v633 = vshrl.u32 %v539, 16
        %v635 = vrot.slane %v633, 4
        %v636 = vshll.u32 %v539, 16
        %v638 = vrot.slane %v636, 5
        %v639 = vor.u32 %v635, %v638
        %v640 = vrot.slane %v639, 4
        %v642 = vshll.u32 %v540, 16
        %v644 = vrot.slane %v642, 5
        %v645 = vsel %vm583, %v640, %v644
        %v646 = vshrl.u32 %v540, 16
        %v648 = vrot.slane %v646, 4
        %v649 = vor.u32 %v648, %v644
        %v650 = vrot.slane %v649, 4
        %v652 = vshll.u32 %v541, 16
        %v654 = vrot.slane %v652, 5
        %v655 = vsel %vm583, %v650, %v654
        %v657 = vshrl.u32 %v542, 16
        %v659 = vrot.slane %v657, 4
        %v660 = vshll.u32 %v542, 16
        %v662 = vrot.slane %v660, 5
        %v663 = vor.u32 %v659, %v662
        %v664 = vrot.slane %v663, 4
        %v666 = vshll.u32 %v543, 16
        %v668 = vrot.slane %v666, 5
        %v669 = vsel %vm583, %v664, %v668
        %v670 = vshrl.u32 %v543, 16
        %v672 = vrot.slane %v670, 4
        %v673 = vor.u32 %v672, %v668
        %v674 = vrot.slane %v673, 4
        %v676 = vshll.u32 %v544, 16
        %v678 = vrot.slane %v676, 5
        %v679 = vsel %vm583, %v674, %v678
        %v681 = vshrl.u32 %v545, 16
        %v683 = vrot.slane %v681, 4
        %v684 = vshll.u32 %v545, 16
        %v686 = vrot.slane %v684, 5
        %v687 = vor.u32 %v683, %v686
        %v688 = vrot.slane %v687, 4
        %v690 = vshll.u32 %v546, 16
        %v692 = vrot.slane %v690, 5
        %v693 = vsel %vm583, %v688, %v692
        %v694 = vshrl.u32 %v546, 16
        %v696 = vrot.slane %v694, 4
        %v697 = vor.u32 %v696, %v692
        %v698 = vrot.slane %v697, 4
        %v700 = vshll.u32 %v547, 16
        %v702 = vrot.slane %v700, 5
        %v703 = vsel %vm583, %v698, %v702
        %v705 = vshrl.u32 %v548, 16
        %v707 = vrot.slane %v705, 4
        %v708 = vshll.u32 %v548, 16
        %v710 = vrot.slane %v708, 5
        %v711 = vor.u32 %v707, %v710
        %v712 = vrot.slane %v711, 4
        %v714 = vshll.u32 %v549, 16
        %v716 = vrot.slane %v714, 5
        %v717 = vsel %vm583, %v712, %v716
        %v718 = vshrl.u32 %v549, 16
        %v720 = vrot.slane %v718, 4
        %v721 = vor.u32 %v720, %v716
        %v722 = vrot.slane %v721, 4
        %v724 = vshll.u32 %v550, 16
        %v726 = vrot.slane %v724, 5
        %v727 = vsel %vm583, %v722, %v726
        %v729 = vshrl.u32 %v551, 16
        %v731 = vrot.slane %v729, 4
        %v732 = vshll.u32 %v551, 16
        %v734 = vrot.slane %v732, 5
        %v735 = vor.u32 %v731, %v734
        %v736 = vrot.slane %v735, 4
        %v738 = vshll.u32 %v552, 16
        %v740 = vrot.slane %v738, 5
        %v741 = vsel %vm583, %v736, %v740
        %v742 = vshrl.u32 %v552, 16
        %v744 = vrot.slane %v742, 4
        %v745 = vor.u32 %v744, %v740
        %v746 = vrot.slane %v745, 4
        %v748 = vshll.u32 %v553, 16
        %v750 = vrot.slane %v748, 5
        %v751 = vsel %vm583, %v746, %v750
        %v753 = vshrl.u32 %v554, 16
        %v755 = vrot.slane %v753, 4
        %v756 = vshll.u32 %v554, 16
        %v758 = vrot.slane %v756, 5
        %v759 = vor.u32 %v755, %v758
        %v760 = vrot.slane %v759, 4
        %v762 = vshll.u32 %v555, 16
        %v764 = vrot.slane %v762, 5
        %v765 = vsel %vm583, %v760, %v764
        %v766 = vshrl.u32 %v555, 16
        %v768 = vrot.slane %v766, 4
        %v769 = vor.u32 %v768, %v764
        %v770 = vrot.slane %v769, 4
        %v772 = vshll.u32 %v556, 16
        %v774 = vrot.slane %v772, 5
        %v775 = vsel %vm583, %v770, %v774
        %v777 = vshrl.u32 %v557, 16
        %v779 = vrot.slane %v777, 4
        %v780 = vshll.u32 %v557, 16
        %v782 = vrot.slane %v780, 5
        %v783 = vor.u32 %v779, %v782
        %v784 = vrot.slane %v783, 4
        %v786 = vshll.u32 %v558, 16
        %v788 = vrot.slane %v786, 5
        %v789 = vsel %vm583, %v784, %v788
        %v790 = vshrl.u32 %v558, 16
        %v792 = vrot.slane %v790, 4
        %v793 = vor.u32 %v792, %v788
        %v794 = vrot.slane %v793, 4
        %v796 = vshll.u32 %v559, 16
        %v798 = vrot.slane %v796, 5
        %v799 = vsel %vm583, %v794, %v798
        %v801 = vshrl.u32 %v560, 16
        %v803 = vrot.slane %v801, 4
        %v804 = vshll.u32 %v560, 16
        %v806 = vrot.slane %v804, 5
        %v807 = vor.u32 %v803, %v806
        %v808 = vrot.slane %v807, 4
        %v810 = vshll.u32 %v561, 16
        %v812 = vrot.slane %v810, 5
        %v813 = vsel %vm583, %v808, %v812
        %v814 = vshrl.u32 %v561, 16
        %v816 = vrot.slane %v814, 4
        %v817 = vor.u32 %v816, %v812
        %v818 = vrot.slane %v817, 4
        %v820 = vshll.u32 %v562, 16
        %v822 = vrot.slane %v820, 5
        %v823 = vsel %vm583, %v818, %v822
        %v825 = vshrl.u32 %v563, 16
        %v827 = vrot.slane %v825, 4
        %v828 = vshll.u32 %v563, 16
        %v830 = vrot.slane %v828, 5
        %v831 = vor.u32 %v827, %v830
        %v832 = vrot.slane %v831, 4
        %v834 = vshll.u32 %v564, 16
        %v836 = vrot.slane %v834, 5
        %v837 = vsel %vm583, %v832, %v836
        %v838 = vshrl.u32 %v564, 16
        %v840 = vrot.slane %v838, 4
        %v841 = vor.u32 %v840, %v836
        %v842 = vrot.slane %v841, 4
        %v844 = vshll.u32 %v565, 16
        %v846 = vrot.slane %v844, 5
        %v847 = vsel %vm583, %v842, %v846
        %v849 = vshrl.u32 %v566, 16
        %v851 = vrot.slane %v849, 4
        %v852 = vshll.u32 %v566, 16
        %v854 = vrot.slane %v852, 5
        %v855 = vor.u32 %v851, %v854
        %v856 = vrot.slane %v855, 4
        %v858 = vshll.u32 %v567, 16
        %v860 = vrot.slane %v858, 5
        %v861 = vsel %vm583, %v856, %v860
        %v862 = vshrl.u32 %v567, 16
        %v864 = vrot.slane %v862, 4
        %v865 = vor.u32 %v864, %v860
        %v866 = vrot.slane %v865, 4
        %v868 = vshll.u32 %v568, 16
        %v870 = vrot.slane %v868, 5
        %v871 = vsel %vm583, %v866, %v870
        %v873 = vshrl.u32 %v569, 16
        %v875 = vrot.slane %v873, 4
        %v876 = vshll.u32 %v569, 16
        %v878 = vrot.slane %v876, 5
        %v879 = vor.u32 %v875, %v878
        %v880 = vrot.slane %v879, 4
        %v882 = vshll.u32 %v570, 16
        %v884 = vrot.slane %v882, 5
        %v885 = vsel %vm583, %v880, %v884
        %v886 = vshrl.u32 %v570, 16
        %v888 = vrot.slane %v886, 4
        %v889 = vor.u32 %v888, %v884
        %v890 = vrot.slane %v889, 4
        %v892 = vshll.u32 %v571, 16
        %v894 = vrot.slane %v892, 5
        %v895 = vsel %vm583, %v890, %v894
        %v897 = vshrl.u32 %v572, 16
        %v899 = vrot.slane %v897, 4
        %v900 = vshll.u32 %v572, 16
        %v902 = vrot.slane %v900, 5
        %v903 = vor.u32 %v899, %v902
        %v904 = vrot.slane %v903, 4
        %v906 = vshll.u32 %v573, 16
        %v908 = vrot.slane %v906, 5
        %v909 = vsel %vm583, %v904, %v908
        %v910 = vshrl.u32 %v573, 16
        %v912 = vrot.slane %v910, 4
        %v913 = vor.u32 %v912, %v908
        %v914 = vrot.slane %v913, 4
        %v916 = vshll.u32 %v574, 16
        %v918 = vrot.slane %v916, 5
        %v919 = vsel %vm583, %v914, %v918
        %v921 = vshrl.u32 %v575, 16
        %v923 = vrot.slane %v921, 4
        %v924 = vshll.u32 %v575, 16
        %v926 = vrot.slane %v924, 5
        %v927 = vor.u32 %v923, %v926
        %v928 = vrot.slane %v927, 4
        %v930 = vshll.u32 %v576, 16
        %v932 = vrot.slane %v930, 5
        %v933 = vsel %vm583, %v928, %v932
        %v934 = vshrl.u32 %v576, 16
        %v936 = vrot.slane %v934, 4
        %v937 = vor.u32 %v936, %v932
        %v938 = vrot.slane %v937, 4
        %v940 = vshll.u32 %v577, 16
        %v942 = vrot.slane %v940, 5
        %v943 = vsel %vm583, %v938, %v942
        %v945 = vshrl.u32 %v578, 16
        %v947 = vrot.slane %v945, 4
        %v948 = vshll.u32 %v578, 16
        %v950 = vrot.slane %v948, 5
        %v951 = vor.u32 %v947, %v950
        %v952 = vrot.slane %v951, 4
        %v954 = vshll.u32 %v579, 16
        %v956 = vrot.slane %v954, 5
        %v957 = vsel %vm583, %v952, %v956
        %v958 = vshrl.u32 %v579, 16
        %v960 = vrot.slane %v958, 4
        %v961 = vor.u32 %v960, %v956
        %v962 = vrot.slane %v961, 4
        %v964 = vshll.u32 %v580, 16
        %v966 = vrot.slane %v964, 5
        %v967 = vsel %vm583, %v962, %v966
        %s968 = scalar_lea.vmem %s172, 2
        %v969 = vld [vmem:[%s968] sm:$0x3]
        %v970 = vunpack.c.l.b16 %v597
        %v971 = vunpack.c.l.b16 %v607
        %v972 = vunpack.c.l.b16 %v621
        %v973 = vunpack.c.l.b16 %v631
        %v974 = vunpack.c.l.b16 %v645
        %v975 = vunpack.c.l.b16 %v655
        %v976 = vunpack.c.l.b16 %v669
        %v977 = vunpack.c.l.b16 %v679
        %v978 = vunpack.c.l.b16 %v693
        %v979 = vunpack.c.l.b16 %v703
        %v980 = vunpack.c.l.b16 %v717
        %v981 = vunpack.c.l.b16 %v727
        %v982 = vunpack.c.l.b16 %v741
        %v983 = vunpack.c.l.b16 %v751
        %v984 = vunpack.c.l.b16 %v765
        %v985 = vunpack.c.l.b16 %v775
        %v986 = vunpack.c.l.b16 %v789
        %v987 = vunpack.c.l.b16 %v799
        %v988 = vunpack.c.l.b16 %v813
        %v989 = vunpack.c.l.b16 %v823
        %v990 = vunpack.c.l.b16 %v837
        %v991 = vunpack.c.l.b16 %v847
        %v992 = vunpack.c.l.b16 %v861
        %v993 = vunpack.c.l.b16 %v871
        %v994 = vunpack.c.l.b16 %v885
        %v995 = vunpack.c.l.b16 %v895
        %v996 = vunpack.c.l.b16 %v909
        %v997 = vunpack.c.l.b16 %v919
        %v998 = vunpack.c.l.b16 %v933
        %v999 = vunpack.c.l.b16 %v943
        %v1000 = vunpack.c.l.b16 %v957
        %v1001 = vunpack.c.l.b16 %v967
        %v1002 = vpack.c.b16 %v971, %v970
        %v1003 = vpack.c.b16 %v973, %v972
        %v1004 = vpack.c.b16 %v975, %v974
        %v1005 = vpack.c.b16 %v977, %v976
        %v1006 = vpack.c.b16 %v979, %v978
        %v1007 = vpack.c.b16 %v981, %v980
        %v1008 = vpack.c.b16 %v983, %v982
        %v1009 = vpack.c.b16 %v985, %v984
        %v1010 = vpack.c.b16 %v987, %v986
        %v1011 = vpack.c.b16 %v989, %v988
        %v1012 = vpack.c.b16 %v991, %v990
        %v1013 = vpack.c.b16 %v993, %v992
        %v1014 = vpack.c.b16 %v995, %v994
        %v1015 = vpack.c.b16 %v997, %v996
        %v1016 = vpack.c.b16 %v999, %v998
        %v1017 = vpack.c.b16 %v1001, %v1000
        %v1019 = vsel %vm287, %v1002, 0
        %v1022 = vsel %vm287, %v1003, 0
        %v1025 = vsel %vm287, %v1004, 0
        %v1028 = vsel %vm287, %v1005, 0
        %v1031 = vsel %vm287, %v1006, 0
        %v1034 = vsel %vm287, %v1007, 0
        %v1037 = vsel %vm287, %v1008, 0
        %v1040 = vsel %vm287, %v1009, 0
        %v1043 = vsel %vm287, %v1010, 0
        %v1046 = vsel %vm287, %v1011, 0
        %v1049 = vsel %vm287, %v1012, 0
        %v1052 = vsel %vm287, %v1013, 0
        %v1055 = vsel %vm287, %v1014, 0
        %v1058 = vsel %vm287, %v1015, 0
        %v1061 = vsel %vm287, %v1016, 0
        %v1064 = vsel %vm287, %v1017, 0
        %v1067 = vsel %vm336, %v969, 0
        %1069 = vmatprep.subr.bf16.mxu0 0
        %1070 = vmatpush1.bf16.msra.mxu0 %v1067
        %1071 = vmatprep.subr.bf16.mxu0 0
        %1072 = vmatpush1.bf16.msra.mxu0 0
        %1073 = vmatprep.subr.bf16.mxu0 0
        %1074 = vmatpush1.bf16.msra.mxu0 0
        %1075 = vmatprep.subr.bf16.mxu0 0
        %1076 = vmatpush1.bf16.msra.mxu0 0
        %1077 = vmatprep.subr.bf16.mxu0 0
        %1078 = vmatpush1.bf16.msra.mxu0 0
        %1079 = vmatprep.subr.bf16.mxu0 0
        %1080 = vmatpush1.bf16.msra.mxu0 0
        %1081 = vmatprep.subr.bf16.mxu0 0
        %1082 = vmatpush1.bf16.msra.mxu0 0
        %1083 = vmatprep.subr.bf16.mxu0 0
        %1084 = vmatpush1.bf16.msra.mxu0 0
        %1085 = vmatprep.subr.bf16.mxu0 0
        %1086 = vmatpush1.bf16.msra.mxu0 0
        %1087 = vmatprep.subr.bf16.mxu0 0
        %1088 = vmatpush1.bf16.msra.mxu0 0
        %1089 = vmatprep.subr.bf16.mxu0 0
        %1090 = vmatpush1.bf16.msra.mxu0 0
        %1091 = vmatprep.subr.bf16.mxu0 0
        %1092 = vmatpush1.bf16.msra.mxu0 0
        %1093 = vmatprep.subr.bf16.mxu0 0
        %1094 = vmatpush1.bf16.msra.mxu0 0
        %1095 = vmatprep.subr.bf16.mxu0 0
        %1096 = vmatpush1.bf16.msra.mxu0 0
        %1097 = vmatprep.subr.bf16.mxu0 0
        %1098 = vmatpush1.bf16.msra.mxu0 0
        %1099 = vmatprep.subr.bf16.mxu0 0
        %1100 = vmatpush1.bf16.msra.mxu0 0
        %1101 = vmatprep.mubr.bf16.mxu0 0
        %1102 = vmatmul.mubr.bf16.gmra.mrb[0].mxu0 %v1019
        %v1103 = vpop.f32.mrb[0].mxu0
        %v1104 = vadd.f32 0.0, %v1103
        %v1105 = vpop.f32.mrb[0].mxu0
        %v1106 = vpop.f32.mrb[0].mxu0
        %v1107 = vadd.f32 0.0, %v1106
        %v1108 = vpop.f32.mrb[0].mxu0
        %1109 = vmatprep.mubr.bf16.mxu0 0
        %1110 = vmatmul.mubr.bf16.gmra.mrb[0].mxu0 %v1022
        %v1111 = vpop.f32.mrb[0].mxu0
        %v1112 = vadd.f32 0.0, %v1111
        %v1113 = vpop.f32.mrb[0].mxu0
        %v1114 = vpop.f32.mrb[0].mxu0
        %v1115 = vadd.f32 0.0, %v1114
        %v1116 = vpop.f32.mrb[0].mxu0
        %1117 = vmatprep.mubr.bf16.mxu0 0
        %1118 = vmatmul.mubr.bf16.gmra.mrb[0].mxu0 %v1025
        %v1119 = vpop.f32.mrb[0].mxu0
        %v1120 = vadd.f32 0.0, %v1119
        %v1121 = vpop.f32.mrb[0].mxu0
        %v1122 = vpop.f32.mrb[0].mxu0
        %v1123 = vadd.f32 0.0, %v1122
        %v1124 = vpop.f32.mrb[0].mxu0
        %1125 = vmatprep.mubr.bf16.mxu0 0
        %1126 = vmatmul.mubr.bf16.gmra.mrb[0].mxu0 %v1028
        %v1127 = vpop.f32.mrb[0].mxu0
        %v1128 = vadd.f32 0.0, %v1127
        %v1129 = vpop.f32.mrb[0].mxu0
        %v1130 = vpop.f32.mrb[0].mxu0
        %v1131 = vadd.f32 0.0, %v1130
        %v1132 = vpop.f32.mrb[0].mxu0
        %1133 = vmatprep.mubr.bf16.mxu0 0
        %1134 = vmatmul.mubr.bf16.gmra.mrb[0].mxu0 %v1031
        %v1135 = vpop.f32.mrb[0].mxu0
        %v1136 = vadd.f32 0.0, %v1135
        %v1137 = vpop.f32.mrb[0].mxu0
        %v1138 = vpop.f32.mrb[0].mxu0
        %v1139 = vadd.f32 0.0, %v1138
        %v1140 = vpop.f32.mrb[0].mxu0
        %1141 = vmatprep.mubr.bf16.mxu0 0
        %1142 = vmatmul.mubr.bf16.gmra.mrb[0].mxu0 %v1034
        %v1143 = vpop.f32.mrb[0].mxu0
        %v1144 = vadd.f32 0.0, %v1143
        %v1145 = vpop.f32.mrb[0].mxu0
        %v1146 = vpop.f32.mrb[0].mxu0
        %v1147 = vadd.f32 0.0, %v1146
        %v1148 = vpop.f32.mrb[0].mxu0
        %1149 = vmatprep.mubr.bf16.mxu0 0
        %1150 = vmatmul.mubr.bf16.gmra.mrb[0].mxu0 %v1037
        %v1151 = vpop.f32.mrb[0].mxu0
        %v1152 = vadd.f32 0.0, %v1151
        %v1153 = vpop.f32.mrb[0].mxu0
        %v1154 = vpop.f32.mrb[0].mxu0
        %v1155 = vadd.f32 0.0, %v1154
        %v1156 = vpop.f32.mrb[0].mxu0
        %1157 = vmatprep.mubr.bf16.mxu0 0
        %1158 = vmatmul.mubr.bf16.gmra.mrb[0].mxu0 %v1040
        %v1159 = vpop.f32.mrb[0].mxu0
        %v1160 = vadd.f32 0.0, %v1159
        %v1161 = vpop.f32.mrb[0].mxu0
        %v1162 = vpop.f32.mrb[0].mxu0
        %v1163 = vadd.f32 0.0, %v1162
        %v1164 = vpop.f32.mrb[0].mxu0
        %1165 = vmatprep.mubr.bf16.mxu0 0
        %1166 = vmatmul.mubr.bf16.gmra.mrb[0].mxu0 %v1043
        %v1167 = vpop.f32.mrb[0].mxu0
        %v1168 = vadd.f32 0.0, %v1167
        %v1169 = vpop.f32.mrb[0].mxu0
        %v1170 = vpop.f32.mrb[0].mxu0
        %v1171 = vadd.f32 0.0, %v1170
        %v1172 = vpop.f32.mrb[0].mxu0
        %1173 = vmatprep.mubr.bf16.mxu0 0
        %1174 = vmatmul.mubr.bf16.gmra.mrb[0].mxu0 %v1046
        %v1175 = vpop.f32.mrb[0].mxu0
        %v1176 = vadd.f32 0.0, %v1175
        %v1177 = vpop.f32.mrb[0].mxu0
        %v1178 = vpop.f32.mrb[0].mxu0
        %v1179 = vadd.f32 0.0, %v1178
        %v1180 = vpop.f32.mrb[0].mxu0
        %1181 = vmatprep.mubr.bf16.mxu0 0
        %1182 = vmatmul.mubr.bf16.gmra.mrb[0].mxu0 %v1049
        %v1183 = vpop.f32.mrb[0].mxu0
        %v1184 = vadd.f32 0.0, %v1183
        %v1185 = vpop.f32.mrb[0].mxu0
        %v1186 = vpop.f32.mrb[0].mxu0
        %v1187 = vadd.f32 0.0, %v1186
        %v1188 = vpop.f32.mrb[0].mxu0
        %1189 = vmatprep.mubr.bf16.mxu0 0
        %1190 = vmatmul.mubr.bf16.gmra.mrb[0].mxu0 %v1052
        %v1191 = vpop.f32.mrb[0].mxu0
        %v1192 = vadd.f32 0.0, %v1191
        %v1193 = vpop.f32.mrb[0].mxu0
        %v1194 = vpop.f32.mrb[0].mxu0
        %v1195 = vadd.f32 0.0, %v1194
        %v1196 = vpop.f32.mrb[0].mxu0
        %1197 = vmatprep.mubr.bf16.mxu0 0
        %1198 = vmatmul.mubr.bf16.gmra.mrb[0].mxu0 %v1055
        %v1199 = vpop.f32.mrb[0].mxu0
        %v1200 = vadd.f32 0.0, %v1199
        %v1201 = vpop.f32.mrb[0].mxu0
        %v1202 = vpop.f32.mrb[0].mxu0
        %v1203 = vadd.f32 0.0, %v1202
        %v1204 = vpop.f32.mrb[0].mxu0
        %1205 = vmatprep.mubr.bf16.mxu0 0
        %1206 = vmatmul.mubr.bf16.gmra.mrb[0].mxu0 %v1058
        %v1207 = vpop.f32.mrb[0].mxu0
        %v1208 = vadd.f32 0.0, %v1207
        %v1209 = vpop.f32.mrb[0].mxu0
        %v1210 = vpop.f32.mrb[0].mxu0
        %v1211 = vadd.f32 0.0, %v1210
        %v1212 = vpop.f32.mrb[0].mxu0
        %1213 = vmatprep.mubr.bf16.mxu0 0
        %1214 = vmatmul.mubr.bf16.gmra.mrb[0].mxu0 %v1061
        %v1215 = vpop.f32.mrb[0].mxu0
        %v1216 = vadd.f32 0.0, %v1215
        %v1217 = vpop.f32.mrb[0].mxu0
        %v1218 = vpop.f32.mrb[0].mxu0
        %v1219 = vadd.f32 0.0, %v1218
        %v1220 = vpop.f32.mrb[0].mxu0
        %1221 = vmatprep.mubr.bf16.mxu0 0
        %1222 = vmatmul.mubr.bf16.gmra.mrb[0].mxu0 %v1064
        %v1223 = vpop.f32.mrb[0].mxu0
        %v1224 = vadd.f32 0.0, %v1223
        %v1225 = vpop.f32.mrb[0].mxu0
        %v1226 = vpop.f32.mrb[0].mxu0
        %v1227 = vadd.f32 0.0, %v1226
        %v1228 = vpop.f32.mrb[0].mxu0
        %1229 = vdwg.mxu0
        %v1230 = vld [vmem:[%s163] sm:$0xff]
        %v1231 = vld [vmem:[%s163 + $0x8] sm:$0xff]
        %v1232 = vld [vmem:[%s163 + $0x10] sm:$0xff]
        %v1233 = vld [vmem:[%s163 + $0x18] sm:$0xff]
        %v1234 = vld [vmem:[%s163 + $0x20] sm:$0xff]
        %v1235 = vld [vmem:[%s163 + $0x28] sm:$0xff]
        %v1236 = vld [vmem:[%s163 + $0x30] sm:$0xff]
        %v1237 = vld [vmem:[%s163 + $0x38] sm:$0xff]
        %v1238 = vld [vmem:[%s163 + $0x40] sm:$0xff]
        %v1239 = vld [vmem:[%s163 + $0x48] sm:$0xff]
        %v1240 = vld [vmem:[%s163 + $0x50] sm:$0xff]
        %v1241 = vld [vmem:[%s163 + $0x58] sm:$0xff]
        %v1242 = vld [vmem:[%s163 + $0x60] sm:$0xff]
        %v1243 = vld [vmem:[%s163 + $0x68] sm:$0xff]
        %v1244 = vld [vmem:[%s163 + $0x70] sm:$0xff]
        %v1245 = vld [vmem:[%s163 + $0x78] sm:$0xff]
        %v1246 = vld [vmem:[%s163 + $0x80] sm:$0xff]
        %v1247 = vld [vmem:[%s163 + $0x88] sm:$0xff]
        %v1248 = vld [vmem:[%s163 + $0x90] sm:$0xff]
        %v1249 = vld [vmem:[%s163 + $0x98] sm:$0xff]
        %v1250 = vld [vmem:[%s163 + $0xa0] sm:$0xff]
        %v1251 = vld [vmem:[%s163 + $0xa8] sm:$0xff]
        %v1252 = vld [vmem:[%s163 + $0xb0] sm:$0xff]
        %v1253 = vld [vmem:[%s163 + $0xb8] sm:$0xff]
        %v1254 = vld [vmem:[%s163 + $0xc0] sm:$0xff]
        %v1255 = vld [vmem:[%s163 + $0xc8] sm:$0xff]
        %v1256 = vld [vmem:[%s163 + $0xd0] sm:$0xff]
        %v1257 = vld [vmem:[%s163 + $0xd8] sm:$0xff]
        %v1258 = vld [vmem:[%s163 + $0xe0] sm:$0xff]
        %v1259 = vld [vmem:[%s163 + $0xe8] sm:$0xff]
        %v1260 = vld [vmem:[%s163 + $0xf0] sm:$0xff]
        %v1261 = vld [vmem:[%s163 + $0xf8] sm:$0xff]
        %v1262 = vadd.f32 %v1230, %v1104
        %v1263 = vadd.f32 %v1231, %v1107
        %v1264 = vadd.f32 %v1232, %v1112
        %v1265 = vadd.f32 %v1233, %v1115
        %v1266 = vadd.f32 %v1234, %v1120
        %v1267 = vadd.f32 %v1235, %v1123
        %v1268 = vadd.f32 %v1236, %v1128
        %v1269 = vadd.f32 %v1237, %v1131
        %v1270 = vadd.f32 %v1238, %v1136
        %v1271 = vadd.f32 %v1239, %v1139
        %v1272 = vadd.f32 %v1240, %v1144
        %v1273 = vadd.f32 %v1241, %v1147
        %v1274 = vadd.f32 %v1242, %v1152
        %v1275 = vadd.f32 %v1243, %v1155
        %v1276 = vadd.f32 %v1244, %v1160
        %v1277 = vadd.f32 %v1245, %v1163
        %v1278 = vadd.f32 %v1246, %v1168
        %v1279 = vadd.f32 %v1247, %v1171
        %v1280 = vadd.f32 %v1248, %v1176
        %v1281 = vadd.f32 %v1249, %v1179
        %v1282 = vadd.f32 %v1250, %v1184
        %v1283 = vadd.f32 %v1251, %v1187
        %v1284 = vadd.f32 %v1252, %v1192
        %v1285 = vadd.f32 %v1253, %v1195
        %v1286 = vadd.f32 %v1254, %v1200
        %v1287 = vadd.f32 %v1255, %v1203
        %v1288 = vadd.f32 %v1256, %v1208
        %v1289 = vadd.f32 %v1257, %v1211
        %v1290 = vadd.f32 %v1258, %v1216
        %v1291 = vadd.f32 %v1259, %v1219
        %v1292 = vadd.f32 %v1260, %v1224
        %v1293 = vadd.f32 %v1261, %v1227
        %1294 = vst [vmem:[%s163] sm:$0xff] %v1262
        %1295 = vst [vmem:[%s163 + $0x8] sm:$0xff] %v1263
        %1296 = vst [vmem:[%s163 + $0x10] sm:$0xff] %v1264
        %1297 = vst [vmem:[%s163 + $0x18] sm:$0xff] %v1265
        %1298 = vst [vmem:[%s163 + $0x20] sm:$0xff] %v1266
        %1299 = vst [vmem:[%s163 + $0x28] sm:$0xff] %v1267
        %1300 = vst [vmem:[%s163 + $0x30] sm:$0xff] %v1268
        %1301 = vst [vmem:[%s163 + $0x38] sm:$0xff] %v1269
        %1302 = vst [vmem:[%s163 + $0x40] sm:$0xff] %v1270
        %1303 = vst [vmem:[%s163 + $0x48] sm:$0xff] %v1271
        %1304 = vst [vmem:[%s163 + $0x50] sm:$0xff] %v1272
        %1305 = vst [vmem:[%s163 + $0x58] sm:$0xff] %v1273
        %1306 = vst [vmem:[%s163 + $0x60] sm:$0xff] %v1274
        %1307 = vst [vmem:[%s163 + $0x68] sm:$0xff] %v1275
        %1308 = vst [vmem:[%s163 + $0x70] sm:$0xff] %v1276
        %1309 = vst [vmem:[%s163 + $0x78] sm:$0xff] %v1277
        %1310 = vst [vmem:[%s163 + $0x80] sm:$0xff] %v1278
        %1311 = vst [vmem:[%s163 + $0x88] sm:$0xff] %v1279
        %1312 = vst [vmem:[%s163 + $0x90] sm:$0xff] %v1280
        %1313 = vst [vmem:[%s163 + $0x98] sm:$0xff] %v1281
        %1314 = vst [vmem:[%s163 + $0xa0] sm:$0xff] %v1282
        %1315 = vst [vmem:[%s163 + $0xa8] sm:$0xff] %v1283
        %1316 = vst [vmem:[%s163 + $0xb0] sm:$0xff] %v1284
        %1317 = vst [vmem:[%s163 + $0xb8] sm:$0xff] %v1285
        %1318 = vst [vmem:[%s163 + $0xc0] sm:$0xff] %v1286
        %1319 = vst [vmem:[%s163 + $0xc8] sm:$0xff] %v1287
        %1320 = vst [vmem:[%s163 + $0xd0] sm:$0xff] %v1288
        %1321 = vst [vmem:[%s163 + $0xd8] sm:$0xff] %v1289
        %1322 = vst [vmem:[%s163 + $0xe0] sm:$0xff] %v1290
        %1323 = vst [vmem:[%s163 + $0xe8] sm:$0xff] %v1291
        %1324 = vst [vmem:[%s163 + $0xf0] sm:$0xff] %v1292
        %1325 = vst [vmem:[%s163 + $0xf8] sm:$0xff] %v1293
        %v1326 = vld [vmem:[%s168] sm:$0xe]
        %v1327 = vld [vmem:[%s168 + $0x4] sm:$0xf]
        %v1328 = vld [vmem:[%s168 + $0x8] sm:$0x1]
        %v1329 = vld [vmem:[%s168 + $0xc] sm:$0xe]
        %v1330 = vld [vmem:[%s168 + $0x10] sm:$0xf]
        %v1331 = vld [vmem:[%s168 + $0x14] sm:$0x1]
        %v1332 = vld [vmem:[%s168 + $0x18] sm:$0xe]
        %v1333 = vld [vmem:[%s168 + $0x1c] sm:$0xf]
        %v1334 = vld [vmem:[%s168 + $0x20] sm:$0x1]
        %v1335 = vld [vmem:[%s168 + $0x24] sm:$0xe]
        %v1336 = vld [vmem:[%s168 + $0x28] sm:$0xf]
        %v1337 = vld [vmem:[%s168 + $0x2c] sm:$0x1]
        %v1338 = vld [vmem:[%s168 + $0x30] sm:$0xe]
        %v1339 = vld [vmem:[%s168 + $0x34] sm:$0xf]
        %v1340 = vld [vmem:[%s168 + $0x38] sm:$0x1]
        %v1341 = vld [vmem:[%s168 + $0x3c] sm:$0xe]
        %v1342 = vld [vmem:[%s168 + $0x40] sm:$0xf]
        %v1343 = vld [vmem:[%s168 + $0x44] sm:$0x1]
        %v1344 = vld [vmem:[%s168 + $0x48] sm:$0xe]
        %v1345 = vld [vmem:[%s168 + $0x4c] sm:$0xf]
        %v1346 = vld [vmem:[%s168 + $0x50] sm:$0x1]
        %v1347 = vld [vmem:[%s168 + $0x54] sm:$0xe]
        %v1348 = vld [vmem:[%s168 + $0x58] sm:$0xf]
        %v1349 = vld [vmem:[%s168 + $0x5c] sm:$0x1]
        %v1350 = vld [vmem:[%s168 + $0x60] sm:$0xe]
        %v1351 = vld [vmem:[%s168 + $0x64] sm:$0xf]
        %v1352 = vld [vmem:[%s168 + $0x68] sm:$0x1]
        %v1353 = vld [vmem:[%s168 + $0x6c] sm:$0xe]
        %v1354 = vld [vmem:[%s168 + $0x70] sm:$0xf]
        %v1355 = vld [vmem:[%s168 + $0x74] sm:$0x1]
        %v1356 = vld [vmem:[%s168 + $0x78] sm:$0xe]
        %v1357 = vld [vmem:[%s168 + $0x7c] sm:$0xf]
        %v1358 = vld [vmem:[%s168 + $0x80] sm:$0x1]
        %v1359 = vld [vmem:[%s168 + $0x84] sm:$0xe]
        %v1360 = vld [vmem:[%s168 + $0x88] sm:$0xf]
        %v1361 = vld [vmem:[%s168 + $0x8c] sm:$0x1]
        %v1362 = vld [vmem:[%s168 + $0x90] sm:$0xe]
        %v1363 = vld [vmem:[%s168 + $0x94] sm:$0xf]
        %v1364 = vld [vmem:[%s168 + $0x98] sm:$0x1]
        %v1365 = vld [vmem:[%s168 + $0x9c] sm:$0xe]
        %v1366 = vld [vmem:[%s168 + $0xa0] sm:$0xf]
        %v1367 = vld [vmem:[%s168 + $0xa4] sm:$0x1]
        %v1368 = vld [vmem:[%s168 + $0xa8] sm:$0xe]
        %v1369 = vld [vmem:[%s168 + $0xac] sm:$0xf]
        %v1370 = vld [vmem:[%s168 + $0xb0] sm:$0x1]
        %v1371 = vld [vmem:[%s168 + $0xb4] sm:$0xe]
        %v1372 = vld [vmem:[%s168 + $0xb8] sm:$0xf]
        %v1373 = vld [vmem:[%s168 + $0xbc] sm:$0x1]
        %vm1422 = vcmask 1042432
        %vm1423 = vcmask 1046532
        %vm1424 = vmor %vm1422, %vm1423
        %v1425 = vrot.slane %v1326, 5
        %v1426 = vrot.slane %v1425, 4
        %v1427 = vrot.slane %v1327, 5
        %v1428 = vsel %vm1424, %v1426, %v1427
        %v1429 = vrot.slane %v1427, 4
        %v1430 = vrot.slane %v1328, 5
        %v1431 = vsel %vm1424, %v1429, %v1430
        %v1432 = vrot.slane %v1329, 5
        %v1433 = vrot.slane %v1432, 4
        %v1434 = vrot.slane %v1330, 5
        %v1435 = vsel %vm1424, %v1433, %v1434
        %v1436 = vrot.slane %v1434, 4
        %v1437 = vrot.slane %v1331, 5
        %v1438 = vsel %vm1424, %v1436, %v1437
        %v1439 = vrot.slane %v1332, 5
        %v1440 = vrot.slane %v1439, 4
        %v1441 = vrot.slane %v1333, 5
        %v1442 = vsel %vm1424, %v1440, %v1441
        %v1443 = vrot.slane %v1441, 4
        %v1444 = vrot.slane %v1334, 5
        %v1445 = vsel %vm1424, %v1443, %v1444
        %v1446 = vrot.slane %v1335, 5
        %v1447 = vrot.slane %v1446, 4
        %v1448 = vrot.slane %v1336, 5
        %v1449 = vsel %vm1424, %v1447, %v1448
        %v1450 = vrot.slane %v1448, 4
        %v1451 = vrot.slane %v1337, 5
        %v1452 = vsel %vm1424, %v1450, %v1451
        %v1453 = vrot.slane %v1338, 5
        %v1454 = vrot.slane %v1453, 4
        %v1455 = vrot.slane %v1339, 5
        %v1456 = vsel %vm1424, %v1454, %v1455
        %v1457 = vrot.slane %v1455, 4
        %v1458 = vrot.slane %v1340, 5
        %v1459 = vsel %vm1424, %v1457, %v1458
        %v1460 = vrot.slane %v1341, 5
        %v1461 = vrot.slane %v1460, 4
        %v1462 = vrot.slane %v1342, 5
        %v1463 = vsel %vm1424, %v1461, %v1462
        %v1464 = vrot.slane %v1462, 4
        %v1465 = vrot.slane %v1343, 5
        %v1466 = vsel %vm1424, %v1464, %v1465
        %v1467 = vrot.slane %v1344, 5
        %v1468 = vrot.slane %v1467, 4
        %v1469 = vrot.slane %v1345, 5
        %v1470 = vsel %vm1424, %v1468, %v1469
        %v1471 = vrot.slane %v1469, 4
        %v1472 = vrot.slane %v1346, 5
        %v1473 = vsel %vm1424, %v1471, %v1472
        %v1474 = vrot.slane %v1347, 5
        %v1475 = vrot.slane %v1474, 4
        %v1476 = vrot.slane %v1348, 5
        %v1477 = vsel %vm1424, %v1475, %v1476
        %v1478 = vrot.slane %v1476, 4
        %v1479 = vrot.slane %v1349, 5
        %v1480 = vsel %vm1424, %v1478, %v1479
        %v1481 = vrot.slane %v1350, 5
        %v1482 = vrot.slane %v1481, 4
        %v1483 = vrot.slane %v1351, 5
        %v1484 = vsel %vm1424, %v1482, %v1483
        %v1485 = vrot.slane %v1483, 4
        %v1486 = vrot.slane %v1352, 5
        %v1487 = vsel %vm1424, %v1485, %v1486
        %v1488 = vrot.slane %v1353, 5
        %v1489 = vrot.slane %v1488, 4
        %v1490 = vrot.slane %v1354, 5
        %v1491 = vsel %vm1424, %v1489, %v1490
        %v1492 = vrot.slane %v1490, 4
        %v1493 = vrot.slane %v1355, 5
        %v1494 = vsel %vm1424, %v1492, %v1493
        %v1495 = vrot.slane %v1356, 5
        %v1496 = vrot.slane %v1495, 4
        %v1497 = vrot.slane %v1357, 5
        %v1498 = vsel %vm1424, %v1496, %v1497
        %v1499 = vrot.slane %v1497, 4
        %v1500 = vrot.slane %v1358, 5
        %v1501 = vsel %vm1424, %v1499, %v1500
        %v1502 = vrot.slane %v1359, 5
        %v1503 = vrot.slane %v1502, 4
        %v1504 = vrot.slane %v1360, 5
        %v1505 = vsel %vm1424, %v1503, %v1504
        %v1506 = vrot.slane %v1504, 4
        %v1507 = vrot.slane %v1361, 5
        %v1508 = vsel %vm1424, %v1506, %v1507
        %v1509 = vrot.slane %v1362, 5
        %v1510 = vrot.slane %v1509, 4
        %v1511 = vrot.slane %v1363, 5
        %v1512 = vsel %vm1424, %v1510, %v1511
        %v1513 = vrot.slane %v1511, 4
        %v1514 = vrot.slane %v1364, 5
        %v1515 = vsel %vm1424, %v1513, %v1514
        %v1516 = vrot.slane %v1365, 5
        %v1517 = vrot.slane %v1516, 4
        %v1518 = vrot.slane %v1366, 5
        %v1519 = vsel %vm1424, %v1517, %v1518
        %v1520 = vrot.slane %v1518, 4
        %v1521 = vrot.slane %v1367, 5
        %v1522 = vsel %vm1424, %v1520, %v1521
        %v1523 = vrot.slane %v1368, 5
        %v1524 = vrot.slane %v1523, 4
        %v1525 = vrot.slane %v1369, 5
        %v1526 = vsel %vm1424, %v1524, %v1525
        %v1527 = vrot.slane %v1525, 4
        %v1528 = vrot.slane %v1370, 5
        %v1529 = vsel %vm1424, %v1527, %v1528
        %v1530 = vrot.slane %v1371, 5
        %v1531 = vrot.slane %v1530, 4
        %v1532 = vrot.slane %v1372, 5
        %v1533 = vsel %vm1424, %v1531, %v1532
        %v1534 = vrot.slane %v1532, 4
        %v1535 = vrot.slane %v1373, 5
        %v1536 = vsel %vm1424, %v1534, %v1535
        %s1537 = scalar_lea.vmem %s172, 4
        %v1538 = vld [vmem:[%s1537] sm:$0x3]
        %v1539 = vunpack.c.l.b16 %v1428
        %v1540 = vunpack.c.l.b16 %v1431
        %v1541 = vunpack.c.l.b16 %v1435
        %v1542 = vunpack.c.l.b16 %v1438
        %v1543 = vunpack.c.l.b16 %v1442
        %v1544 = vunpack.c.l.b16 %v1445
        %v1545 = vunpack.c.l.b16 %v1449
        %v1546 = vunpack.c.l.b16 %v1452
        %v1547 = vunpack.c.l.b16 %v1456
        %v1548 = vunpack.c.l.b16 %v1459
        %v1549 = vunpack.c.l.b16 %v1463
        %v1550 = vunpack.c.l.b16 %v1466
        %v1551 = vunpack.c.l.b16 %v1470
        %v1552 = vunpack.c.l.b16 %v1473
        %v1553 = vunpack.c.l.b16 %v1477
        %v1554 = vunpack.c.l.b16 %v1480
        %v1555 = vunpack.c.l.b16 %v1484
        %v1556 = vunpack.c.l.b16 %v1487
        %v1557 = vunpack.c.l.b16 %v1491
        %v1558 = vunpack.c.l.b16 %v1494
        %v1559 = vunpack.c.l.b16 %v1498
        %v1560 = vunpack.c.l.b16 %v1501
        %v1561 = vunpack.c.l.b16 %v1505
        %v1562 = vunpack.c.l.b16 %v1508
        %v1563 = vunpack.c.l.b16 %v1512
        %v1564 = vunpack.c.l.b16 %v1515
        %v1565 = vunpack.c.l.b16 %v1519
        %v1566 = vunpack.c.l.b16 %v1522
        %v1567 = vunpack.c.l.b16 %v1526
        %v1568 = vunpack.c.l.b16 %v1529
        %v1569 = vunpack.c.l.b16 %v1533
        %v1570 = vunpack.c.l.b16 %v1536
        %v1571 = vpack.c.b16 %v1540, %v1539
        %v1572 = vpack.c.b16 %v1542, %v1541
        %v1573 = vpack.c.b16 %v1544, %v1543
        %v1574 = vpack.c.b16 %v1546, %v1545
        %v1575 = vpack.c.b16 %v1548, %v1547
        %v1576 = vpack.c.b16 %v1550, %v1549
        %v1577 = vpack.c.b16 %v1552, %v1551
        %v1578 = vpack.c.b16 %v1554, %v1553
        %v1579 = vpack.c.b16 %v1556, %v1555
        %v1580 = vpack.c.b16 %v1558, %v1557
        %v1581 = vpack.c.b16 %v1560, %v1559
        %v1582 = vpack.c.b16 %v1562, %v1561
        %v1583 = vpack.c.b16 %v1564, %v1563
        %v1584 = vpack.c.b16 %v1566, %v1565
        %v1585 = vpack.c.b16 %v1568, %v1567
        %v1586 = vpack.c.b16 %v1570, %v1569
        %v1588 = vsel %vm287, %v1571, 0
        %v1591 = vsel %vm287, %v1572, 0
        %v1594 = vsel %vm287, %v1573, 0
        %v1597 = vsel %vm287, %v1574, 0
        %v1600 = vsel %vm287, %v1575, 0
        %v1603 = vsel %vm287, %v1576, 0
        %v1606 = vsel %vm287, %v1577, 0
        %v1609 = vsel %vm287, %v1578, 0
        %v1612 = vsel %vm287, %v1579, 0
        %v1615 = vsel %vm287, %v1580, 0
        %v1618 = vsel %vm287, %v1581, 0
        %v1621 = vsel %vm287, %v1582, 0
        %v1624 = vsel %vm287, %v1583, 0
        %v1627 = vsel %vm287, %v1584, 0
        %v1630 = vsel %vm287, %v1585, 0
        %v1633 = vsel %vm287, %v1586, 0
        %v1636 = vsel %vm336, %v1538, 0
        %1638 = vmatprep.subr.bf16.mxu0 0
        %1639 = vmatpush1.bf16.msra.mxu0 %v1636
        %1640 = vmatprep.subr.bf16.mxu0 0
        %1641 = vmatpush1.bf16.msra.mxu0 0
        %1642 = vmatprep.subr.bf16.mxu0 0
        %1643 = vmatpush1.bf16.msra.mxu0 0
        %1644 = vmatprep.subr.bf16.mxu0 0
        %1645 = vmatpush1.bf16.msra.mxu0 0
        %1646 = vmatprep.subr.bf16.mxu0 0
        %1647 = vmatpush1.bf16.msra.mxu0 0
        %1648 = vmatprep.subr.bf16.mxu0 0
        %1649 = vmatpush1.bf16.msra.mxu0 0
        %1650 = vmatprep.subr.bf16.mxu0 0
        %1651 = vmatpush1.bf16.msra.mxu0 0
        %1652 = vmatprep.subr.bf16.mxu0 0
        %1653 = vmatpush1.bf16.msra.mxu0 0
        %1654 = vmatprep.subr.bf16.mxu0 0
        %1655 = vmatpush1.bf16.msra.mxu0 0
        %1656 = vmatprep.subr.bf16.mxu0 0
        %1657 = vmatpush1.bf16.msra.mxu0 0
        %1658 = vmatprep.subr.bf16.mxu0 0
        %1659 = vmatpush1.bf16.msra.mxu0 0
        %1660 = vmatprep.subr.bf16.mxu0 0
        %1661 = vmatpush1.bf16.msra.mxu0 0
        %1662 = vmatprep.subr.bf16.mxu0 0
        %1663 = vmatpush1.bf16.msra.mxu0 0
        %1664 = vmatprep.subr.bf16.mxu0 0
        %1665 = vmatpush1.bf16.msra.mxu0 0
        %1666 = vmatprep.subr.bf16.mxu0 0
        %1667 = vmatpush1.bf16.msra.mxu0 0
        %1668 = vmatprep.subr.bf16.mxu0 0
        %1669 = vmatpush1.bf16.msra.mxu0 0
        %1670 = vmatprep.mubr.bf16.mxu0 0
        %1671 = vmatmul.mubr.bf16.gmra.mrb[0].mxu0 %v1588
        %v1672 = vpop.f32.mrb[0].mxu0
        %v1673 = vadd.f32 0.0, %v1672
        %v1674 = vpop.f32.mrb[0].mxu0
        %v1675 = vpop.f32.mrb[0].mxu0
        %v1676 = vadd.f32 0.0, %v1675
        %v1677 = vpop.f32.mrb[0].mxu0
        %1678 = vmatprep.mubr.bf16.mxu0 0
        %1679 = vmatmul.mubr.bf16.gmra.mrb[0].mxu0 %v1591
        %v1680 = vpop.f32.mrb[0].mxu0
        %v1681 = vadd.f32 0.0, %v1680
        %v1682 = vpop.f32.mrb[0].mxu0
        %v1683 = vpop.f32.mrb[0].mxu0
        %v1684 = vadd.f32 0.0, %v1683
        %v1685 = vpop.f32.mrb[0].mxu0
        %1686 = vmatprep.mubr.bf16.mxu0 0
        %1687 = vmatmul.mubr.bf16.gmra.mrb[0].mxu0 %v1594
        %v1688 = vpop.f32.mrb[0].mxu0
        %v1689 = vadd.f32 0.0, %v1688
        %v1690 = vpop.f32.mrb[0].mxu0
        %v1691 = vpop.f32.mrb[0].mxu0
        %v1692 = vadd.f32 0.0, %v1691
        %v1693 = vpop.f32.mrb[0].mxu0
        %1694 = vmatprep.mubr.bf16.mxu0 0
        %1695 = vmatmul.mubr.bf16.gmra.mrb[0].mxu0 %v1597
        %v1696 = vpop.f32.mrb[0].mxu0
        %v1697 = vadd.f32 0.0, %v1696
        %v1698 = vpop.f32.mrb[0].mxu0
        %v1699 = vpop.f32.mrb[0].mxu0
        %v1700 = vadd.f32 0.0, %v1699
        %v1701 = vpop.f32.mrb[0].mxu0
        %1702 = vmatprep.mubr.bf16.mxu0 0
        %1703 = vmatmul.mubr.bf16.gmra.mrb[0].mxu0 %v1600
        %v1704 = vpop.f32.mrb[0].mxu0
        %v1705 = vadd.f32 0.0, %v1704
        %v1706 = vpop.f32.mrb[0].mxu0
        %v1707 = vpop.f32.mrb[0].mxu0
        %v1708 = vadd.f32 0.0, %v1707
        %v1709 = vpop.f32.mrb[0].mxu0
        %1710 = vmatprep.mubr.bf16.mxu0 0
        %1711 = vmatmul.mubr.bf16.gmra.mrb[0].mxu0 %v1603
        %v1712 = vpop.f32.mrb[0].mxu0
        %v1713 = vadd.f32 0.0, %v1712
        %v1714 = vpop.f32.mrb[0].mxu0
        %v1715 = vpop.f32.mrb[0].mxu0
        %v1716 = vadd.f32 0.0, %v1715
        %v1717 = vpop.f32.mrb[0].mxu0
        %1718 = vmatprep.mubr.bf16.mxu0 0
        %1719 = vmatmul.mubr.bf16.gmra.mrb[0].mxu0 %v1606
        %v1720 = vpop.f32.mrb[0].mxu0
        %v1721 = vadd.f32 0.0, %v1720
        %v1722 = vpop.f32.mrb[0].mxu0
        %v1723 = vpop.f32.mrb[0].mxu0
        %v1724 = vadd.f32 0.0, %v1723
        %v1725 = vpop.f32.mrb[0].mxu0
        %1726 = vmatprep.mubr.bf16.mxu0 0
        %1727 = vmatmul.mubr.bf16.gmra.mrb[0].mxu0 %v1609
        %v1728 = vpop.f32.mrb[0].mxu0
        %v1729 = vadd.f32 0.0, %v1728
        %v1730 = vpop.f32.mrb[0].mxu0
        %v1731 = vpop.f32.mrb[0].mxu0
        %v1732 = vadd.f32 0.0, %v1731
        %v1733 = vpop.f32.mrb[0].mxu0
        %1734 = vmatprep.mubr.bf16.mxu0 0
        %1735 = vmatmul.mubr.bf16.gmra.mrb[0].mxu0 %v1612
        %v1736 = vpop.f32.mrb[0].mxu0
        %v1737 = vadd.f32 0.0, %v1736
        %v1738 = vpop.f32.mrb[0].mxu0
        %v1739 = vpop.f32.mrb[0].mxu0
        %v1740 = vadd.f32 0.0, %v1739
        %v1741 = vpop.f32.mrb[0].mxu0
        %1742 = vmatprep.mubr.bf16.mxu0 0
        %1743 = vmatmul.mubr.bf16.gmra.mrb[0].mxu0 %v1615
        %v1744 = vpop.f32.mrb[0].mxu0
        %v1745 = vadd.f32 0.0, %v1744
        %v1746 = vpop.f32.mrb[0].mxu0
        %v1747 = vpop.f32.mrb[0].mxu0
        %v1748 = vadd.f32 0.0, %v1747
        %v1749 = vpop.f32.mrb[0].mxu0
        %1750 = vmatprep.mubr.bf16.mxu0 0
        %1751 = vmatmul.mubr.bf16.gmra.mrb[0].mxu0 %v1618
        %v1752 = vpop.f32.mrb[0].mxu0
        %v1753 = vadd.f32 0.0, %v1752
        %v1754 = vpop.f32.mrb[0].mxu0
        %v1755 = vpop.f32.mrb[0].mxu0
        %v1756 = vadd.f32 0.0, %v1755
        %v1757 = vpop.f32.mrb[0].mxu0
        %1758 = vmatprep.mubr.bf16.mxu0 0
        %1759 = vmatmul.mubr.bf16.gmra.mrb[0].mxu0 %v1621
        %v1760 = vpop.f32.mrb[0].mxu0
        %v1761 = vadd.f32 0.0, %v1760
        %v1762 = vpop.f32.mrb[0].mxu0
        %v1763 = vpop.f32.mrb[0].mxu0
        %v1764 = vadd.f32 0.0, %v1763
        %v1765 = vpop.f32.mrb[0].mxu0
        %1766 = vmatprep.mubr.bf16.mxu0 0
        %1767 = vmatmul.mubr.bf16.gmra.mrb[0].mxu0 %v1624
        %v1768 = vpop.f32.mrb[0].mxu0
        %v1769 = vadd.f32 0.0, %v1768
        %v1770 = vpop.f32.mrb[0].mxu0
        %v1771 = vpop.f32.mrb[0].mxu0
        %v1772 = vadd.f32 0.0, %v1771
        %v1773 = vpop.f32.mrb[0].mxu0
        %1774 = vmatprep.mubr.bf16.mxu0 0
        %1775 = vmatmul.mubr.bf16.gmra.mrb[0].mxu0 %v1627
        %v1776 = vpop.f32.mrb[0].mxu0
        %v1777 = vadd.f32 0.0, %v1776
        %v1778 = vpop.f32.mrb[0].mxu0
        %v1779 = vpop.f32.mrb[0].mxu0
        %v1780 = vadd.f32 0.0, %v1779
        %v1781 = vpop.f32.mrb[0].mxu0
        %1782 = vmatprep.mubr.bf16.mxu0 0
        %1783 = vmatmul.mubr.bf16.gmra.mrb[0].mxu0 %v1630
        %v1784 = vpop.f32.mrb[0].mxu0
        %v1785 = vadd.f32 0.0, %v1784
        %v1786 = vpop.f32.mrb[0].mxu0
        %v1787 = vpop.f32.mrb[0].mxu0
        %v1788 = vadd.f32 0.0, %v1787
        %v1789 = vpop.f32.mrb[0].mxu0
        %1790 = vmatprep.mubr.bf16.mxu0 0
        %1791 = vmatmul.mubr.bf16.gmra.mrb[0].mxu0 %v1633
        %v1792 = vpop.f32.mrb[0].mxu0
        %v1793 = vadd.f32 0.0, %v1792
        %v1794 = vpop.f32.mrb[0].mxu0
        %v1795 = vpop.f32.mrb[0].mxu0
        %v1796 = vadd.f32 0.0, %v1795
        %v1797 = vpop.f32.mrb[0].mxu0
        %1798 = vdwg.mxu0
        %v1799 = vld [vmem:[%s163] sm:$0xff]
        %v1800 = vld [vmem:[%s163 + $0x8] sm:$0xff]
        %v1801 = vld [vmem:[%s163 + $0x10] sm:$0xff]
        %v1802 = vld [vmem:[%s163 + $0x18] sm:$0xff]
        %v1803 = vld [vmem:[%s163 + $0x20] sm:$0xff]
        %v1804 = vld [vmem:[%s163 + $0x28] sm:$0xff]
        %v1805 = vld [vmem:[%s163 + $0x30] sm:$0xff]
        %v1806 = vld [vmem:[%s163 + $0x38] sm:$0xff]
        %v1807 = vld [vmem:[%s163 + $0x40] sm:$0xff]
        %v1808 = vld [vmem:[%s163 + $0x48] sm:$0xff]
        %v1809 = vld [vmem:[%s163 + $0x50] sm:$0xff]
        %v1810 = vld [vmem:[%s163 + $0x58] sm:$0xff]
        %v1811 = vld [vmem:[%s163 + $0x60] sm:$0xff]
        %v1812 = vld [vmem:[%s163 + $0x68] sm:$0xff]
        %v1813 = vld [vmem:[%s163 + $0x70] sm:$0xff]
        %v1814 = vld [vmem:[%s163 + $0x78] sm:$0xff]
        %v1815 = vld [vmem:[%s163 + $0x80] sm:$0xff]
        %v1816 = vld [vmem:[%s163 + $0x88] sm:$0xff]
        %v1817 = vld [vmem:[%s163 + $0x90] sm:$0xff]
        %v1818 = vld [vmem:[%s163 + $0x98] sm:$0xff]
        %v1819 = vld [vmem:[%s163 + $0xa0] sm:$0xff]
        %v1820 = vld [vmem:[%s163 + $0xa8] sm:$0xff]
        %v1821 = vld [vmem:[%s163 + $0xb0] sm:$0xff]
        %v1822 = vld [vmem:[%s163 + $0xb8] sm:$0xff]
        %v1823 = vld [vmem:[%s163 + $0xc0] sm:$0xff]
        %v1824 = vld [vmem:[%s163 + $0xc8] sm:$0xff]
        %v1825 = vld [vmem:[%s163 + $0xd0] sm:$0xff]
        %v1826 = vld [vmem:[%s163 + $0xd8] sm:$0xff]
        %v1827 = vld [vmem:[%s163 + $0xe0] sm:$0xff]
        %v1828 = vld [vmem:[%s163 + $0xe8] sm:$0xff]
        %v1829 = vld [vmem:[%s163 + $0xf0] sm:$0xff]
        %v1830 = vld [vmem:[%s163 + $0xf8] sm:$0xff]
        %v1831 = vadd.f32 %v1799, %v1673
        %v1832 = vadd.f32 %v1800, %v1676
        %v1833 = vadd.f32 %v1801, %v1681
        %v1834 = vadd.f32 %v1802, %v1684
        %v1835 = vadd.f32 %v1803, %v1689
        %v1836 = vadd.f32 %v1804, %v1692
        %v1837 = vadd.f32 %v1805, %v1697
        %v1838 = vadd.f32 %v1806, %v1700
        %v1839 = vadd.f32 %v1807, %v1705
        %v1840 = vadd.f32 %v1808, %v1708
        %v1841 = vadd.f32 %v1809, %v1713
        %v1842 = vadd.f32 %v1810, %v1716
        %v1843 = vadd.f32 %v1811, %v1721
        %v1844 = vadd.f32 %v1812, %v1724
        %v1845 = vadd.f32 %v1813, %v1729
        %v1846 = vadd.f32 %v1814, %v1732
        %v1847 = vadd.f32 %v1815, %v1737
        %v1848 = vadd.f32 %v1816, %v1740
        %v1849 = vadd.f32 %v1817, %v1745
        %v1850 = vadd.f32 %v1818, %v1748
        %v1851 = vadd.f32 %v1819, %v1753
        %v1852 = vadd.f32 %v1820, %v1756
        %v1853 = vadd.f32 %v1821, %v1761
        %v1854 = vadd.f32 %v1822, %v1764
        %v1855 = vadd.f32 %v1823, %v1769
        %v1856 = vadd.f32 %v1824, %v1772
        %v1857 = vadd.f32 %v1825, %v1777
        %v1858 = vadd.f32 %v1826, %v1780
        %v1859 = vadd.f32 %v1827, %v1785
        %v1860 = vadd.f32 %v1828, %v1788
        %v1861 = vadd.f32 %v1829, %v1793
        %v1862 = vadd.f32 %v1830, %v1796
        %1863 = vst [vmem:[%s163] sm:$0xff] %v1831
        %1864 = vst [vmem:[%s163 + $0x8] sm:$0xff] %v1832
        %1865 = vst [vmem:[%s163 + $0x10] sm:$0xff] %v1833
        %1866 = vst [vmem:[%s163 + $0x18] sm:$0xff] %v1834
        %1867 = vst [vmem:[%s163 + $0x20] sm:$0xff] %v1835
        %1868 = vst [vmem:[%s163 + $0x28] sm:$0xff] %v1836
        %1869 = vst [vmem:[%s163 + $0x30] sm:$0xff] %v1837
        %1870 = vst [vmem:[%s163 + $0x38] sm:$0xff] %v1838
        %1871 = vst [vmem:[%s163 + $0x40] sm:$0xff] %v1839
        %1872 = vst [vmem:[%s163 + $0x48] sm:$0xff] %v1840
        %1873 = vst [vmem:[%s163 + $0x50] sm:$0xff] %v1841
        %1874 = vst [vmem:[%s163 + $0x58] sm:$0xff] %v1842
        %1875 = vst [vmem:[%s163 + $0x60] sm:$0xff] %v1843
        %1876 = vst [vmem:[%s163 + $0x68] sm:$0xff] %v1844
        %1877 = vst [vmem:[%s163 + $0x70] sm:$0xff] %v1845
        %1878 = vst [vmem:[%s163 + $0x78] sm:$0xff] %v1846
        %1879 = vst [vmem:[%s163 + $0x80] sm:$0xff] %v1847
        %1880 = vst [vmem:[%s163 + $0x88] sm:$0xff] %v1848
        %1881 = vst [vmem:[%s163 + $0x90] sm:$0xff] %v1849
        %1882 = vst [vmem:[%s163 + $0x98] sm:$0xff] %v1850
        %1883 = vst [vmem:[%s163 + $0xa0] sm:$0xff] %v1851
        %1884 = vst [vmem:[%s163 + $0xa8] sm:$0xff] %v1852
        %1885 = vst [vmem:[%s163 + $0xb0] sm:$0xff] %v1853
        %1886 = vst [vmem:[%s163 + $0xb8] sm:$0xff] %v1854
        %1887 = vst [vmem:[%s163 + $0xc0] sm:$0xff] %v1855
        %1888 = vst [vmem:[%s163 + $0xc8] sm:$0xff] %v1856
        %1889 = vst [vmem:[%s163 + $0xd0] sm:$0xff] %v1857
        %1890 = vst [vmem:[%s163 + $0xd8] sm:$0xff] %v1858
        %1891 = vst [vmem:[%s163 + $0xe0] sm:$0xff] %v1859
        %1892 = vst [vmem:[%s163 + $0xe8] sm:$0xff] %v1860
        %1893 = vst [vmem:[%s163 + $0xf0] sm:$0xff] %v1861
        %1894 = vst [vmem:[%s163 + $0xf8] sm:$0xff] %v1862
        %s1895 = scalar_lea.vmem %s168, 12
        %v1896 = vld [vmem:[%s1895] sm:$0xf]
        %v1897 = vld [vmem:[%s1895 + $0x4] sm:$0xf]
        %v1898 = vld [vmem:[%s1895 + $0xc] sm:$0xf]
        %v1899 = vld [vmem:[%s1895 + $0x10] sm:$0xf]
        %v1900 = vld [vmem:[%s1895 + $0x18] sm:$0xf]
        %v1901 = vld [vmem:[%s1895 + $0x1c] sm:$0xf]
        %v1902 = vld [vmem:[%s1895 + $0x24] sm:$0xf]
        %v1903 = vld [vmem:[%s1895 + $0x28] sm:$0xf]
        %v1904 = vld [vmem:[%s1895 + $0x30] sm:$0xf]
        %v1905 = vld [vmem:[%s1895 + $0x34] sm:$0xf]
        %v1906 = vld [vmem:[%s1895 + $0x3c] sm:$0xf]
        %v1907 = vld [vmem:[%s1895 + $0x40] sm:$0xf]
        %v1908 = vld [vmem:[%s1895 + $0x48] sm:$0xf]
        %v1909 = vld [vmem:[%s1895 + $0x4c] sm:$0xf]
        %v1910 = vld [vmem:[%s1895 + $0x54] sm:$0xf]
        %v1911 = vld [vmem:[%s1895 + $0x58] sm:$0xf]
        %v1912 = vld [vmem:[%s1895 + $0x60] sm:$0xf]
        %v1913 = vld [vmem:[%s1895 + $0x64] sm:$0xf]
        %v1914 = vld [vmem:[%s1895 + $0x6c] sm:$0xf]
        %v1915 = vld [vmem:[%s1895 + $0x70] sm:$0xf]
        %v1916 = vld [vmem:[%s1895 + $0x78] sm:$0xf]
        %v1917 = vld [vmem:[%s1895 + $0x7c] sm:$0xf]
        %v1918 = vld [vmem:[%s1895 + $0x84] sm:$0xf]
        %v1919 = vld [vmem:[%s1895 + $0x88] sm:$0xf]
        %v1920 = vld [vmem:[%s1895 + $0x90] sm:$0xf]
        %v1921 = vld [vmem:[%s1895 + $0x94] sm:$0xf]
        %v1922 = vld [vmem:[%s1895 + $0x9c] sm:$0xf]
        %v1923 = vld [vmem:[%s1895 + $0xa0] sm:$0xf]
        %v1924 = vld [vmem:[%s1895 + $0xa8] sm:$0xf]
        %v1925 = vld [vmem:[%s1895 + $0xac] sm:$0xf]
        %v1926 = vld [vmem:[%s1895 + $0xb4] sm:$0xf]
        %v1927 = vld [vmem:[%s1895 + $0xb8] sm:$0xf]
        %s1928 = scalar_lea.vmem %s172, 6
        %v1929 = vld [vmem:[%s1928] sm:$0x3]
        %v1962 = vunpack.c.l.b16 %v1896
        %v1963 = vunpack.c.l.b16 %v1897
        %v1964 = vunpack.c.l.b16 %v1898
        %v1965 = vunpack.c.l.b16 %v1899
        %v1966 = vunpack.c.l.b16 %v1900
        %v1967 = vunpack.c.l.b16 %v1901
        %v1968 = vunpack.c.l.b16 %v1902
        %v1969 = vunpack.c.l.b16 %v1903
        %v1970 = vunpack.c.l.b16 %v1904
        %v1971 = vunpack.c.l.b16 %v1905
        %v1972 = vunpack.c.l.b16 %v1906
        %v1973 = vunpack.c.l.b16 %v1907
        %v1974 = vunpack.c.l.b16 %v1908
        %v1975 = vunpack.c.l.b16 %v1909
        %v1976 = vunpack.c.l.b16 %v1910
        %v1977 = vunpack.c.l.b16 %v1911
        %v1978 = vunpack.c.l.b16 %v1912
        %v1979 = vunpack.c.l.b16 %v1913
        %v1980 = vunpack.c.l.b16 %v1914
        %v1981 = vunpack.c.l.b16 %v1915
        %v1982 = vunpack.c.l.b16 %v1916
        %v1983 = vunpack.c.l.b16 %v1917
        %v1984 = vunpack.c.l.b16 %v1918
        %v1985 = vunpack.c.l.b16 %v1919
        %v1986 = vunpack.c.l.b16 %v1920
        %v1987 = vunpack.c.l.b16 %v1921
        %v1988 = vunpack.c.l.b16 %v1922
        %v1989 = vunpack.c.l.b16 %v1923
        %v1990 = vunpack.c.l.b16 %v1924
        %v1991 = vunpack.c.l.b16 %v1925
        %v1992 = vunpack.c.l.b16 %v1926
        %v1993 = vunpack.c.l.b16 %v1927
        %v1994 = vpack.c.b16 %v1963, %v1962
        %v1995 = vpack.c.b16 %v1965, %v1964
        %v1996 = vpack.c.b16 %v1967, %v1966
        %v1997 = vpack.c.b16 %v1969, %v1968
        %v1998 = vpack.c.b16 %v1971, %v1970
        %v1999 = vpack.c.b16 %v1973, %v1972
        %v2000 = vpack.c.b16 %v1975, %v1974
        %v2001 = vpack.c.b16 %v1977, %v1976
        %v2002 = vpack.c.b16 %v1979, %v1978
        %v2003 = vpack.c.b16 %v1981, %v1980
        %v2004 = vpack.c.b16 %v1983, %v1982
        %v2005 = vpack.c.b16 %v1985, %v1984
        %v2006 = vpack.c.b16 %v1987, %v1986
        %v2007 = vpack.c.b16 %v1989, %v1988
        %v2008 = vpack.c.b16 %v1991, %v1990
        %v2009 = vpack.c.b16 %v1993, %v1992
        %v2011 = vsel %vm287, %v1994, 0
        %v2014 = vsel %vm287, %v1995, 0
        %v2017 = vsel %vm287, %v1996, 0
        %v2020 = vsel %vm287, %v1997, 0
        %v2023 = vsel %vm287, %v1998, 0
        %v2026 = vsel %vm287, %v1999, 0
        %v2029 = vsel %vm287, %v2000, 0
        %v2032 = vsel %vm287, %v2001, 0
        %v2035 = vsel %vm287, %v2002, 0
        %v2038 = vsel %vm287, %v2003, 0
        %v2041 = vsel %vm287, %v2004, 0
        %v2044 = vsel %vm287, %v2005, 0
        %v2047 = vsel %vm287, %v2006, 0
        %v2050 = vsel %vm287, %v2007, 0
        %v2053 = vsel %vm287, %v2008, 0
        %v2056 = vsel %vm287, %v2009, 0
        %v2059 = vsel %vm336, %v1929, 0
        %2061 = vmatprep.subr.bf16.mxu0 0
        %2062 = vmatpush1.bf16.msra.mxu0 %v2059
        %2063 = vmatprep.subr.bf16.mxu0 0
        %2064 = vmatpush1.bf16.msra.mxu0 0
        %2065 = vmatprep.subr.bf16.mxu0 0
        %2066 = vmatpush1.bf16.msra.mxu0 0
        %2067 = vmatprep.subr.bf16.mxu0 0
        %2068 = vmatpush1.bf16.msra.mxu0 0
        %2069 = vmatprep.subr.bf16.mxu0 0
        %2070 = vmatpush1.bf16.msra.mxu0 0
        %2071 = vmatprep.subr.bf16.mxu0 0
        %2072 = vmatpush1.bf16.msra.mxu0 0
        %2073 = vmatprep.subr.bf16.mxu0 0
        %2074 = vmatpush1.bf16.msra.mxu0 0
        %2075 = vmatprep.subr.bf16.mxu0 0
        %2076 = vmatpush1.bf16.msra.mxu0 0
        %2077 = vmatprep.subr.bf16.mxu0 0
        %2078 = vmatpush1.bf16.msra.mxu0 0
        %2079 = vmatprep.subr.bf16.mxu0 0
        %2080 = vmatpush1.bf16.msra.mxu0 0
        %2081 = vmatprep.subr.bf16.mxu0 0
        %2082 = vmatpush1.bf16.msra.mxu0 0
        %2083 = vmatprep.subr.bf16.mxu0 0
        %2084 = vmatpush1.bf16.msra.mxu0 0
        %2085 = vmatprep.subr.bf16.mxu0 0
        %2086 = vmatpush1.bf16.msra.mxu0 0
        %2087 = vmatprep.subr.bf16.mxu0 0
        %2088 = vmatpush1.bf16.msra.mxu0 0
        %2089 = vmatprep.subr.bf16.mxu0 0
        %2090 = vmatpush1.bf16.msra.mxu0 0
        %2091 = vmatprep.subr.bf16.mxu0 0
        %2092 = vmatpush1.bf16.msra.mxu0 0
        %2093 = vmatprep.mubr.bf16.mxu0 0
        %2094 = vmatmul.mubr.bf16.gmra.mrb[0].mxu0 %v2011
        %v2095 = vpop.f32.mrb[0].mxu0
        %v2096 = vadd.f32 0.0, %v2095
        %v2097 = vpop.f32.mrb[0].mxu0
        %v2098 = vpop.f32.mrb[0].mxu0
        %v2099 = vadd.f32 0.0, %v2098
        %v2100 = vpop.f32.mrb[0].mxu0
        %2101 = vmatprep.mubr.bf16.mxu0 0
        %2102 = vmatmul.mubr.bf16.gmra.mrb[0].mxu0 %v2014
        %v2103 = vpop.f32.mrb[0].mxu0
        %v2104 = vadd.f32 0.0, %v2103
        %v2105 = vpop.f32.mrb[0].mxu0
        %v2106 = vpop.f32.mrb[0].mxu0
        %v2107 = vadd.f32 0.0, %v2106
        %v2108 = vpop.f32.mrb[0].mxu0
        %2109 = vmatprep.mubr.bf16.mxu0 0
        %2110 = vmatmul.mubr.bf16.gmra.mrb[0].mxu0 %v2017
        %v2111 = vpop.f32.mrb[0].mxu0
        %v2112 = vadd.f32 0.0, %v2111
        %v2113 = vpop.f32.mrb[0].mxu0
        %v2114 = vpop.f32.mrb[0].mxu0
        %v2115 = vadd.f32 0.0, %v2114
        %v2116 = vpop.f32.mrb[0].mxu0
        %2117 = vmatprep.mubr.bf16.mxu0 0
        %2118 = vmatmul.mubr.bf16.gmra.mrb[0].mxu0 %v2020
        %v2119 = vpop.f32.mrb[0].mxu0
        %v2120 = vadd.f32 0.0, %v2119
        %v2121 = vpop.f32.mrb[0].mxu0
        %v2122 = vpop.f32.mrb[0].mxu0
        %v2123 = vadd.f32 0.0, %v2122
        %v2124 = vpop.f32.mrb[0].mxu0
        %2125 = vmatprep.mubr.bf16.mxu0 0
        %2126 = vmatmul.mubr.bf16.gmra.mrb[0].mxu0 %v2023
        %v2127 = vpop.f32.mrb[0].mxu0
        %v2128 = vadd.f32 0.0, %v2127
        %v2129 = vpop.f32.mrb[0].mxu0
        %v2130 = vpop.f32.mrb[0].mxu0
        %v2131 = vadd.f32 0.0, %v2130
        %v2132 = vpop.f32.mrb[0].mxu0
        %2133 = vmatprep.mubr.bf16.mxu0 0
        %2134 = vmatmul.mubr.bf16.gmra.mrb[0].mxu0 %v2026
        %v2135 = vpop.f32.mrb[0].mxu0
        %v2136 = vadd.f32 0.0, %v2135
        %v2137 = vpop.f32.mrb[0].mxu0
        %v2138 = vpop.f32.mrb[0].mxu0
        %v2139 = vadd.f32 0.0, %v2138
        %v2140 = vpop.f32.mrb[0].mxu0
        %2141 = vmatprep.mubr.bf16.mxu0 0
        %2142 = vmatmul.mubr.bf16.gmra.mrb[0].mxu0 %v2029
        %v2143 = vpop.f32.mrb[0].mxu0
        %v2144 = vadd.f32 0.0, %v2143
        %v2145 = vpop.f32.mrb[0].mxu0
        %v2146 = vpop.f32.mrb[0].mxu0
        %v2147 = vadd.f32 0.0, %v2146
        %v2148 = vpop.f32.mrb[0].mxu0
        %2149 = vmatprep.mubr.bf16.mxu0 0
        %2150 = vmatmul.mubr.bf16.gmra.mrb[0].mxu0 %v2032
        %v2151 = vpop.f32.mrb[0].mxu0
        %v2152 = vadd.f32 0.0, %v2151
        %v2153 = vpop.f32.mrb[0].mxu0
        %v2154 = vpop.f32.mrb[0].mxu0
        %v2155 = vadd.f32 0.0, %v2154
        %v2156 = vpop.f32.mrb[0].mxu0
        %2157 = vmatprep.mubr.bf16.mxu0 0
        %2158 = vmatmul.mubr.bf16.gmra.mrb[0].mxu0 %v2035
        %v2159 = vpop.f32.mrb[0].mxu0
        %v2160 = vadd.f32 0.0, %v2159
        %v2161 = vpop.f32.mrb[0].mxu0
        %v2162 = vpop.f32.mrb[0].mxu0
        %v2163 = vadd.f32 0.0, %v2162
        %v2164 = vpop.f32.mrb[0].mxu0
        %2165 = vmatprep.mubr.bf16.mxu0 0
        %2166 = vmatmul.mubr.bf16.gmra.mrb[0].mxu0 %v2038
        %v2167 = vpop.f32.mrb[0].mxu0
        %v2168 = vadd.f32 0.0, %v2167
        %v2169 = vpop.f32.mrb[0].mxu0
        %v2170 = vpop.f32.mrb[0].mxu0
        %v2171 = vadd.f32 0.0, %v2170
        %v2172 = vpop.f32.mrb[0].mxu0
        %2173 = vmatprep.mubr.bf16.mxu0 0
        %2174 = vmatmul.mubr.bf16.gmra.mrb[0].mxu0 %v2041
        %v2175 = vpop.f32.mrb[0].mxu0
        %v2176 = vadd.f32 0.0, %v2175
        %v2177 = vpop.f32.mrb[0].mxu0
        %v2178 = vpop.f32.mrb[0].mxu0
        %v2179 = vadd.f32 0.0, %v2178
        %v2180 = vpop.f32.mrb[0].mxu0
        %2181 = vmatprep.mubr.bf16.mxu0 0
        %2182 = vmatmul.mubr.bf16.gmra.mrb[0].mxu0 %v2044
        %v2183 = vpop.f32.mrb[0].mxu0
        %v2184 = vadd.f32 0.0, %v2183
        %v2185 = vpop.f32.mrb[0].mxu0
        %v2186 = vpop.f32.mrb[0].mxu0
        %v2187 = vadd.f32 0.0, %v2186
        %v2188 = vpop.f32.mrb[0].mxu0
        %2189 = vmatprep.mubr.bf16.mxu0 0
        %2190 = vmatmul.mubr.bf16.gmra.mrb[0].mxu0 %v2047
        %v2191 = vpop.f32.mrb[0].mxu0
        %v2192 = vadd.f32 0.0, %v2191
        %v2193 = vpop.f32.mrb[0].mxu0
        %v2194 = vpop.f32.mrb[0].mxu0
        %v2195 = vadd.f32 0.0, %v2194
        %v2196 = vpop.f32.mrb[0].mxu0
        %2197 = vmatprep.mubr.bf16.mxu0 0
        %2198 = vmatmul.mubr.bf16.gmra.mrb[0].mxu0 %v2050
        %v2199 = vpop.f32.mrb[0].mxu0
        %v2200 = vadd.f32 0.0, %v2199
        %v2201 = vpop.f32.mrb[0].mxu0
        %v2202 = vpop.f32.mrb[0].mxu0
        %v2203 = vadd.f32 0.0, %v2202
        %v2204 = vpop.f32.mrb[0].mxu0
        %2205 = vmatprep.mubr.bf16.mxu0 0
        %2206 = vmatmul.mubr.bf16.gmra.mrb[0].mxu0 %v2053
        %v2207 = vpop.f32.mrb[0].mxu0
        %v2208 = vadd.f32 0.0, %v2207
        %v2209 = vpop.f32.mrb[0].mxu0
        %v2210 = vpop.f32.mrb[0].mxu0
        %v2211 = vadd.f32 0.0, %v2210
        %v2212 = vpop.f32.mrb[0].mxu0
        %2213 = vmatprep.mubr.bf16.mxu0 0
        %2214 = vmatmul.mubr.bf16.gmra.mrb[0].mxu0 %v2056
        %v2215 = vpop.f32.mrb[0].mxu0
        %v2216 = vadd.f32 0.0, %v2215
        %v2217 = vpop.f32.mrb[0].mxu0
        %v2218 = vpop.f32.mrb[0].mxu0
        %v2219 = vadd.f32 0.0, %v2218
        %v2220 = vpop.f32.mrb[0].mxu0
        %2221 = vdwg.mxu0
        %v2222 = vld [vmem:[%s163] sm:$0xff]
        %v2223 = vld [vmem:[%s163 + $0x8] sm:$0xff]
        %v2224 = vld [vmem:[%s163 + $0x10] sm:$0xff]
        %v2225 = vld [vmem:[%s163 + $0x18] sm:$0xff]
        %v2226 = vld [vmem:[%s163 + $0x20] sm:$0xff]
        %v2227 = vld [vmem:[%s163 + $0x28] sm:$0xff]
        %v2228 = vld [vmem:[%s163 + $0x30] sm:$0xff]
        %v2229 = vld [vmem:[%s163 + $0x38] sm:$0xff]
        %v2230 = vld [vmem:[%s163 + $0x40] sm:$0xff]
        %v2231 = vld [vmem:[%s163 + $0x48] sm:$0xff]
        %v2232 = vld [vmem:[%s163 + $0x50] sm:$0xff]
        %v2233 = vld [vmem:[%s163 + $0x58] sm:$0xff]
        %v2234 = vld [vmem:[%s163 + $0x60] sm:$0xff]
        %v2235 = vld [vmem:[%s163 + $0x68] sm:$0xff]
        %v2236 = vld [vmem:[%s163 + $0x70] sm:$0xff]
        %v2237 = vld [vmem:[%s163 + $0x78] sm:$0xff]
        %v2238 = vld [vmem:[%s163 + $0x80] sm:$0xff]
        %v2239 = vld [vmem:[%s163 + $0x88] sm:$0xff]
        %v2240 = vld [vmem:[%s163 + $0x90] sm:$0xff]
        %v2241 = vld [vmem:[%s163 + $0x98] sm:$0xff]
        %v2242 = vld [vmem:[%s163 + $0xa0] sm:$0xff]
        %v2243 = vld [vmem:[%s163 + $0xa8] sm:$0xff]
        %v2244 = vld [vmem:[%s163 + $0xb0] sm:$0xff]
        %v2245 = vld [vmem:[%s163 + $0xb8] sm:$0xff]
        %v2246 = vld [vmem:[%s163 + $0xc0] sm:$0xff]
        %v2247 = vld [vmem:[%s163 + $0xc8] sm:$0xff]
        %v2248 = vld [vmem:[%s163 + $0xd0] sm:$0xff]
        %v2249 = vld [vmem:[%s163 + $0xd8] sm:$0xff]
        %v2250 = vld [vmem:[%s163 + $0xe0] sm:$0xff]
        %v2251 = vld [vmem:[%s163 + $0xe8] sm:$0xff]
        %v2252 = vld [vmem:[%s163 + $0xf0] sm:$0xff]
        %v2253 = vld [vmem:[%s163 + $0xf8] sm:$0xff]
        %v2254 = vadd.f32 %v2222, %v2096
        %v2255 = vadd.f32 %v2223, %v2099
        %v2256 = vadd.f32 %v2224, %v2104
        %v2257 = vadd.f32 %v2225, %v2107
        %v2258 = vadd.f32 %v2226, %v2112
        %v2259 = vadd.f32 %v2227, %v2115
        %v2260 = vadd.f32 %v2228, %v2120
        %v2261 = vadd.f32 %v2229, %v2123
        %v2262 = vadd.f32 %v2230, %v2128
        %v2263 = vadd.f32 %v2231, %v2131
        %v2264 = vadd.f32 %v2232, %v2136
        %v2265 = vadd.f32 %v2233, %v2139
        %v2266 = vadd.f32 %v2234, %v2144
        %v2267 = vadd.f32 %v2235, %v2147
        %v2268 = vadd.f32 %v2236, %v2152
        %v2269 = vadd.f32 %v2237, %v2155
        %v2270 = vadd.f32 %v2238, %v2160
        %v2271 = vadd.f32 %v2239, %v2163
        %v2272 = vadd.f32 %v2240, %v2168
        %v2273 = vadd.f32 %v2241, %v2171
        %v2274 = vadd.f32 %v2242, %v2176
        %v2275 = vadd.f32 %v2243, %v2179
        %v2276 = vadd.f32 %v2244, %v2184
        %v2277 = vadd.f32 %v2245, %v2187
        %v2278 = vadd.f32 %v2246, %v2192
        %v2279 = vadd.f32 %v2247, %v2195
        %v2280 = vadd.f32 %v2248, %v2200
        %v2281 = vadd.f32 %v2249, %v2203
        %v2282 = vadd.f32 %v2250, %v2208
        %v2283 = vadd.f32 %v2251, %v2211
        %v2284 = vadd.f32 %v2252, %v2216
        %v2285 = vadd.f32 %v2253, %v2219
        %2286 = vst [vmem:[%s163] sm:$0xff] %v2254
        %2287 = vst [vmem:[%s163 + $0x8] sm:$0xff] %v2255
        %2288 = vst [vmem:[%s163 + $0x10] sm:$0xff] %v2256
        %2289 = vst [vmem:[%s163 + $0x18] sm:$0xff] %v2257
        %2290 = vst [vmem:[%s163 + $0x20] sm:$0xff] %v2258
        %2291 = vst [vmem:[%s163 + $0x28] sm:$0xff] %v2259
        %2292 = vst [vmem:[%s163 + $0x30] sm:$0xff] %v2260
        %2293 = vst [vmem:[%s163 + $0x38] sm:$0xff] %v2261
        %2294 = vst [vmem:[%s163 + $0x40] sm:$0xff] %v2262
        %2295 = vst [vmem:[%s163 + $0x48] sm:$0xff] %v2263
        %2296 = vst [vmem:[%s163 + $0x50] sm:$0xff] %v2264
        %2297 = vst [vmem:[%s163 + $0x58] sm:$0xff] %v2265
        %2298 = vst [vmem:[%s163 + $0x60] sm:$0xff] %v2266
        %2299 = vst [vmem:[%s163 + $0x68] sm:$0xff] %v2267
        %2300 = vst [vmem:[%s163 + $0x70] sm:$0xff] %v2268
        %2301 = vst [vmem:[%s163 + $0x78] sm:$0xff] %v2269
        %2302 = vst [vmem:[%s163 + $0x80] sm:$0xff] %v2270
        %2303 = vst [vmem:[%s163 + $0x88] sm:$0xff] %v2271
        %2304 = vst [vmem:[%s163 + $0x90] sm:$0xff] %v2272
        %2305 = vst [vmem:[%s163 + $0x98] sm:$0xff] %v2273
        %2306 = vst [vmem:[%s163 + $0xa0] sm:$0xff] %v2274
        %2307 = vst [vmem:[%s163 + $0xa8] sm:$0xff] %v2275
        %2308 = vst [vmem:[%s163 + $0xb0] sm:$0xff] %v2276
        %2309 = vst [vmem:[%s163 + $0xb8] sm:$0xff] %v2277
        %2310 = vst [vmem:[%s163 + $0xc0] sm:$0xff] %v2278
        %2311 = vst [vmem:[%s163 + $0xc8] sm:$0xff] %v2279
        %2312 = vst [vmem:[%s163 + $0xd0] sm:$0xff] %v2280
        %2313 = vst [vmem:[%s163 + $0xd8] sm:$0xff] %v2281
        %2314 = vst [vmem:[%s163 + $0xe0] sm:$0xff] %v2282
        %2315 = vst [vmem:[%s163 + $0xe8] sm:$0xff] %v2283
        %2316 = vst [vmem:[%s163 + $0xf0] sm:$0xff] %v2284
        %2317 = vst [vmem:[%s163 + $0xf8] sm:$0xff] %v2285
        %v2318 = vld [vmem:[%s1895] sm:$0xf]
        %v2319 = vld [vmem:[%s1895 + $0x4] sm:$0xf]
        %v2320 = vld [vmem:[%s1895 + $0x8] sm:$0x1]
        %v2321 = vld [vmem:[%s1895 + $0xc] sm:$0xf]
        %v2322 = vld [vmem:[%s1895 + $0x10] sm:$0xf]
        %v2323 = vld [vmem:[%s1895 + $0x14] sm:$0x1]
        %v2324 = vld [vmem:[%s1895 + $0x18] sm:$0xf]
        %v2325 = vld [vmem:[%s1895 + $0x1c] sm:$0xf]
        %v2326 = vld [vmem:[%s1895 + $0x20] sm:$0x1]
        %v2327 = vld [vmem:[%s1895 + $0x24] sm:$0xf]
        %v2328 = vld [vmem:[%s1895 + $0x28] sm:$0xf]
        %v2329 = vld [vmem:[%s1895 + $0x2c] sm:$0x1]
        %v2330 = vld [vmem:[%s1895 + $0x30] sm:$0xf]
        %v2331 = vld [vmem:[%s1895 + $0x34] sm:$0xf]
        %v2332 = vld [vmem:[%s1895 + $0x38] sm:$0x1]
        %v2333 = vld [vmem:[%s1895 + $0x3c] sm:$0xf]
        %v2334 = vld [vmem:[%s1895 + $0x40] sm:$0xf]
        %v2335 = vld [vmem:[%s1895 + $0x44] sm:$0x1]
        %v2336 = vld [vmem:[%s1895 + $0x48] sm:$0xf]
        %v2337 = vld [vmem:[%s1895 + $0x4c] sm:$0xf]
        %v2338 = vld [vmem:[%s1895 + $0x50] sm:$0x1]
        %v2339 = vld [vmem:[%s1895 + $0x54] sm:$0xf]
        %v2340 = vld [vmem:[%s1895 + $0x58] sm:$0xf]
        %v2341 = vld [vmem:[%s1895 + $0x5c] sm:$0x1]
        %v2342 = vld [vmem:[%s1895 + $0x60] sm:$0xf]
        %v2343 = vld [vmem:[%s1895 + $0x64] sm:$0xf]
        %v2344 = vld [vmem:[%s1895 + $0x68] sm:$0x1]
        %v2345 = vld [vmem:[%s1895 + $0x6c] sm:$0xf]
        %v2346 = vld [vmem:[%s1895 + $0x70] sm:$0xf]
        %v2347 = vld [vmem:[%s1895 + $0x74] sm:$0x1]
        %v2348 = vld [vmem:[%s1895 + $0x78] sm:$0xf]
        %v2349 = vld [vmem:[%s1895 + $0x7c] sm:$0xf]
        %v2350 = vld [vmem:[%s1895 + $0x80] sm:$0x1]
        %v2351 = vld [vmem:[%s1895 + $0x84] sm:$0xf]
        %v2352 = vld [vmem:[%s1895 + $0x88] sm:$0xf]
        %v2353 = vld [vmem:[%s1895 + $0x8c] sm:$0x1]
        %v2354 = vld [vmem:[%s1895 + $0x90] sm:$0xf]
        %v2355 = vld [vmem:[%s1895 + $0x94] sm:$0xf]
        %v2356 = vld [vmem:[%s1895 + $0x98] sm:$0x1]
        %v2357 = vld [vmem:[%s1895 + $0x9c] sm:$0xf]
        %v2358 = vld [vmem:[%s1895 + $0xa0] sm:$0xf]
        %v2359 = vld [vmem:[%s1895 + $0xa4] sm:$0x1]
        %v2360 = vld [vmem:[%s1895 + $0xa8] sm:$0xf]
        %v2361 = vld [vmem:[%s1895 + $0xac] sm:$0xf]
        %v2362 = vld [vmem:[%s1895 + $0xb0] sm:$0x1]
        %v2363 = vld [vmem:[%s1895 + $0xb4] sm:$0xf]
        %v2364 = vld [vmem:[%s1895 + $0xb8] sm:$0xf]
        %v2365 = vld [vmem:[%s1895 + $0xbc] sm:$0x1]
        %v2367 = vshrl.u32 %v2318, 16
        %v2369 = vrot.slane %v2367, 4
        %v2370 = vshll.u32 %v2318, 16
        %v2372 = vrot.slane %v2370, 5
        %v2373 = vor.u32 %v2369, %v2372
        %v2374 = vrot.slane %v2373, 4
        %v2376 = vshll.u32 %v2319, 16
        %v2378 = vrot.slane %v2376, 5
        %v2379 = vsel %vm583, %v2374, %v2378
        %v2380 = vshrl.u32 %v2319, 16
        %v2382 = vrot.slane %v2380, 4
        %v2383 = vor.u32 %v2382, %v2378
        %v2384 = vrot.slane %v2383, 4
        %v2386 = vshll.u32 %v2320, 16
        %v2388 = vrot.slane %v2386, 5
        %v2389 = vsel %vm583, %v2384, %v2388
        %v2391 = vshrl.u32 %v2321, 16
        %v2393 = vrot.slane %v2391, 4
        %v2394 = vshll.u32 %v2321, 16
        %v2396 = vrot.slane %v2394, 5
        %v2397 = vor.u32 %v2393, %v2396
        %v2398 = vrot.slane %v2397, 4
        %v2400 = vshll.u32 %v2322, 16
        %v2402 = vrot.slane %v2400, 5
        %v2403 = vsel %vm583, %v2398, %v2402
        %v2404 = vshrl.u32 %v2322, 16
        %v2406 = vrot.slane %v2404, 4
        %v2407 = vor.u32 %v2406, %v2402
        %v2408 = vrot.slane %v2407, 4
        %v2410 = vshll.u32 %v2323, 16
        %v2412 = vrot.slane %v2410, 5
        %v2413 = vsel %vm583, %v2408, %v2412
        %v2415 = vshrl.u32 %v2324, 16
        %v2417 = vrot.slane %v2415, 4
        %v2418 = vshll.u32 %v2324, 16
        %v2420 = vrot.slane %v2418, 5
        %v2421 = vor.u32 %v2417, %v2420
        %v2422 = vrot.slane %v2421, 4
        %v2424 = vshll.u32 %v2325, 16
        %v2426 = vrot.slane %v2424, 5
        %v2427 = vsel %vm583, %v2422, %v2426
        %v2428 = vshrl.u32 %v2325, 16
        %v2430 = vrot.slane %v2428, 4
        %v2431 = vor.u32 %v2430, %v2426
        %v2432 = vrot.slane %v2431, 4
        %v2434 = vshll.u32 %v2326, 16
        %v2436 = vrot.slane %v2434, 5
        %v2437 = vsel %vm583, %v2432, %v2436
        %v2439 = vshrl.u32 %v2327, 16
        %v2441 = vrot.slane %v2439, 4
        %v2442 = vshll.u32 %v2327, 16
        %v2444 = vrot.slane %v2442, 5
        %v2445 = vor.u32 %v2441, %v2444
        %v2446 = vrot.slane %v2445, 4
        %v2448 = vshll.u32 %v2328, 16
        %v2450 = vrot.slane %v2448, 5
        %v2451 = vsel %vm583, %v2446, %v2450
        %v2452 = vshrl.u32 %v2328, 16
        %v2454 = vrot.slane %v2452, 4
        %v2455 = vor.u32 %v2454, %v2450
        %v2456 = vrot.slane %v2455, 4
        %v2458 = vshll.u32 %v2329, 16
        %v2460 = vrot.slane %v2458, 5
        %v2461 = vsel %vm583, %v2456, %v2460
        %v2463 = vshrl.u32 %v2330, 16
        %v2465 = vrot.slane %v2463, 4
        %v2466 = vshll.u32 %v2330, 16
        %v2468 = vrot.slane %v2466, 5
        %v2469 = vor.u32 %v2465, %v2468
        %v2470 = vrot.slane %v2469, 4
        %v2472 = vshll.u32 %v2331, 16
        %v2474 = vrot.slane %v2472, 5
        %v2475 = vsel %vm583, %v2470, %v2474
        %v2476 = vshrl.u32 %v2331, 16
        %v2478 = vrot.slane %v2476, 4
        %v2479 = vor.u32 %v2478, %v2474
        %v2480 = vrot.slane %v2479, 4
        %v2482 = vshll.u32 %v2332, 16
        %v2484 = vrot.slane %v2482, 5
        %v2485 = vsel %vm583, %v2480, %v2484
        %v2487 = vshrl.u32 %v2333, 16
        %v2489 = vrot.slane %v2487, 4
        %v2490 = vshll.u32 %v2333, 16
        %v2492 = vrot.slane %v2490, 5
        %v2493 = vor.u32 %v2489, %v2492
        %v2494 = vrot.slane %v2493, 4
        %v2496 = vshll.u32 %v2334, 16
        %v2498 = vrot.slane %v2496, 5
        %v2499 = vsel %vm583, %v2494, %v2498
        %v2500 = vshrl.u32 %v2334, 16
        %v2502 = vrot.slane %v2500, 4
        %v2503 = vor.u32 %v2502, %v2498
        %v2504 = vrot.slane %v2503, 4
        %v2506 = vshll.u32 %v2335, 16
        %v2508 = vrot.slane %v2506, 5
        %v2509 = vsel %vm583, %v2504, %v2508
        %v2511 = vshrl.u32 %v2336, 16
        %v2513 = vrot.slane %v2511, 4
        %v2514 = vshll.u32 %v2336, 16
        %v2516 = vrot.slane %v2514, 5
        %v2517 = vor.u32 %v2513, %v2516
        %v2518 = vrot.slane %v2517, 4
        %v2520 = vshll.u32 %v2337, 16
        %v2522 = vrot.slane %v2520, 5
        %v2523 = vsel %vm583, %v2518, %v2522
        %v2524 = vshrl.u32 %v2337, 16
        %v2526 = vrot.slane %v2524, 4
        %v2527 = vor.u32 %v2526, %v2522
        %v2528 = vrot.slane %v2527, 4
        %v2530 = vshll.u32 %v2338, 16
        %v2532 = vrot.slane %v2530, 5
        %v2533 = vsel %vm583, %v2528, %v2532
        %v2535 = vshrl.u32 %v2339, 16
        %v2537 = vrot.slane %v2535, 4
        %v2538 = vshll.u32 %v2339, 16
        %v2540 = vrot.slane %v2538, 5
        %v2541 = vor.u32 %v2537, %v2540
        %v2542 = vrot.slane %v2541, 4
        %v2544 = vshll.u32 %v2340, 16
        %v2546 = vrot.slane %v2544, 5
        %v2547 = vsel %vm583, %v2542, %v2546
        %v2548 = vshrl.u32 %v2340, 16
        %v2550 = vrot.slane %v2548, 4
        %v2551 = vor.u32 %v2550, %v2546
        %v2552 = vrot.slane %v2551, 4
        %v2554 = vshll.u32 %v2341, 16
        %v2556 = vrot.slane %v2554, 5
        %v2557 = vsel %vm583, %v2552, %v2556
        %v2559 = vshrl.u32 %v2342, 16
        %v2561 = vrot.slane %v2559, 4
        %v2562 = vshll.u32 %v2342, 16
        %v2564 = vrot.slane %v2562, 5
        %v2565 = vor.u32 %v2561, %v2564
        %v2566 = vrot.slane %v2565, 4
        %v2568 = vshll.u32 %v2343, 16
        %v2570 = vrot.slane %v2568, 5
        %v2571 = vsel %vm583, %v2566, %v2570
        %v2572 = vshrl.u32 %v2343, 16
        %v2574 = vrot.slane %v2572, 4
        %v2575 = vor.u32 %v2574, %v2570
        %v2576 = vrot.slane %v2575, 4
        %v2578 = vshll.u32 %v2344, 16
        %v2580 = vrot.slane %v2578, 5
        %v2581 = vsel %vm583, %v2576, %v2580
        %v2583 = vshrl.u32 %v2345, 16
        %v2585 = vrot.slane %v2583, 4
        %v2586 = vshll.u32 %v2345, 16
        %v2588 = vrot.slane %v2586, 5
        %v2589 = vor.u32 %v2585, %v2588
        %v2590 = vrot.slane %v2589, 4
        %v2592 = vshll.u32 %v2346, 16
        %v2594 = vrot.slane %v2592, 5
        %v2595 = vsel %vm583, %v2590, %v2594
        %v2596 = vshrl.u32 %v2346, 16
        %v2598 = vrot.slane %v2596, 4
        %v2599 = vor.u32 %v2598, %v2594
        %v2600 = vrot.slane %v2599, 4
        %v2602 = vshll.u32 %v2347, 16
        %v2604 = vrot.slane %v2602, 5
        %v2605 = vsel %vm583, %v2600, %v2604
        %v2607 = vshrl.u32 %v2348, 16
        %v2609 = vrot.slane %v2607, 4
        %v2610 = vshll.u32 %v2348, 16
        %v2612 = vrot.slane %v2610, 5
        %v2613 = vor.u32 %v2609, %v2612
        %v2614 = vrot.slane %v2613, 4
        %v2616 = vshll.u32 %v2349, 16
        %v2618 = vrot.slane %v2616, 5
        %v2619 = vsel %vm583, %v2614, %v2618
        %v2620 = vshrl.u32 %v2349, 16
        %v2622 = vrot.slane %v2620, 4
        %v2623 = vor.u32 %v2622, %v2618
        %v2624 = vrot.slane %v2623, 4
        %v2626 = vshll.u32 %v2350, 16
        %v2628 = vrot.slane %v2626, 5
        %v2629 = vsel %vm583, %v2624, %v2628
        %v2631 = vshrl.u32 %v2351, 16
        %v2633 = vrot.slane %v2631, 4
        %v2634 = vshll.u32 %v2351, 16
        %v2636 = vrot.slane %v2634, 5
        %v2637 = vor.u32 %v2633, %v2636
        %v2638 = vrot.slane %v2637, 4
        %v2640 = vshll.u32 %v2352, 16
        %v2642 = vrot.slane %v2640, 5
        %v2643 = vsel %vm583, %v2638, %v2642
        %v2644 = vshrl.u32 %v2352, 16
        %v2646 = vrot.slane %v2644, 4
        %v2647 = vor.u32 %v2646, %v2642
        %v2648 = vrot.slane %v2647, 4
        %v2650 = vshll.u32 %v2353, 16
        %v2652 = vrot.slane %v2650, 5
        %v2653 = vsel %vm583, %v2648, %v2652
        %v2655 = vshrl.u32 %v2354, 16
        %v2657 = vrot.slane %v2655, 4
        %v2658 = vshll.u32 %v2354, 16
        %v2660 = vrot.slane %v2658, 5
        %v2661 = vor.u32 %v2657, %v2660
        %v2662 = vrot.slane %v2661, 4
        %v2664 = vshll.u32 %v2355, 16
        %v2666 = vrot.slane %v2664, 5
        %v2667 = vsel %vm583, %v2662, %v2666
        %v2668 = vshrl.u32 %v2355, 16
        %v2670 = vrot.slane %v2668, 4
        %v2671 = vor.u32 %v2670, %v2666
        %v2672 = vrot.slane %v2671, 4
        %v2674 = vshll.u32 %v2356, 16
        %v2676 = vrot.slane %v2674, 5
        %v2677 = vsel %vm583, %v2672, %v2676
        %v2679 = vshrl.u32 %v2357, 16
        %v2681 = vrot.slane %v2679, 4
        %v2682 = vshll.u32 %v2357, 16
        %v2684 = vrot.slane %v2682, 5
        %v2685 = vor.u32 %v2681, %v2684
        %v2686 = vrot.slane %v2685, 4
        %v2688 = vshll.u32 %v2358, 16
        %v2690 = vrot.slane %v2688, 5
        %v2691 = vsel %vm583, %v2686, %v2690
        %v2692 = vshrl.u32 %v2358, 16
        %v2694 = vrot.slane %v2692, 4
        %v2695 = vor.u32 %v2694, %v2690
        %v2696 = vrot.slane %v2695, 4
        %v2698 = vshll.u32 %v2359, 16
        %v2700 = vrot.slane %v2698, 5
        %v2701 = vsel %vm583, %v2696, %v2700
        %v2703 = vshrl.u32 %v2360, 16
        %v2705 = vrot.slane %v2703, 4
        %v2706 = vshll.u32 %v2360, 16
        %v2708 = vrot.slane %v2706, 5
        %v2709 = vor.u32 %v2705, %v2708
        %v2710 = vrot.slane %v2709, 4
        %v2712 = vshll.u32 %v2361, 16
        %v2714 = vrot.slane %v2712, 5
        %v2715 = vsel %vm583, %v2710, %v2714
        %v2716 = vshrl.u32 %v2361, 16
        %v2718 = vrot.slane %v2716, 4
        %v2719 = vor.u32 %v2718, %v2714
        %v2720 = vrot.slane %v2719, 4
        %v2722 = vshll.u32 %v2362, 16
        %v2724 = vrot.slane %v2722, 5
        %v2725 = vsel %vm583, %v2720, %v2724
        %v2727 = vshrl.u32 %v2363, 16
        %v2729 = vrot.slane %v2727, 4
        %v2730 = vshll.u32 %v2363, 16
        %v2732 = vrot.slane %v2730, 5
        %v2733 = vor.u32 %v2729, %v2732
        %v2734 = vrot.slane %v2733, 4
        %v2736 = vshll.u32 %v2364, 16
        %v2738 = vrot.slane %v2736, 5
        %v2739 = vsel %vm583, %v2734, %v2738
        %v2740 = vshrl.u32 %v2364, 16
        %v2742 = vrot.slane %v2740, 4
        %v2743 = vor.u32 %v2742, %v2738
        %v2744 = vrot.slane %v2743, 4
        %v2746 = vshll.u32 %v2365, 16
        %v2748 = vrot.slane %v2746, 5
        %v2749 = vsel %vm583, %v2744, %v2748
        %s2750 = scalar_lea.vmem %s172, 8
        %v2751 = vld [vmem:[%s2750] sm:$0x3]
        %v2752 = vunpack.c.l.b16 %v2379
        %v2753 = vunpack.c.l.b16 %v2389
        %v2754 = vunpack.c.l.b16 %v2403
        %v2755 = vunpack.c.l.b16 %v2413
        %v2756 = vunpack.c.l.b16 %v2427
        %v2757 = vunpack.c.l.b16 %v2437
        %v2758 = vunpack.c.l.b16 %v2451
        %v2759 = vunpack.c.l.b16 %v2461
        %v2760 = vunpack.c.l.b16 %v2475
        %v2761 = vunpack.c.l.b16 %v2485
        %v2762 = vunpack.c.l.b16 %v2499
        %v2763 = vunpack.c.l.b16 %v2509
        %v2764 = vunpack.c.l.b16 %v2523
        %v2765 = vunpack.c.l.b16 %v2533
        %v2766 = vunpack.c.l.b16 %v2547
        %v2767 = vunpack.c.l.b16 %v2557
        %v2768 = vunpack.c.l.b16 %v2571
        %v2769 = vunpack.c.l.b16 %v2581
        %v2770 = vunpack.c.l.b16 %v2595
        %v2771 = vunpack.c.l.b16 %v2605
        %v2772 = vunpack.c.l.b16 %v2619
        %v2773 = vunpack.c.l.b16 %v2629
        %v2774 = vunpack.c.l.b16 %v2643
        %v2775 = vunpack.c.l.b16 %v2653
        %v2776 = vunpack.c.l.b16 %v2667
        %v2777 = vunpack.c.l.b16 %v2677
        %v2778 = vunpack.c.l.b16 %v2691
        %v2779 = vunpack.c.l.b16 %v2701
        %v2780 = vunpack.c.l.b16 %v2715
        %v2781 = vunpack.c.l.b16 %v2725
        %v2782 = vunpack.c.l.b16 %v2739
        %v2783 = vunpack.c.l.b16 %v2749
        %v2784 = vpack.c.b16 %v2753, %v2752
        %v2785 = vpack.c.b16 %v2755, %v2754
        %v2786 = vpack.c.b16 %v2757, %v2756
        %v2787 = vpack.c.b16 %v2759, %v2758
        %v2788 = vpack.c.b16 %v2761, %v2760
        %v2789 = vpack.c.b16 %v2763, %v2762
        %v2790 = vpack.c.b16 %v2765, %v2764
        %v2791 = vpack.c.b16 %v2767, %v2766
        %v2792 = vpack.c.b16 %v2769, %v2768
        %v2793 = vpack.c.b16 %v2771, %v2770
        %v2794 = vpack.c.b16 %v2773, %v2772
        %v2795 = vpack.c.b16 %v2775, %v2774
        %v2796 = vpack.c.b16 %v2777, %v2776
        %v2797 = vpack.c.b16 %v2779, %v2778
        %v2798 = vpack.c.b16 %v2781, %v2780
        %v2799 = vpack.c.b16 %v2783, %v2782
        %v2801 = vsel %vm287, %v2784, 0
        %v2804 = vsel %vm287, %v2785, 0
        %v2807 = vsel %vm287, %v2786, 0
        %v2810 = vsel %vm287, %v2787, 0
        %v2813 = vsel %vm287, %v2788, 0
        %v2816 = vsel %vm287, %v2789, 0
        %v2819 = vsel %vm287, %v2790, 0
        %v2822 = vsel %vm287, %v2791, 0
        %v2825 = vsel %vm287, %v2792, 0
        %v2828 = vsel %vm287, %v2793, 0
        %v2831 = vsel %vm287, %v2794, 0
        %v2834 = vsel %vm287, %v2795, 0
        %v2837 = vsel %vm287, %v2796, 0
        %v2840 = vsel %vm287, %v2797, 0
        %v2843 = vsel %vm287, %v2798, 0
        %v2846 = vsel %vm287, %v2799, 0
        %v2849 = vsel %vm336, %v2751, 0
        %2851 = vmatprep.subr.bf16.mxu0 0
        %2852 = vmatpush1.bf16.msra.mxu0 %v2849
        %2853 = vmatprep.subr.bf16.mxu0 0
        %2854 = vmatpush1.bf16.msra.mxu0 0
        %2855 = vmatprep.subr.bf16.mxu0 0
        %2856 = vmatpush1.bf16.msra.mxu0 0
        %2857 = vmatprep.subr.bf16.mxu0 0
        %2858 = vmatpush1.bf16.msra.mxu0 0
        %2859 = vmatprep.subr.bf16.mxu0 0
        %2860 = vmatpush1.bf16.msra.mxu0 0
        %2861 = vmatprep.subr.bf16.mxu0 0
        %2862 = vmatpush1.bf16.msra.mxu0 0
        %2863 = vmatprep.subr.bf16.mxu0 0
        %2864 = vmatpush1.bf16.msra.mxu0 0
        %2865 = vmatprep.subr.bf16.mxu0 0
        %2866 = vmatpush1.bf16.msra.mxu0 0
        %2867 = vmatprep.subr.bf16.mxu0 0
        %2868 = vmatpush1.bf16.msra.mxu0 0
        %2869 = vmatprep.subr.bf16.mxu0 0
        %2870 = vmatpush1.bf16.msra.mxu0 0
        %2871 = vmatprep.subr.bf16.mxu0 0
        %2872 = vmatpush1.bf16.msra.mxu0 0
        %2873 = vmatprep.subr.bf16.mxu0 0
        %2874 = vmatpush1.bf16.msra.mxu0 0
        %2875 = vmatprep.subr.bf16.mxu0 0
        %2876 = vmatpush1.bf16.msra.mxu0 0
        %2877 = vmatprep.subr.bf16.mxu0 0
        %2878 = vmatpush1.bf16.msra.mxu0 0
        %2879 = vmatprep.subr.bf16.mxu0 0
        %2880 = vmatpush1.bf16.msra.mxu0 0
        %2881 = vmatprep.subr.bf16.mxu0 0
        %2882 = vmatpush1.bf16.msra.mxu0 0
        %2883 = vmatprep.mubr.bf16.mxu0 0
        %2884 = vmatmul.mubr.bf16.gmra.mrb[0].mxu0 %v2801
        %v2885 = vpop.f32.mrb[0].mxu0
        %v2886 = vadd.f32 0.0, %v2885
        %v2887 = vpop.f32.mrb[0].mxu0
        %v2888 = vpop.f32.mrb[0].mxu0
        %v2889 = vadd.f32 0.0, %v2888
        %v2890 = vpop.f32.mrb[0].mxu0
        %2891 = vmatprep.mubr.bf16.mxu0 0
        %2892 = vmatmul.mubr.bf16.gmra.mrb[0].mxu0 %v2804
        %v2893 = vpop.f32.mrb[0].mxu0
        %v2894 = vadd.f32 0.0, %v2893
        %v2895 = vpop.f32.mrb[0].mxu0
        %v2896 = vpop.f32.mrb[0].mxu0
        %v2897 = vadd.f32 0.0, %v2896
        %v2898 = vpop.f32.mrb[0].mxu0
        %2899 = vmatprep.mubr.bf16.mxu0 0
        %2900 = vmatmul.mubr.bf16.gmra.mrb[0].mxu0 %v2807
        %v2901 = vpop.f32.mrb[0].mxu0
        %v2902 = vadd.f32 0.0, %v2901
        %v2903 = vpop.f32.mrb[0].mxu0
        %v2904 = vpop.f32.mrb[0].mxu0
        %v2905 = vadd.f32 0.0, %v2904
        %v2906 = vpop.f32.mrb[0].mxu0
        %2907 = vmatprep.mubr.bf16.mxu0 0
        %2908 = vmatmul.mubr.bf16.gmra.mrb[0].mxu0 %v2810
        %v2909 = vpop.f32.mrb[0].mxu0
        %v2910 = vadd.f32 0.0, %v2909
        %v2911 = vpop.f32.mrb[0].mxu0
        %v2912 = vpop.f32.mrb[0].mxu0
        %v2913 = vadd.f32 0.0, %v2912
        %v2914 = vpop.f32.mrb[0].mxu0
        %2915 = vmatprep.mubr.bf16.mxu0 0
        %2916 = vmatmul.mubr.bf16.gmra.mrb[0].mxu0 %v2813
        %v2917 = vpop.f32.mrb[0].mxu0
        %v2918 = vadd.f32 0.0, %v2917
        %v2919 = vpop.f32.mrb[0].mxu0
        %v2920 = vpop.f32.mrb[0].mxu0
        %v2921 = vadd.f32 0.0, %v2920
        %v2922 = vpop.f32.mrb[0].mxu0
        %2923 = vmatprep.mubr.bf16.mxu0 0
        %2924 = vmatmul.mubr.bf16.gmra.mrb[0].mxu0 %v2816
        %v2925 = vpop.f32.mrb[0].mxu0
        %v2926 = vadd.f32 0.0, %v2925
        %v2927 = vpop.f32.mrb[0].mxu0
        %v2928 = vpop.f32.mrb[0].mxu0
        %v2929 = vadd.f32 0.0, %v2928
        %v2930 = vpop.f32.mrb[0].mxu0
        %2931 = vmatprep.mubr.bf16.mxu0 0
        %2932 = vmatmul.mubr.bf16.gmra.mrb[0].mxu0 %v2819
        %v2933 = vpop.f32.mrb[0].mxu0
        %v2934 = vadd.f32 0.0, %v2933
        %v2935 = vpop.f32.mrb[0].mxu0
        %v2936 = vpop.f32.mrb[0].mxu0
        %v2937 = vadd.f32 0.0, %v2936
        %v2938 = vpop.f32.mrb[0].mxu0
        %2939 = vmatprep.mubr.bf16.mxu0 0
        %2940 = vmatmul.mubr.bf16.gmra.mrb[0].mxu0 %v2822
        %v2941 = vpop.f32.mrb[0].mxu0
        %v2942 = vadd.f32 0.0, %v2941
        %v2943 = vpop.f32.mrb[0].mxu0
        %v2944 = vpop.f32.mrb[0].mxu0
        %v2945 = vadd.f32 0.0, %v2944
        %v2946 = vpop.f32.mrb[0].mxu0
        %2947 = vmatprep.mubr.bf16.mxu0 0
        %2948 = vmatmul.mubr.bf16.gmra.mrb[0].mxu0 %v2825
        %v2949 = vpop.f32.mrb[0].mxu0
        %v2950 = vadd.f32 0.0, %v2949
        %v2951 = vpop.f32.mrb[0].mxu0
        %v2952 = vpop.f32.mrb[0].mxu0
        %v2953 = vadd.f32 0.0, %v2952
        %v2954 = vpop.f32.mrb[0].mxu0
        %2955 = vmatprep.mubr.bf16.mxu0 0
        %2956 = vmatmul.mubr.bf16.gmra.mrb[0].mxu0 %v2828
        %v2957 = vpop.f32.mrb[0].mxu0
        %v2958 = vadd.f32 0.0, %v2957
        %v2959 = vpop.f32.mrb[0].mxu0
        %v2960 = vpop.f32.mrb[0].mxu0
        %v2961 = vadd.f32 0.0, %v2960
        %v2962 = vpop.f32.mrb[0].mxu0
        %2963 = vmatprep.mubr.bf16.mxu0 0
        %2964 = vmatmul.mubr.bf16.gmra.mrb[0].mxu0 %v2831
        %v2965 = vpop.f32.mrb[0].mxu0
        %v2966 = vadd.f32 0.0, %v2965
        %v2967 = vpop.f32.mrb[0].mxu0
        %v2968 = vpop.f32.mrb[0].mxu0
        %v2969 = vadd.f32 0.0, %v2968
        %v2970 = vpop.f32.mrb[0].mxu0
        %2971 = vmatprep.mubr.bf16.mxu0 0
        %2972 = vmatmul.mubr.bf16.gmra.mrb[0].mxu0 %v2834
        %v2973 = vpop.f32.mrb[0].mxu0
        %v2974 = vadd.f32 0.0, %v2973
        %v2975 = vpop.f32.mrb[0].mxu0
        %v2976 = vpop.f32.mrb[0].mxu0
        %v2977 = vadd.f32 0.0, %v2976
        %v2978 = vpop.f32.mrb[0].mxu0
        %2979 = vmatprep.mubr.bf16.mxu0 0
        %2980 = vmatmul.mubr.bf16.gmra.mrb[0].mxu0 %v2837
        %v2981 = vpop.f32.mrb[0].mxu0
        %v2982 = vadd.f32 0.0, %v2981
        %v2983 = vpop.f32.mrb[0].mxu0
        %v2984 = vpop.f32.mrb[0].mxu0
        %v2985 = vadd.f32 0.0, %v2984
        %v2986 = vpop.f32.mrb[0].mxu0
        %2987 = vmatprep.mubr.bf16.mxu0 0
        %2988 = vmatmul.mubr.bf16.gmra.mrb[0].mxu0 %v2840
        %v2989 = vpop.f32.mrb[0].mxu0
        %v2990 = vadd.f32 0.0, %v2989
        %v2991 = vpop.f32.mrb[0].mxu0
        %v2992 = vpop.f32.mrb[0].mxu0
        %v2993 = vadd.f32 0.0, %v2992
        %v2994 = vpop.f32.mrb[0].mxu0
        %2995 = vmatprep.mubr.bf16.mxu0 0
        %2996 = vmatmul.mubr.bf16.gmra.mrb[0].mxu0 %v2843
        %v2997 = vpop.f32.mrb[0].mxu0
        %v2998 = vadd.f32 0.0, %v2997
        %v2999 = vpop.f32.mrb[0].mxu0
        %v3000 = vpop.f32.mrb[0].mxu0
        %v3001 = vadd.f32 0.0, %v3000
        %v3002 = vpop.f32.mrb[0].mxu0
        %3003 = vmatprep.mubr.bf16.mxu0 0
        %3004 = vmatmul.mubr.bf16.gmra.mrb[0].mxu0 %v2846
        %v3005 = vpop.f32.mrb[0].mxu0
        %v3006 = vadd.f32 0.0, %v3005
        %v3007 = vpop.f32.mrb[0].mxu0
        %v3008 = vpop.f32.mrb[0].mxu0
        %v3009 = vadd.f32 0.0, %v3008
        %v3010 = vpop.f32.mrb[0].mxu0
        %3011 = vdwg.mxu0
        %v3012 = vld [vmem:[%s163] sm:$0xff]
        %v3013 = vld [vmem:[%s163 + $0x8] sm:$0xff]
        %v3014 = vld [vmem:[%s163 + $0x10] sm:$0xff]
        %v3015 = vld [vmem:[%s163 + $0x18] sm:$0xff]
        %v3016 = vld [vmem:[%s163 + $0x20] sm:$0xff]
        %v3017 = vld [vmem:[%s163 + $0x28] sm:$0xff]
        %v3018 = vld [vmem:[%s163 + $0x30] sm:$0xff]
        %v3019 = vld [vmem:[%s163 + $0x38] sm:$0xff]
        %v3020 = vld [vmem:[%s163 + $0x40] sm:$0xff]
        %v3021 = vld [vmem:[%s163 + $0x48] sm:$0xff]
        %v3022 = vld [vmem:[%s163 + $0x50] sm:$0xff]
        %v3023 = vld [vmem:[%s163 + $0x58] sm:$0xff]
        %v3024 = vld [vmem:[%s163 + $0x60] sm:$0xff]
        %v3025 = vld [vmem:[%s163 + $0x68] sm:$0xff]
        %v3026 = vld [vmem:[%s163 + $0x70] sm:$0xff]
        %v3027 = vld [vmem:[%s163 + $0x78] sm:$0xff]
        %v3028 = vld [vmem:[%s163 + $0x80] sm:$0xff]
        %v3029 = vld [vmem:[%s163 + $0x88] sm:$0xff]
        %v3030 = vld [vmem:[%s163 + $0x90] sm:$0xff]
        %v3031 = vld [vmem:[%s163 + $0x98] sm:$0xff]
        %v3032 = vld [vmem:[%s163 + $0xa0] sm:$0xff]
        %v3033 = vld [vmem:[%s163 + $0xa8] sm:$0xff]
        %v3034 = vld [vmem:[%s163 + $0xb0] sm:$0xff]
        %v3035 = vld [vmem:[%s163 + $0xb8] sm:$0xff]
        %v3036 = vld [vmem:[%s163 + $0xc0] sm:$0xff]
        %v3037 = vld [vmem:[%s163 + $0xc8] sm:$0xff]
        %v3038 = vld [vmem:[%s163 + $0xd0] sm:$0xff]
        %v3039 = vld [vmem:[%s163 + $0xd8] sm:$0xff]
        %v3040 = vld [vmem:[%s163 + $0xe0] sm:$0xff]
        %v3041 = vld [vmem:[%s163 + $0xe8] sm:$0xff]
        %v3042 = vld [vmem:[%s163 + $0xf0] sm:$0xff]
        %v3043 = vld [vmem:[%s163 + $0xf8] sm:$0xff]
        %v3044 = vadd.f32 %v3012, %v2886
        %v3045 = vadd.f32 %v3013, %v2889
        %v3046 = vadd.f32 %v3014, %v2894
        %v3047 = vadd.f32 %v3015, %v2897
        %v3048 = vadd.f32 %v3016, %v2902
        %v3049 = vadd.f32 %v3017, %v2905
        %v3050 = vadd.f32 %v3018, %v2910
        %v3051 = vadd.f32 %v3019, %v2913
        %v3052 = vadd.f32 %v3020, %v2918
        %v3053 = vadd.f32 %v3021, %v2921
        %v3054 = vadd.f32 %v3022, %v2926
        %v3055 = vadd.f32 %v3023, %v2929
        %v3056 = vadd.f32 %v3024, %v2934
        %v3057 = vadd.f32 %v3025, %v2937
        %v3058 = vadd.f32 %v3026, %v2942
        %v3059 = vadd.f32 %v3027, %v2945
        %v3060 = vadd.f32 %v3028, %v2950
        %v3061 = vadd.f32 %v3029, %v2953
        %v3062 = vadd.f32 %v3030, %v2958
        %v3063 = vadd.f32 %v3031, %v2961
        %v3064 = vadd.f32 %v3032, %v2966
        %v3065 = vadd.f32 %v3033, %v2969
        %v3066 = vadd.f32 %v3034, %v2974
        %v3067 = vadd.f32 %v3035, %v2977
        %v3068 = vadd.f32 %v3036, %v2982
        %v3069 = vadd.f32 %v3037, %v2985
        %v3070 = vadd.f32 %v3038, %v2990
        %v3071 = vadd.f32 %v3039, %v2993
        %v3072 = vadd.f32 %v3040, %v2998
        %v3073 = vadd.f32 %v3041, %v3001
        %v3074 = vadd.f32 %v3042, %v3006
        %v3075 = vadd.f32 %v3043, %v3009
        %3076 = vst [vmem:[%s163] sm:$0xff] %v3044
        %3077 = vst [vmem:[%s163 + $0x8] sm:$0xff] %v3045
        %3078 = vst [vmem:[%s163 + $0x10] sm:$0xff] %v3046
        %3079 = vst [vmem:[%s163 + $0x18] sm:$0xff] %v3047
        %3080 = vst [vmem:[%s163 + $0x20] sm:$0xff] %v3048
        %3081 = vst [vmem:[%s163 + $0x28] sm:$0xff] %v3049
        %3082 = vst [vmem:[%s163 + $0x30] sm:$0xff] %v3050
        %3083 = vst [vmem:[%s163 + $0x38] sm:$0xff] %v3051
        %3084 = vst [vmem:[%s163 + $0x40] sm:$0xff] %v3052
        %3085 = vst [vmem:[%s163 + $0x48] sm:$0xff] %v3053
        %3086 = vst [vmem:[%s163 + $0x50] sm:$0xff] %v3054
        %3087 = vst [vmem:[%s163 + $0x58] sm:$0xff] %v3055
        %3088 = vst [vmem:[%s163 + $0x60] sm:$0xff] %v3056
        %3089 = vst [vmem:[%s163 + $0x68] sm:$0xff] %v3057
        %3090 = vst [vmem:[%s163 + $0x70] sm:$0xff] %v3058
        %3091 = vst [vmem:[%s163 + $0x78] sm:$0xff] %v3059
        %3092 = vst [vmem:[%s163 + $0x80] sm:$0xff] %v3060
        %3093 = vst [vmem:[%s163 + $0x88] sm:$0xff] %v3061
        %3094 = vst [vmem:[%s163 + $0x90] sm:$0xff] %v3062
        %3095 = vst [vmem:[%s163 + $0x98] sm:$0xff] %v3063
        %3096 = vst [vmem:[%s163 + $0xa0] sm:$0xff] %v3064
        %3097 = vst [vmem:[%s163 + $0xa8] sm:$0xff] %v3065
        %3098 = vst [vmem:[%s163 + $0xb0] sm:$0xff] %v3066
        %3099 = vst [vmem:[%s163 + $0xb8] sm:$0xff] %v3067
        %3100 = vst [vmem:[%s163 + $0xc0] sm:$0xff] %v3068
        %3101 = vst [vmem:[%s163 + $0xc8] sm:$0xff] %v3069
        %3102 = vst [vmem:[%s163 + $0xd0] sm:$0xff] %v3070
        %3103 = vst [vmem:[%s163 + $0xd8] sm:$0xff] %v3071
        %3104 = vst [vmem:[%s163 + $0xe0] sm:$0xff] %v3072
        %3105 = vst [vmem:[%s163 + $0xe8] sm:$0xff] %v3073
        %3106 = vst [vmem:[%s163 + $0xf0] sm:$0xff] %v3074
        %3107 = vst [vmem:[%s163 + $0xf8] sm:$0xff] %v3075
        %v3108 = vld [vmem:[%s1895] sm:$0xe]
        %v3109 = vld [vmem:[%s1895 + $0x4] sm:$0xf]
        %v3110 = vld [vmem:[%s1895 + $0x8] sm:$0x1]
        %v3111 = vld [vmem:[%s1895 + $0xc] sm:$0xe]
        %v3112 = vld [vmem:[%s1895 + $0x10] sm:$0xf]
        %v3113 = vld [vmem:[%s1895 + $0x14] sm:$0x1]
        %v3114 = vld [vmem:[%s1895 + $0x18] sm:$0xe]
        %v3115 = vld [vmem:[%s1895 + $0x1c] sm:$0xf]
        %v3116 = vld [vmem:[%s1895 + $0x20] sm:$0x1]
        %v3117 = vld [vmem:[%s1895 + $0x24] sm:$0xe]
        %v3118 = vld [vmem:[%s1895 + $0x28] sm:$0xf]
        %v3119 = vld [vmem:[%s1895 + $0x2c] sm:$0x1]
        %v3120 = vld [vmem:[%s1895 + $0x30] sm:$0xe]
        %v3121 = vld [vmem:[%s1895 + $0x34] sm:$0xf]
        %v3122 = vld [vmem:[%s1895 + $0x38] sm:$0x1]
        %v3123 = vld [vmem:[%s1895 + $0x3c] sm:$0xe]
        %v3124 = vld [vmem:[%s1895 + $0x40] sm:$0xf]
        %v3125 = vld [vmem:[%s1895 + $0x44] sm:$0x1]
        %v3126 = vld [vmem:[%s1895 + $0x48] sm:$0xe]
        %v3127 = vld [vmem:[%s1895 + $0x4c] sm:$0xf]
        %v3128 = vld [vmem:[%s1895 + $0x50] sm:$0x1]
        %v3129 = vld [vmem:[%s1895 + $0x54] sm:$0xe]
        %v3130 = vld [vmem:[%s1895 + $0x58] sm:$0xf]
        %v3131 = vld [vmem:[%s1895 + $0x5c] sm:$0x1]
        %v3132 = vld [vmem:[%s1895 + $0x60] sm:$0xe]
        %v3133 = vld [vmem:[%s1895 + $0x64] sm:$0xf]
        %v3134 = vld [vmem:[%s1895 + $0x68] sm:$0x1]
        %v3135 = vld [vmem:[%s1895 + $0x6c] sm:$0xe]
        %v3136 = vld [vmem:[%s1895 + $0x70] sm:$0xf]
        %v3137 = vld [vmem:[%s1895 + $0x74] sm:$0x1]
        %v3138 = vld [vmem:[%s1895 + $0x78] sm:$0xe]
        %v3139 = vld [vmem:[%s1895 + $0x7c] sm:$0xf]
        %v3140 = vld [vmem:[%s1895 + $0x80] sm:$0x1]
        %v3141 = vld [vmem:[%s1895 + $0x84] sm:$0xe]
        %v3142 = vld [vmem:[%s1895 + $0x88] sm:$0xf]
        %v3143 = vld [vmem:[%s1895 + $0x8c] sm:$0x1]
        %v3144 = vld [vmem:[%s1895 + $0x90] sm:$0xe]
        %v3145 = vld [vmem:[%s1895 + $0x94] sm:$0xf]
        %v3146 = vld [vmem:[%s1895 + $0x98] sm:$0x1]
        %v3147 = vld [vmem:[%s1895 + $0x9c] sm:$0xe]
        %v3148 = vld [vmem:[%s1895 + $0xa0] sm:$0xf]
        %v3149 = vld [vmem:[%s1895 + $0xa4] sm:$0x1]
        %v3150 = vld [vmem:[%s1895 + $0xa8] sm:$0xe]
        %v3151 = vld [vmem:[%s1895 + $0xac] sm:$0xf]
        %v3152 = vld [vmem:[%s1895 + $0xb0] sm:$0x1]
        %v3153 = vld [vmem:[%s1895 + $0xb4] sm:$0xe]
        %v3154 = vld [vmem:[%s1895 + $0xb8] sm:$0xf]
        %v3155 = vld [vmem:[%s1895 + $0xbc] sm:$0x1]
        %v3204 = vrot.slane %v3108, 5
        %v3205 = vrot.slane %v3204, 4
        %v3206 = vrot.slane %v3109, 5
        %v3207 = vsel %vm1424, %v3205, %v3206
        %v3208 = vrot.slane %v3206, 4
        %v3209 = vrot.slane %v3110, 5
        %v3210 = vsel %vm1424, %v3208, %v3209
        %v3211 = vrot.slane %v3111, 5
        %v3212 = vrot.slane %v3211, 4
        %v3213 = vrot.slane %v3112, 5
        %v3214 = vsel %vm1424, %v3212, %v3213
        %v3215 = vrot.slane %v3213, 4
        %v3216 = vrot.slane %v3113, 5
        %v3217 = vsel %vm1424, %v3215, %v3216
        %v3218 = vrot.slane %v3114, 5
        %v3219 = vrot.slane %v3218, 4
        %v3220 = vrot.slane %v3115, 5
        %v3221 = vsel %vm1424, %v3219, %v3220
        %v3222 = vrot.slane %v3220, 4
        %v3223 = vrot.slane %v3116, 5
        %v3224 = vsel %vm1424, %v3222, %v3223
        %v3225 = vrot.slane %v3117, 5
        %v3226 = vrot.slane %v3225, 4
        %v3227 = vrot.slane %v3118, 5
        %v3228 = vsel %vm1424, %v3226, %v3227
        %v3229 = vrot.slane %v3227, 4
        %v3230 = vrot.slane %v3119, 5
        %v3231 = vsel %vm1424, %v3229, %v3230
        %v3232 = vrot.slane %v3120, 5
        %v3233 = vrot.slane %v3232, 4
        %v3234 = vrot.slane %v3121, 5
        %v3235 = vsel %vm1424, %v3233, %v3234
        %v3236 = vrot.slane %v3234, 4
        %v3237 = vrot.slane %v3122, 5
        %v3238 = vsel %vm1424, %v3236, %v3237
        %v3239 = vrot.slane %v3123, 5
        %v3240 = vrot.slane %v3239, 4
        %v3241 = vrot.slane %v3124, 5
        %v3242 = vsel %vm1424, %v3240, %v3241
        %v3243 = vrot.slane %v3241, 4
        %v3244 = vrot.slane %v3125, 5
        %v3245 = vsel %vm1424, %v3243, %v3244
        %v3246 = vrot.slane %v3126, 5
        %v3247 = vrot.slane %v3246, 4
        %v3248 = vrot.slane %v3127, 5
        %v3249 = vsel %vm1424, %v3247, %v3248
        %v3250 = vrot.slane %v3248, 4
        %v3251 = vrot.slane %v3128, 5
        %v3252 = vsel %vm1424, %v3250, %v3251
        %v3253 = vrot.slane %v3129, 5
        %v3254 = vrot.slane %v3253, 4
        %v3255 = vrot.slane %v3130, 5
        %v3256 = vsel %vm1424, %v3254, %v3255
        %v3257 = vrot.slane %v3255, 4
        %v3258 = vrot.slane %v3131, 5
        %v3259 = vsel %vm1424, %v3257, %v3258
        %v3260 = vrot.slane %v3132, 5
        %v3261 = vrot.slane %v3260, 4
        %v3262 = vrot.slane %v3133, 5
        %v3263 = vsel %vm1424, %v3261, %v3262
        %v3264 = vrot.slane %v3262, 4
        %v3265 = vrot.slane %v3134, 5
        %v3266 = vsel %vm1424, %v3264, %v3265
        %v3267 = vrot.slane %v3135, 5
        %v3268 = vrot.slane %v3267, 4
        %v3269 = vrot.slane %v3136, 5
        %v3270 = vsel %vm1424, %v3268, %v3269
        %v3271 = vrot.slane %v3269, 4
        %v3272 = vrot.slane %v3137, 5
        %v3273 = vsel %vm1424, %v3271, %v3272
        %v3274 = vrot.slane %v3138, 5
        %v3275 = vrot.slane %v3274, 4
        %v3276 = vrot.slane %v3139, 5
        %v3277 = vsel %vm1424, %v3275, %v3276
        %v3278 = vrot.slane %v3276, 4
        %v3279 = vrot.slane %v3140, 5
        %v3280 = vsel %vm1424, %v3278, %v3279
        %v3281 = vrot.slane %v3141, 5
        %v3282 = vrot.slane %v3281, 4
        %v3283 = vrot.slane %v3142, 5
        %v3284 = vsel %vm1424, %v3282, %v3283
        %v3285 = vrot.slane %v3283, 4
        %v3286 = vrot.slane %v3143, 5
        %v3287 = vsel %vm1424, %v3285, %v3286
        %v3288 = vrot.slane %v3144, 5
        %v3289 = vrot.slane %v3288, 4
        %v3290 = vrot.slane %v3145, 5
        %v3291 = vsel %vm1424, %v3289, %v3290
        %v3292 = vrot.slane %v3290, 4
        %v3293 = vrot.slane %v3146, 5
        %v3294 = vsel %vm1424, %v3292, %v3293
        %v3295 = vrot.slane %v3147, 5
        %v3296 = vrot.slane %v3295, 4
        %v3297 = vrot.slane %v3148, 5
        %v3298 = vsel %vm1424, %v3296, %v3297
        %v3299 = vrot.slane %v3297, 4
        %v3300 = vrot.slane %v3149, 5
        %v3301 = vsel %vm1424, %v3299, %v3300
        %v3302 = vrot.slane %v3150, 5
        %v3303 = vrot.slane %v3302, 4
        %v3304 = vrot.slane %v3151, 5
        %v3305 = vsel %vm1424, %v3303, %v3304
        %v3306 = vrot.slane %v3304, 4
        %v3307 = vrot.slane %v3152, 5
        %v3308 = vsel %vm1424, %v3306, %v3307
        %v3309 = vrot.slane %v3153, 5
        %v3310 = vrot.slane %v3309, 4
        %v3311 = vrot.slane %v3154, 5
        %v3312 = vsel %vm1424, %v3310, %v3311
        %v3313 = vrot.slane %v3311, 4
        %v3314 = vrot.slane %v3155, 5
        %v3315 = vsel %vm1424, %v3313, %v3314
        %s3316 = scalar_lea.vmem %s172, 10
        %v3317 = vld [vmem:[%s3316] sm:$0x3]
        %v3318 = vunpack.c.l.b16 %v3207
        %v3319 = vunpack.c.l.b16 %v3210
        %v3320 = vunpack.c.l.b16 %v3214
        %v3321 = vunpack.c.l.b16 %v3217
        %v3322 = vunpack.c.l.b16 %v3221
        %v3323 = vunpack.c.l.b16 %v3224
        %v3324 = vunpack.c.l.b16 %v3228
        %v3325 = vunpack.c.l.b16 %v3231
        %v3326 = vunpack.c.l.b16 %v3235
        %v3327 = vunpack.c.l.b16 %v3238
        %v3328 = vunpack.c.l.b16 %v3242
        %v3329 = vunpack.c.l.b16 %v3245
        %v3330 = vunpack.c.l.b16 %v3249
        %v3331 = vunpack.c.l.b16 %v3252
        %v3332 = vunpack.c.l.b16 %v3256
        %v3333 = vunpack.c.l.b16 %v3259
        %v3334 = vunpack.c.l.b16 %v3263
        %v3335 = vunpack.c.l.b16 %v3266
        %v3336 = vunpack.c.l.b16 %v3270
        %v3337 = vunpack.c.l.b16 %v3273
        %v3338 = vunpack.c.l.b16 %v3277
        %v3339 = vunpack.c.l.b16 %v3280
        %v3340 = vunpack.c.l.b16 %v3284
        %v3341 = vunpack.c.l.b16 %v3287
        %v3342 = vunpack.c.l.b16 %v3291
        %v3343 = vunpack.c.l.b16 %v3294
        %v3344 = vunpack.c.l.b16 %v3298
        %v3345 = vunpack.c.l.b16 %v3301
        %v3346 = vunpack.c.l.b16 %v3305
        %v3347 = vunpack.c.l.b16 %v3308
        %v3348 = vunpack.c.l.b16 %v3312
        %v3349 = vunpack.c.l.b16 %v3315
        %v3350 = vpack.c.b16 %v3319, %v3318
        %v3351 = vpack.c.b16 %v3321, %v3320
        %v3352 = vpack.c.b16 %v3323, %v3322
        %v3353 = vpack.c.b16 %v3325, %v3324
        %v3354 = vpack.c.b16 %v3327, %v3326
        %v3355 = vpack.c.b16 %v3329, %v3328
        %v3356 = vpack.c.b16 %v3331, %v3330
        %v3357 = vpack.c.b16 %v3333, %v3332
        %v3358 = vpack.c.b16 %v3335, %v3334
        %v3359 = vpack.c.b16 %v3337, %v3336
        %v3360 = vpack.c.b16 %v3339, %v3338
        %v3361 = vpack.c.b16 %v3341, %v3340
        %v3362 = vpack.c.b16 %v3343, %v3342
        %v3363 = vpack.c.b16 %v3345, %v3344
        %v3364 = vpack.c.b16 %v3347, %v3346
        %v3365 = vpack.c.b16 %v3349, %v3348
        %v3367 = vsel %vm287, %v3350, 0
        %v3370 = vsel %vm287, %v3351, 0
        %v3373 = vsel %vm287, %v3352, 0
        %v3376 = vsel %vm287, %v3353, 0
        %v3379 = vsel %vm287, %v3354, 0
        %v3382 = vsel %vm287, %v3355, 0
        %v3385 = vsel %vm287, %v3356, 0
        %v3388 = vsel %vm287, %v3357, 0
        %v3391 = vsel %vm287, %v3358, 0
        %v3394 = vsel %vm287, %v3359, 0
        %v3397 = vsel %vm287, %v3360, 0
        %v3400 = vsel %vm287, %v3361, 0
        %v3403 = vsel %vm287, %v3362, 0
        %v3406 = vsel %vm287, %v3363, 0
        %v3409 = vsel %vm287, %v3364, 0
        %v3412 = vsel %vm287, %v3365, 0
        %v3415 = vsel %vm336, %v3317, 0
        %3417 = vmatprep.subr.bf16.mxu0 0
        %3418 = vmatpush1.bf16.msra.mxu0 %v3415
        %3419 = vmatprep.subr.bf16.mxu0 0
        %3420 = vmatpush1.bf16.msra.mxu0 0
        %3421 = vmatprep.subr.bf16.mxu0 0
        %3422 = vmatpush1.bf16.msra.mxu0 0
        %3423 = vmatprep.subr.bf16.mxu0 0
        %3424 = vmatpush1.bf16.msra.mxu0 0
        %3425 = vmatprep.subr.bf16.mxu0 0
        %3426 = vmatpush1.bf16.msra.mxu0 0
        %3427 = vmatprep.subr.bf16.mxu0 0
        %3428 = vmatpush1.bf16.msra.mxu0 0
        %3429 = vmatprep.subr.bf16.mxu0 0
        %3430 = vmatpush1.bf16.msra.mxu0 0
        %3431 = vmatprep.subr.bf16.mxu0 0
        %3432 = vmatpush1.bf16.msra.mxu0 0
        %3433 = vmatprep.subr.bf16.mxu0 0
        %3434 = vmatpush1.bf16.msra.mxu0 0
        %3435 = vmatprep.subr.bf16.mxu0 0
        %3436 = vmatpush1.bf16.msra.mxu0 0
        %3437 = vmatprep.subr.bf16.mxu0 0
        %3438 = vmatpush1.bf16.msra.mxu0 0
        %3439 = vmatprep.subr.bf16.mxu0 0
        %3440 = vmatpush1.bf16.msra.mxu0 0
        %3441 = vmatprep.subr.bf16.mxu0 0
        %3442 = vmatpush1.bf16.msra.mxu0 0
        %3443 = vmatprep.subr.bf16.mxu0 0
        %3444 = vmatpush1.bf16.msra.mxu0 0
        %3445 = vmatprep.subr.bf16.mxu0 0
        %3446 = vmatpush1.bf16.msra.mxu0 0
        %3447 = vmatprep.subr.bf16.mxu0 0
        %3448 = vmatpush1.bf16.msra.mxu0 0
        %3449 = vmatprep.mubr.bf16.mxu0 0
        %3450 = vmatmul.mubr.bf16.gmra.mrb[0].mxu0 %v3367
        %v3451 = vpop.f32.mrb[0].mxu0
        %v3452 = vadd.f32 0.0, %v3451
        %v3453 = vpop.f32.mrb[0].mxu0
        %v3454 = vpop.f32.mrb[0].mxu0
        %v3455 = vadd.f32 0.0, %v3454
        %v3456 = vpop.f32.mrb[0].mxu0
        %3457 = vmatprep.mubr.bf16.mxu0 0
        %3458 = vmatmul.mubr.bf16.gmra.mrb[0].mxu0 %v3370
        %v3459 = vpop.f32.mrb[0].mxu0
        %v3460 = vadd.f32 0.0, %v3459
        %v3461 = vpop.f32.mrb[0].mxu0
        %v3462 = vpop.f32.mrb[0].mxu0
        %v3463 = vadd.f32 0.0, %v3462
        %v3464 = vpop.f32.mrb[0].mxu0
        %3465 = vmatprep.mubr.bf16.mxu0 0
        %3466 = vmatmul.mubr.bf16.gmra.mrb[0].mxu0 %v3373
        %v3467 = vpop.f32.mrb[0].mxu0
        %v3468 = vadd.f32 0.0, %v3467
        %v3469 = vpop.f32.mrb[0].mxu0
        %v3470 = vpop.f32.mrb[0].mxu0
        %v3471 = vadd.f32 0.0, %v3470
        %v3472 = vpop.f32.mrb[0].mxu0
        %3473 = vmatprep.mubr.bf16.mxu0 0
        %3474 = vmatmul.mubr.bf16.gmra.mrb[0].mxu0 %v3376
        %v3475 = vpop.f32.mrb[0].mxu0
        %v3476 = vadd.f32 0.0, %v3475
        %v3477 = vpop.f32.mrb[0].mxu0
        %v3478 = vpop.f32.mrb[0].mxu0
        %v3479 = vadd.f32 0.0, %v3478
        %v3480 = vpop.f32.mrb[0].mxu0
        %3481 = vmatprep.mubr.bf16.mxu0 0
        %3482 = vmatmul.mubr.bf16.gmra.mrb[0].mxu0 %v3379
        %v3483 = vpop.f32.mrb[0].mxu0
        %v3484 = vadd.f32 0.0, %v3483
        %v3485 = vpop.f32.mrb[0].mxu0
        %v3486 = vpop.f32.mrb[0].mxu0
        %v3487 = vadd.f32 0.0, %v3486
        %v3488 = vpop.f32.mrb[0].mxu0
        %3489 = vmatprep.mubr.bf16.mxu0 0
        %3490 = vmatmul.mubr.bf16.gmra.mrb[0].mxu0 %v3382
        %v3491 = vpop.f32.mrb[0].mxu0
        %v3492 = vadd.f32 0.0, %v3491
        %v3493 = vpop.f32.mrb[0].mxu0
        %v3494 = vpop.f32.mrb[0].mxu0
        %v3495 = vadd.f32 0.0, %v3494
        %v3496 = vpop.f32.mrb[0].mxu0
        %3497 = vmatprep.mubr.bf16.mxu0 0
        %3498 = vmatmul.mubr.bf16.gmra.mrb[0].mxu0 %v3385
        %v3499 = vpop.f32.mrb[0].mxu0
        %v3500 = vadd.f32 0.0, %v3499
        %v3501 = vpop.f32.mrb[0].mxu0
        %v3502 = vpop.f32.mrb[0].mxu0
        %v3503 = vadd.f32 0.0, %v3502
        %v3504 = vpop.f32.mrb[0].mxu0
        %3505 = vmatprep.mubr.bf16.mxu0 0
        %3506 = vmatmul.mubr.bf16.gmra.mrb[0].mxu0 %v3388
        %v3507 = vpop.f32.mrb[0].mxu0
        %v3508 = vadd.f32 0.0, %v3507
        %v3509 = vpop.f32.mrb[0].mxu0
        %v3510 = vpop.f32.mrb[0].mxu0
        %v3511 = vadd.f32 0.0, %v3510
        %v3512 = vpop.f32.mrb[0].mxu0
        %3513 = vmatprep.mubr.bf16.mxu0 0
        %3514 = vmatmul.mubr.bf16.gmra.mrb[0].mxu0 %v3391
        %v3515 = vpop.f32.mrb[0].mxu0
        %v3516 = vadd.f32 0.0, %v3515
        %v3517 = vpop.f32.mrb[0].mxu0
        %v3518 = vpop.f32.mrb[0].mxu0
        %v3519 = vadd.f32 0.0, %v3518
        %v3520 = vpop.f32.mrb[0].mxu0
        %3521 = vmatprep.mubr.bf16.mxu0 0
        %3522 = vmatmul.mubr.bf16.gmra.mrb[0].mxu0 %v3394
        %v3523 = vpop.f32.mrb[0].mxu0
        %v3524 = vadd.f32 0.0, %v3523
        %v3525 = vpop.f32.mrb[0].mxu0
        %v3526 = vpop.f32.mrb[0].mxu0
        %v3527 = vadd.f32 0.0, %v3526
        %v3528 = vpop.f32.mrb[0].mxu0
        %3529 = vmatprep.mubr.bf16.mxu0 0
        %3530 = vmatmul.mubr.bf16.gmra.mrb[0].mxu0 %v3397
        %v3531 = vpop.f32.mrb[0].mxu0
        %v3532 = vadd.f32 0.0, %v3531
        %v3533 = vpop.f32.mrb[0].mxu0
        %v3534 = vpop.f32.mrb[0].mxu0
        %v3535 = vadd.f32 0.0, %v3534
        %v3536 = vpop.f32.mrb[0].mxu0
        %3537 = vmatprep.mubr.bf16.mxu0 0
        %3538 = vmatmul.mubr.bf16.gmra.mrb[0].mxu0 %v3400
        %v3539 = vpop.f32.mrb[0].mxu0
        %v3540 = vadd.f32 0.0, %v3539
        %v3541 = vpop.f32.mrb[0].mxu0
        %v3542 = vpop.f32.mrb[0].mxu0
        %v3543 = vadd.f32 0.0, %v3542
        %v3544 = vpop.f32.mrb[0].mxu0
        %3545 = vmatprep.mubr.bf16.mxu0 0
        %3546 = vmatmul.mubr.bf16.gmra.mrb[0].mxu0 %v3403
        %v3547 = vpop.f32.mrb[0].mxu0
        %v3548 = vadd.f32 0.0, %v3547
        %v3549 = vpop.f32.mrb[0].mxu0
        %v3550 = vpop.f32.mrb[0].mxu0
        %v3551 = vadd.f32 0.0, %v3550
        %v3552 = vpop.f32.mrb[0].mxu0
        %3553 = vmatprep.mubr.bf16.mxu0 0
        %3554 = vmatmul.mubr.bf16.gmra.mrb[0].mxu0 %v3406
        %v3555 = vpop.f32.mrb[0].mxu0
        %v3556 = vadd.f32 0.0, %v3555
        %v3557 = vpop.f32.mrb[0].mxu0
        %v3558 = vpop.f32.mrb[0].mxu0
        %v3559 = vadd.f32 0.0, %v3558
        %v3560 = vpop.f32.mrb[0].mxu0
        %3561 = vmatprep.mubr.bf16.mxu0 0
        %3562 = vmatmul.mubr.bf16.gmra.mrb[0].mxu0 %v3409
        %v3563 = vpop.f32.mrb[0].mxu0
        %v3564 = vadd.f32 0.0, %v3563
        %v3565 = vpop.f32.mrb[0].mxu0
        %v3566 = vpop.f32.mrb[0].mxu0
        %v3567 = vadd.f32 0.0, %v3566
        %v3568 = vpop.f32.mrb[0].mxu0
        %3569 = vmatprep.mubr.bf16.mxu0 0
        %3570 = vmatmul.mubr.bf16.gmra.mrb[0].mxu0 %v3412
        %v3571 = vpop.f32.mrb[0].mxu0
        %v3572 = vadd.f32 0.0, %v3571
        %v3573 = vpop.f32.mrb[0].mxu0
        %v3574 = vpop.f32.mrb[0].mxu0
        %v3575 = vadd.f32 0.0, %v3574
        %v3576 = vpop.f32.mrb[0].mxu0
        %3577 = vdwg.mxu0
        %v3578 = vld [vmem:[%s163] sm:$0xff]
        %v3579 = vld [vmem:[%s163 + $0x8] sm:$0xff]
        %v3580 = vld [vmem:[%s163 + $0x10] sm:$0xff]
        %v3581 = vld [vmem:[%s163 + $0x18] sm:$0xff]
        %v3582 = vld [vmem:[%s163 + $0x20] sm:$0xff]
        %v3583 = vld [vmem:[%s163 + $0x28] sm:$0xff]
        %v3584 = vld [vmem:[%s163 + $0x30] sm:$0xff]
        %v3585 = vld [vmem:[%s163 + $0x38] sm:$0xff]
        %v3586 = vld [vmem:[%s163 + $0x40] sm:$0xff]
        %v3587 = vld [vmem:[%s163 + $0x48] sm:$0xff]
        %v3588 = vld [vmem:[%s163 + $0x50] sm:$0xff]
        %v3589 = vld [vmem:[%s163 + $0x58] sm:$0xff]
        %v3590 = vld [vmem:[%s163 + $0x60] sm:$0xff]
        %v3591 = vld [vmem:[%s163 + $0x68] sm:$0xff]
        %v3592 = vld [vmem:[%s163 + $0x70] sm:$0xff]
        %v3593 = vld [vmem:[%s163 + $0x78] sm:$0xff]
        %v3594 = vld [vmem:[%s163 + $0x80] sm:$0xff]
        %v3595 = vld [vmem:[%s163 + $0x88] sm:$0xff]
        %v3596 = vld [vmem:[%s163 + $0x90] sm:$0xff]
        %v3597 = vld [vmem:[%s163 + $0x98] sm:$0xff]
        %v3598 = vld [vmem:[%s163 + $0xa0] sm:$0xff]
        %v3599 = vld [vmem:[%s163 + $0xa8] sm:$0xff]
        %v3600 = vld [vmem:[%s163 + $0xb0] sm:$0xff]
        %v3601 = vld [vmem:[%s163 + $0xb8] sm:$0xff]
        %v3602 = vld [vmem:[%s163 + $0xc0] sm:$0xff]
        %v3603 = vld [vmem:[%s163 + $0xc8] sm:$0xff]
        %v3604 = vld [vmem:[%s163 + $0xd0] sm:$0xff]
        %v3605 = vld [vmem:[%s163 + $0xd8] sm:$0xff]
        %v3606 = vld [vmem:[%s163 + $0xe0] sm:$0xff]
        %v3607 = vld [vmem:[%s163 + $0xe8] sm:$0xff]
        %v3608 = vld [vmem:[%s163 + $0xf0] sm:$0xff]
        %v3609 = vld [vmem:[%s163 + $0xf8] sm:$0xff]
        %v3610 = vadd.f32 %v3578, %v3452
        %v3611 = vadd.f32 %v3579, %v3455
        %v3612 = vadd.f32 %v3580, %v3460
        %v3613 = vadd.f32 %v3581, %v3463
        %v3614 = vadd.f32 %v3582, %v3468
        %v3615 = vadd.f32 %v3583, %v3471
        %v3616 = vadd.f32 %v3584, %v3476
        %v3617 = vadd.f32 %v3585, %v3479
        %v3618 = vadd.f32 %v3586, %v3484
        %v3619 = vadd.f32 %v3587, %v3487
        %v3620 = vadd.f32 %v3588, %v3492
        %v3621 = vadd.f32 %v3589, %v3495
        %v3622 = vadd.f32 %v3590, %v3500
        %v3623 = vadd.f32 %v3591, %v3503
        %v3624 = vadd.f32 %v3592, %v3508
        %v3625 = vadd.f32 %v3593, %v3511
        %v3626 = vadd.f32 %v3594, %v3516
        %v3627 = vadd.f32 %v3595, %v3519
        %v3628 = vadd.f32 %v3596, %v3524
        %v3629 = vadd.f32 %v3597, %v3527
        %v3630 = vadd.f32 %v3598, %v3532
        %v3631 = vadd.f32 %v3599, %v3535
        %v3632 = vadd.f32 %v3600, %v3540
        %v3633 = vadd.f32 %v3601, %v3543
        %v3634 = vadd.f32 %v3602, %v3548
        %v3635 = vadd.f32 %v3603, %v3551
        %v3636 = vadd.f32 %v3604, %v3556
        %v3637 = vadd.f32 %v3605, %v3559
        %v3638 = vadd.f32 %v3606, %v3564
        %v3639 = vadd.f32 %v3607, %v3567
        %v3640 = vadd.f32 %v3608, %v3572
        %v3641 = vadd.f32 %v3609, %v3575
        %3642 = vst [vmem:[%s163] sm:$0xff] %v3610
        %3643 = vst [vmem:[%s163 + $0x8] sm:$0xff] %v3611
        %3644 = vst [vmem:[%s163 + $0x10] sm:$0xff] %v3612
        %3645 = vst [vmem:[%s163 + $0x18] sm:$0xff] %v3613
        %3646 = vst [vmem:[%s163 + $0x20] sm:$0xff] %v3614
        %3647 = vst [vmem:[%s163 + $0x28] sm:$0xff] %v3615
        %3648 = vst [vmem:[%s163 + $0x30] sm:$0xff] %v3616
        %3649 = vst [vmem:[%s163 + $0x38] sm:$0xff] %v3617
        %3650 = vst [vmem:[%s163 + $0x40] sm:$0xff] %v3618
        %3651 = vst [vmem:[%s163 + $0x48] sm:$0xff] %v3619
        %3652 = vst [vmem:[%s163 + $0x50] sm:$0xff] %v3620
        %3653 = vst [vmem:[%s163 + $0x58] sm:$0xff] %v3621
        %3654 = vst [vmem:[%s163 + $0x60] sm:$0xff] %v3622
        %3655 = vst [vmem:[%s163 + $0x68] sm:$0xff] %v3623
        %3656 = vst [vmem:[%s163 + $0x70] sm:$0xff] %v3624
        %3657 = vst [vmem:[%s163 + $0x78] sm:$0xff] %v3625
        %3658 = vst [vmem:[%s163 + $0x80] sm:$0xff] %v3626
        %3659 = vst [vmem:[%s163 + $0x88] sm:$0xff] %v3627
        %3660 = vst [vmem:[%s163 + $0x90] sm:$0xff] %v3628
        %3661 = vst [vmem:[%s163 + $0x98] sm:$0xff] %v3629
        %3662 = vst [vmem:[%s163 + $0xa0] sm:$0xff] %v3630
        %3663 = vst [vmem:[%s163 + $0xa8] sm:$0xff] %v3631
        %3664 = vst [vmem:[%s163 + $0xb0] sm:$0xff] %v3632
        %3665 = vst [vmem:[%s163 + $0xb8] sm:$0xff] %v3633
        %3666 = vst [vmem:[%s163 + $0xc0] sm:$0xff] %v3634
        %3667 = vst [vmem:[%s163 + $0xc8] sm:$0xff] %v3635
        %3668 = vst [vmem:[%s163 + $0xd0] sm:$0xff] %v3636
        %3669 = vst [vmem:[%s163 + $0xd8] sm:$0xff] %v3637
        %3670 = vst [vmem:[%s163 + $0xe0] sm:$0xff] %v3638
        %3671 = vst [vmem:[%s163 + $0xe8] sm:$0xff] %v3639
        %3672 = vst [vmem:[%s163 + $0xf0] sm:$0xff] %v3640
        %3673 = vst [vmem:[%s163 + $0xf8] sm:$0xff] %v3641
        %s3674 = scalar_lea.vmem %s168, 24
        %v3675 = vld [vmem:[%s3674] sm:$0xf]
        %v3676 = vld [vmem:[%s3674 + $0x4] sm:$0xf]
        %v3677 = vld [vmem:[%s3674 + $0xc] sm:$0xf]
        %v3678 = vld [vmem:[%s3674 + $0x10] sm:$0xf]
        %v3679 = vld [vmem:[%s3674 + $0x18] sm:$0xf]
        %v3680 = vld [vmem:[%s3674 + $0x1c] sm:$0xf]
        %v3681 = vld [vmem:[%s3674 + $0x24] sm:$0xf]
        %v3682 = vld [vmem:[%s3674 + $0x28] sm:$0xf]
        %v3683 = vld [vmem:[%s3674 + $0x30] sm:$0xf]
        %v3684 = vld [vmem:[%s3674 + $0x34] sm:$0xf]
        %v3685 = vld [vmem:[%s3674 + $0x3c] sm:$0xf]
        %v3686 = vld [vmem:[%s3674 + $0x40] sm:$0xf]
        %v3687 = vld [vmem:[%s3674 + $0x48] sm:$0xf]
        %v3688 = vld [vmem:[%s3674 + $0x4c] sm:$0xf]
        %v3689 = vld [vmem:[%s3674 + $0x54] sm:$0xf]
        %v3690 = vld [vmem:[%s3674 + $0x58] sm:$0xf]
        %v3691 = vld [vmem:[%s3674 + $0x60] sm:$0xf]
        %v3692 = vld [vmem:[%s3674 + $0x64] sm:$0xf]
        %v3693 = vld [vmem:[%s3674 + $0x6c] sm:$0xf]
        %v3694 = vld [vmem:[%s3674 + $0x70] sm:$0xf]
        %v3695 = vld [vmem:[%s3674 + $0x78] sm:$0xf]
        %v3696 = vld [vmem:[%s3674 + $0x7c] sm:$0xf]
        %v3697 = vld [vmem:[%s3674 + $0x84] sm:$0xf]
        %v3698 = vld [vmem:[%s3674 + $0x88] sm:$0xf]
        %v3699 = vld [vmem:[%s3674 + $0x90] sm:$0xf]
        %v3700 = vld [vmem:[%s3674 + $0x94] sm:$0xf]
        %v3701 = vld [vmem:[%s3674 + $0x9c] sm:$0xf]
        %v3702 = vld [vmem:[%s3674 + $0xa0] sm:$0xf]
        %v3703 = vld [vmem:[%s3674 + $0xa8] sm:$0xf]
        %v3704 = vld [vmem:[%s3674 + $0xac] sm:$0xf]
        %v3705 = vld [vmem:[%s3674 + $0xb4] sm:$0xf]
        %v3706 = vld [vmem:[%s3674 + $0xb8] sm:$0xf]
        %s3707 = scalar_lea.vmem %s172, 12
        %v3708 = vld [vmem:[%s3707] sm:$0x3]
        %v3741 = vunpack.c.l.b16 %v3675
        %v3742 = vunpack.c.l.b16 %v3676
        %v3743 = vunpack.c.l.b16 %v3677
        %v3744 = vunpack.c.l.b16 %v3678
        %v3745 = vunpack.c.l.b16 %v3679
        %v3746 = vunpack.c.l.b16 %v3680
        %v3747 = vunpack.c.l.b16 %v3681
        %v3748 = vunpack.c.l.b16 %v3682
        %v3749 = vunpack.c.l.b16 %v3683
        %v3750 = vunpack.c.l.b16 %v3684
        %v3751 = vunpack.c.l.b16 %v3685
        %v3752 = vunpack.c.l.b16 %v3686
        %v3753 = vunpack.c.l.b16 %v3687
        %v3754 = vunpack.c.l.b16 %v3688
        %v3755 = vunpack.c.l.b16 %v3689
        %v3756 = vunpack.c.l.b16 %v3690
        %v3757 = vunpack.c.l.b16 %v3691
        %v3758 = vunpack.c.l.b16 %v3692
        %v3759 = vunpack.c.l.b16 %v3693
        %v3760 = vunpack.c.l.b16 %v3694
        %v3761 = vunpack.c.l.b16 %v3695
        %v3762 = vunpack.c.l.b16 %v3696
        %v3763 = vunpack.c.l.b16 %v3697
        %v3764 = vunpack.c.l.b16 %v3698
        %v3765 = vunpack.c.l.b16 %v3699
        %v3766 = vunpack.c.l.b16 %v3700
        %v3767 = vunpack.c.l.b16 %v3701
        %v3768 = vunpack.c.l.b16 %v3702
        %v3769 = vunpack.c.l.b16 %v3703
        %v3770 = vunpack.c.l.b16 %v3704
        %v3771 = vunpack.c.l.b16 %v3705
        %v3772 = vunpack.c.l.b16 %v3706
        %v3773 = vpack.c.b16 %v3742, %v3741
        %v3774 = vpack.c.b16 %v3744, %v3743
        %v3775 = vpack.c.b16 %v3746, %v3745
        %v3776 = vpack.c.b16 %v3748, %v3747
        %v3777 = vpack.c.b16 %v3750, %v3749
        %v3778 = vpack.c.b16 %v3752, %v3751
        %v3779 = vpack.c.b16 %v3754, %v3753
        %v3780 = vpack.c.b16 %v3756, %v3755
        %v3781 = vpack.c.b16 %v3758, %v3757
        %v3782 = vpack.c.b16 %v3760, %v3759
        %v3783 = vpack.c.b16 %v3762, %v3761
        %v3784 = vpack.c.b16 %v3764, %v3763
        %v3785 = vpack.c.b16 %v3766, %v3765
        %v3786 = vpack.c.b16 %v3768, %v3767
        %v3787 = vpack.c.b16 %v3770, %v3769
        %v3788 = vpack.c.b16 %v3772, %v3771
        %v3790 = vsel %vm287, %v3773, 0
        %v3793 = vsel %vm287, %v3774, 0
        %v3796 = vsel %vm287, %v3775, 0
        %v3799 = vsel %vm287, %v3776, 0
        %v3802 = vsel %vm287, %v3777, 0
        %v3805 = vsel %vm287, %v3778, 0
        %v3808 = vsel %vm287, %v3779, 0
        %v3811 = vsel %vm287, %v3780, 0
        %v3814 = vsel %vm287, %v3781, 0
        %v3817 = vsel %vm287, %v3782, 0
        %v3820 = vsel %vm287, %v3783, 0
        %v3823 = vsel %vm287, %v3784, 0
        %v3826 = vsel %vm287, %v3785, 0
        %v3829 = vsel %vm287, %v3786, 0
        %v3832 = vsel %vm287, %v3787, 0
        %v3835 = vsel %vm287, %v3788, 0
        %v3838 = vsel %vm336, %v3708, 0
        %3840 = vmatprep.subr.bf16.mxu0 0
        %3841 = vmatpush1.bf16.msra.mxu0 %v3838
        %3842 = vmatprep.subr.bf16.mxu0 0
        %3843 = vmatpush1.bf16.msra.mxu0 0
        %3844 = vmatprep.subr.bf16.mxu0 0
        %3845 = vmatpush1.bf16.msra.mxu0 0
        %3846 = vmatprep.subr.bf16.mxu0 0
        %3847 = vmatpush1.bf16.msra.mxu0 0
        %3848 = vmatprep.subr.bf16.mxu0 0
        %3849 = vmatpush1.bf16.msra.mxu0 0
        %3850 = vmatprep.subr.bf16.mxu0 0
        %3851 = vmatpush1.bf16.msra.mxu0 0
        %3852 = vmatprep.subr.bf16.mxu0 0
        %3853 = vmatpush1.bf16.msra.mxu0 0
        %3854 = vmatprep.subr.bf16.mxu0 0
        %3855 = vmatpush1.bf16.msra.mxu0 0
        %3856 = vmatprep.subr.bf16.mxu0 0
        %3857 = vmatpush1.bf16.msra.mxu0 0
        %3858 = vmatprep.subr.bf16.mxu0 0
        %3859 = vmatpush1.bf16.msra.mxu0 0
        %3860 = vmatprep.subr.bf16.mxu0 0
        %3861 = vmatpush1.bf16.msra.mxu0 0
        %3862 = vmatprep.subr.bf16.mxu0 0
        %3863 = vmatpush1.bf16.msra.mxu0 0
        %3864 = vmatprep.subr.bf16.mxu0 0
        %3865 = vmatpush1.bf16.msra.mxu0 0
        %3866 = vmatprep.subr.bf16.mxu0 0
        %3867 = vmatpush1.bf16.msra.mxu0 0
        %3868 = vmatprep.subr.bf16.mxu0 0
        %3869 = vmatpush1.bf16.msra.mxu0 0
        %3870 = vmatprep.subr.bf16.mxu0 0
        %3871 = vmatpush1.bf16.msra.mxu0 0
        %3872 = vmatprep.mubr.bf16.mxu0 0
        %3873 = vmatmul.mubr.bf16.gmra.mrb[0].mxu0 %v3790
        %v3874 = vpop.f32.mrb[0].mxu0
        %v3875 = vadd.f32 0.0, %v3874
        %v3876 = vpop.f32.mrb[0].mxu0
        %v3877 = vpop.f32.mrb[0].mxu0
        %v3878 = vadd.f32 0.0, %v3877
        %v3879 = vpop.f32.mrb[0].mxu0
        %3880 = vmatprep.mubr.bf16.mxu0 0
        %3881 = vmatmul.mubr.bf16.gmra.mrb[0].mxu0 %v3793
        %v3882 = vpop.f32.mrb[0].mxu0
        %v3883 = vadd.f32 0.0, %v3882
        %v3884 = vpop.f32.mrb[0].mxu0
        %v3885 = vpop.f32.mrb[0].mxu0
        %v3886 = vadd.f32 0.0, %v3885
        %v3887 = vpop.f32.mrb[0].mxu0
        %3888 = vmatprep.mubr.bf16.mxu0 0
        %3889 = vmatmul.mubr.bf16.gmra.mrb[0].mxu0 %v3796
        %v3890 = vpop.f32.mrb[0].mxu0
        %v3891 = vadd.f32 0.0, %v3890
        %v3892 = vpop.f32.mrb[0].mxu0
        %v3893 = vpop.f32.mrb[0].mxu0
        %v3894 = vadd.f32 0.0, %v3893
        %v3895 = vpop.f32.mrb[0].mxu0
        %3896 = vmatprep.mubr.bf16.mxu0 0
        %3897 = vmatmul.mubr.bf16.gmra.mrb[0].mxu0 %v3799
        %v3898 = vpop.f32.mrb[0].mxu0
        %v3899 = vadd.f32 0.0, %v3898
        %v3900 = vpop.f32.mrb[0].mxu0
        %v3901 = vpop.f32.mrb[0].mxu0
        %v3902 = vadd.f32 0.0, %v3901
        %v3903 = vpop.f32.mrb[0].mxu0
        %3904 = vmatprep.mubr.bf16.mxu0 0
        %3905 = vmatmul.mubr.bf16.gmra.mrb[0].mxu0 %v3802
        %v3906 = vpop.f32.mrb[0].mxu0
        %v3907 = vadd.f32 0.0, %v3906
        %v3908 = vpop.f32.mrb[0].mxu0
        %v3909 = vpop.f32.mrb[0].mxu0
        %v3910 = vadd.f32 0.0, %v3909
        %v3911 = vpop.f32.mrb[0].mxu0
        %3912 = vmatprep.mubr.bf16.mxu0 0
        %3913 = vmatmul.mubr.bf16.gmra.mrb[0].mxu0 %v3805
        %v3914 = vpop.f32.mrb[0].mxu0
        %v3915 = vadd.f32 0.0, %v3914
        %v3916 = vpop.f32.mrb[0].mxu0
        %v3917 = vpop.f32.mrb[0].mxu0
        %v3918 = vadd.f32 0.0, %v3917
        %v3919 = vpop.f32.mrb[0].mxu0
        %3920 = vmatprep.mubr.bf16.mxu0 0
        %3921 = vmatmul.mubr.bf16.gmra.mrb[0].mxu0 %v3808
        %v3922 = vpop.f32.mrb[0].mxu0
        %v3923 = vadd.f32 0.0, %v3922
        %v3924 = vpop.f32.mrb[0].mxu0
        %v3925 = vpop.f32.mrb[0].mxu0
        %v3926 = vadd.f32 0.0, %v3925
        %v3927 = vpop.f32.mrb[0].mxu0
        %3928 = vmatprep.mubr.bf16.mxu0 0
        %3929 = vmatmul.mubr.bf16.gmra.mrb[0].mxu0 %v3811
        %v3930 = vpop.f32.mrb[0].mxu0
        %v3931 = vadd.f32 0.0, %v3930
        %v3932 = vpop.f32.mrb[0].mxu0
        %v3933 = vpop.f32.mrb[0].mxu0
        %v3934 = vadd.f32 0.0, %v3933
        %v3935 = vpop.f32.mrb[0].mxu0
        %3936 = vmatprep.mubr.bf16.mxu0 0
        %3937 = vmatmul.mubr.bf16.gmra.mrb[0].mxu0 %v3814
        %v3938 = vpop.f32.mrb[0].mxu0
        %v3939 = vadd.f32 0.0, %v3938
        %v3940 = vpop.f32.mrb[0].mxu0
        %v3941 = vpop.f32.mrb[0].mxu0
        %v3942 = vadd.f32 0.0, %v3941
        %v3943 = vpop.f32.mrb[0].mxu0
        %3944 = vmatprep.mubr.bf16.mxu0 0
        %3945 = vmatmul.mubr.bf16.gmra.mrb[0].mxu0 %v3817
        %v3946 = vpop.f32.mrb[0].mxu0
        %v3947 = vadd.f32 0.0, %v3946
        %v3948 = vpop.f32.mrb[0].mxu0
        %v3949 = vpop.f32.mrb[0].mxu0
        %v3950 = vadd.f32 0.0, %v3949
        %v3951 = vpop.f32.mrb[0].mxu0
        %3952 = vmatprep.mubr.bf16.mxu0 0
        %3953 = vmatmul.mubr.bf16.gmra.mrb[0].mxu0 %v3820
        %v3954 = vpop.f32.mrb[0].mxu0
        %v3955 = vadd.f32 0.0, %v3954
        %v3956 = vpop.f32.mrb[0].mxu0
        %v3957 = vpop.f32.mrb[0].mxu0
        %v3958 = vadd.f32 0.0, %v3957
        %v3959 = vpop.f32.mrb[0].mxu0
        %3960 = vmatprep.mubr.bf16.mxu0 0
        %3961 = vmatmul.mubr.bf16.gmra.mrb[0].mxu0 %v3823
        %v3962 = vpop.f32.mrb[0].mxu0
        %v3963 = vadd.f32 0.0, %v3962
        %v3964 = vpop.f32.mrb[0].mxu0
        %v3965 = vpop.f32.mrb[0].mxu0
        %v3966 = vadd.f32 0.0, %v3965
        %v3967 = vpop.f32.mrb[0].mxu0
        %3968 = vmatprep.mubr.bf16.mxu0 0
        %3969 = vmatmul.mubr.bf16.gmra.mrb[0].mxu0 %v3826
        %v3970 = vpop.f32.mrb[0].mxu0
        %v3971 = vadd.f32 0.0, %v3970
        %v3972 = vpop.f32.mrb[0].mxu0
        %v3973 = vpop.f32.mrb[0].mxu0
        %v3974 = vadd.f32 0.0, %v3973
        %v3975 = vpop.f32.mrb[0].mxu0
        %3976 = vmatprep.mubr.bf16.mxu0 0
        %3977 = vmatmul.mubr.bf16.gmra.mrb[0].mxu0 %v3829
        %v3978 = vpop.f32.mrb[0].mxu0
        %v3979 = vadd.f32 0.0, %v3978
        %v3980 = vpop.f32.mrb[0].mxu0
        %v3981 = vpop.f32.mrb[0].mxu0
        %v3982 = vadd.f32 0.0, %v3981
        %v3983 = vpop.f32.mrb[0].mxu0
        %3984 = vmatprep.mubr.bf16.mxu0 0
        %3985 = vmatmul.mubr.bf16.gmra.mrb[0].mxu0 %v3832
        %v3986 = vpop.f32.mrb[0].mxu0
        %v3987 = vadd.f32 0.0, %v3986
        %v3988 = vpop.f32.mrb[0].mxu0
        %v3989 = vpop.f32.mrb[0].mxu0
        %v3990 = vadd.f32 0.0, %v3989
        %v3991 = vpop.f32.mrb[0].mxu0
        %3992 = vmatprep.mubr.bf16.mxu0 0
        %3993 = vmatmul.mubr.bf16.gmra.mrb[0].mxu0 %v3835
        %v3994 = vpop.f32.mrb[0].mxu0
        %v3995 = vadd.f32 0.0, %v3994
        %v3996 = vpop.f32.mrb[0].mxu0
        %v3997 = vpop.f32.mrb[0].mxu0
        %v3998 = vadd.f32 0.0, %v3997
        %v3999 = vpop.f32.mrb[0].mxu0
        %4000 = vdwg.mxu0
        %v4001 = vld [vmem:[%s163] sm:$0xff]
        %v4002 = vld [vmem:[%s163 + $0x8] sm:$0xff]
        %v4003 = vld [vmem:[%s163 + $0x10] sm:$0xff]
        %v4004 = vld [vmem:[%s163 + $0x18] sm:$0xff]
        %v4005 = vld [vmem:[%s163 + $0x20] sm:$0xff]
        %v4006 = vld [vmem:[%s163 + $0x28] sm:$0xff]
        %v4007 = vld [vmem:[%s163 + $0x30] sm:$0xff]
        %v4008 = vld [vmem:[%s163 + $0x38] sm:$0xff]
        %v4009 = vld [vmem:[%s163 + $0x40] sm:$0xff]
        %v4010 = vld [vmem:[%s163 + $0x48] sm:$0xff]
        %v4011 = vld [vmem:[%s163 + $0x50] sm:$0xff]
        %v4012 = vld [vmem:[%s163 + $0x58] sm:$0xff]
        %v4013 = vld [vmem:[%s163 + $0x60] sm:$0xff]
        %v4014 = vld [vmem:[%s163 + $0x68] sm:$0xff]
        %v4015 = vld [vmem:[%s163 + $0x70] sm:$0xff]
        %v4016 = vld [vmem:[%s163 + $0x78] sm:$0xff]
        %v4017 = vld [vmem:[%s163 + $0x80] sm:$0xff]
        %v4018 = vld [vmem:[%s163 + $0x88] sm:$0xff]
        %v4019 = vld [vmem:[%s163 + $0x90] sm:$0xff]
        %v4020 = vld [vmem:[%s163 + $0x98] sm:$0xff]
        %v4021 = vld [vmem:[%s163 + $0xa0] sm:$0xff]
        %v4022 = vld [vmem:[%s163 + $0xa8] sm:$0xff]
        %v4023 = vld [vmem:[%s163 + $0xb0] sm:$0xff]
        %v4024 = vld [vmem:[%s163 + $0xb8] sm:$0xff]
        %v4025 = vld [vmem:[%s163 + $0xc0] sm:$0xff]
        %v4026 = vld [vmem:[%s163 + $0xc8] sm:$0xff]
        %v4027 = vld [vmem:[%s163 + $0xd0] sm:$0xff]
        %v4028 = vld [vmem:[%s163 + $0xd8] sm:$0xff]
        %v4029 = vld [vmem:[%s163 + $0xe0] sm:$0xff]
        %v4030 = vld [vmem:[%s163 + $0xe8] sm:$0xff]
        %v4031 = vld [vmem:[%s163 + $0xf0] sm:$0xff]
        %v4032 = vld [vmem:[%s163 + $0xf8] sm:$0xff]
        %v4033 = vadd.f32 %v4001, %v3875
        %v4034 = vadd.f32 %v4002, %v3878
        %v4035 = vadd.f32 %v4003, %v3883
        %v4036 = vadd.f32 %v4004, %v3886
        %v4037 = vadd.f32 %v4005, %v3891
        %v4038 = vadd.f32 %v4006, %v3894
        %v4039 = vadd.f32 %v4007, %v3899
        %v4040 = vadd.f32 %v4008, %v3902
        %v4041 = vadd.f32 %v4009, %v3907
        %v4042 = vadd.f32 %v4010, %v3910
        %v4043 = vadd.f32 %v4011, %v3915
        %v4044 = vadd.f32 %v4012, %v3918
        %v4045 = vadd.f32 %v4013, %v3923
        %v4046 = vadd.f32 %v4014, %v3926
        %v4047 = vadd.f32 %v4015, %v3931
        %v4048 = vadd.f32 %v4016, %v3934
        %v4049 = vadd.f32 %v4017, %v3939
        %v4050 = vadd.f32 %v4018, %v3942
        %v4051 = vadd.f32 %v4019, %v3947
        %v4052 = vadd.f32 %v4020, %v3950
        %v4053 = vadd.f32 %v4021, %v3955
        %v4054 = vadd.f32 %v4022, %v3958
        %v4055 = vadd.f32 %v4023, %v3963
        %v4056 = vadd.f32 %v4024, %v3966
        %v4057 = vadd.f32 %v4025, %v3971
        %v4058 = vadd.f32 %v4026, %v3974
        %v4059 = vadd.f32 %v4027, %v3979
        %v4060 = vadd.f32 %v4028, %v3982
        %v4061 = vadd.f32 %v4029, %v3987
        %v4062 = vadd.f32 %v4030, %v3990
        %v4063 = vadd.f32 %v4031, %v3995
        %v4064 = vadd.f32 %v4032, %v3998
        %4065 = vst [vmem:[%s163] sm:$0xff] %v4033
        %4066 = vst [vmem:[%s163 + $0x8] sm:$0xff] %v4034
        %4067 = vst [vmem:[%s163 + $0x10] sm:$0xff] %v4035
        %4068 = vst [vmem:[%s163 + $0x18] sm:$0xff] %v4036
        %4069 = vst [vmem:[%s163 + $0x20] sm:$0xff] %v4037
        %4070 = vst [vmem:[%s163 + $0x28] sm:$0xff] %v4038
        %4071 = vst [vmem:[%s163 + $0x30] sm:$0xff] %v4039
        %4072 = vst [vmem:[%s163 + $0x38] sm:$0xff] %v4040
        %4073 = vst [vmem:[%s163 + $0x40] sm:$0xff] %v4041
        %4074 = vst [vmem:[%s163 + $0x48] sm:$0xff] %v4042
        %4075 = vst [vmem:[%s163 + $0x50] sm:$0xff] %v4043
        %4076 = vst [vmem:[%s163 + $0x58] sm:$0xff] %v4044
        %4077 = vst [vmem:[%s163 + $0x60] sm:$0xff] %v4045
        %4078 = vst [vmem:[%s163 + $0x68] sm:$0xff] %v4046
        %4079 = vst [vmem:[%s163 + $0x70] sm:$0xff] %v4047
        %4080 = vst [vmem:[%s163 + $0x78] sm:$0xff] %v4048
        %4081 = vst [vmem:[%s163 + $0x80] sm:$0xff] %v4049
        %4082 = vst [vmem:[%s163 + $0x88] sm:$0xff] %v4050
        %4083 = vst [vmem:[%s163 + $0x90] sm:$0xff] %v4051
        %4084 = vst [vmem:[%s163 + $0x98] sm:$0xff] %v4052
        %4085 = vst [vmem:[%s163 + $0xa0] sm:$0xff] %v4053
        %4086 = vst [vmem:[%s163 + $0xa8] sm:$0xff] %v4054
        %4087 = vst [vmem:[%s163 + $0xb0] sm:$0xff] %v4055
        %4088 = vst [vmem:[%s163 + $0xb8] sm:$0xff] %v4056
        %4089 = vst [vmem:[%s163 + $0xc0] sm:$0xff] %v4057
        %4090 = vst [vmem:[%s163 + $0xc8] sm:$0xff] %v4058
        %4091 = vst [vmem:[%s163 + $0xd0] sm:$0xff] %v4059
        %4092 = vst [vmem:[%s163 + $0xd8] sm:$0xff] %v4060
        %4093 = vst [vmem:[%s163 + $0xe0] sm:$0xff] %v4061
        %4094 = vst [vmem:[%s163 + $0xe8] sm:$0xff] %v4062
        %4095 = vst [vmem:[%s163 + $0xf0] sm:$0xff] %v4063
        %4096 = vst [vmem:[%s163 + $0xf8] sm:$0xff] %v4064
        %v4097 = vld [vmem:[%s3674] sm:$0xf]
        %v4098 = vld [vmem:[%s3674 + $0x4] sm:$0xf]
        %v4099 = vld [vmem:[%s3674 + $0x8] sm:$0x1]
        %v4100 = vld [vmem:[%s3674 + $0xc] sm:$0xf]
        %v4101 = vld [vmem:[%s3674 + $0x10] sm:$0xf]
        %v4102 = vld [vmem:[%s3674 + $0x14] sm:$0x1]
        %v4103 = vld [vmem:[%s3674 + $0x18] sm:$0xf]
        %v4104 = vld [vmem:[%s3674 + $0x1c] sm:$0xf]
        %v4105 = vld [vmem:[%s3674 + $0x20] sm:$0x1]
        %v4106 = vld [vmem:[%s3674 + $0x24] sm:$0xf]
        %v4107 = vld [vmem:[%s3674 + $0x28] sm:$0xf]
        %v4108 = vld [vmem:[%s3674 + $0x2c] sm:$0x1]
        %v4109 = vld [vmem:[%s3674 + $0x30] sm:$0xf]
        %v4110 = vld [vmem:[%s3674 + $0x34] sm:$0xf]
        %v4111 = vld [vmem:[%s3674 + $0x38] sm:$0x1]
        %v4112 = vld [vmem:[%s3674 + $0x3c] sm:$0xf]
        %v4113 = vld [vmem:[%s3674 + $0x40] sm:$0xf]
        %v4114 = vld [vmem:[%s3674 + $0x44] sm:$0x1]
        %v4115 = vld [vmem:[%s3674 + $0x48] sm:$0xf]
        %v4116 = vld [vmem:[%s3674 + $0x4c] sm:$0xf]
        %v4117 = vld [vmem:[%s3674 + $0x50] sm:$0x1]
        %v4118 = vld [vmem:[%s3674 + $0x54] sm:$0xf]
        %v4119 = vld [vmem:[%s3674 + $0x58] sm:$0xf]
        %v4120 = vld [vmem:[%s3674 + $0x5c] sm:$0x1]
        %v4121 = vld [vmem:[%s3674 + $0x60] sm:$0xf]
        %v4122 = vld [vmem:[%s3674 + $0x64] sm:$0xf]
        %v4123 = vld [vmem:[%s3674 + $0x68] sm:$0x1]
        %v4124 = vld [vmem:[%s3674 + $0x6c] sm:$0xf]
        %v4125 = vld [vmem:[%s3674 + $0x70] sm:$0xf]
        %v4126 = vld [vmem:[%s3674 + $0x74] sm:$0x1]
        %v4127 = vld [vmem:[%s3674 + $0x78] sm:$0xf]
        %v4128 = vld [vmem:[%s3674 + $0x7c] sm:$0xf]
        %v4129 = vld [vmem:[%s3674 + $0x80] sm:$0x1]
        %v4130 = vld [vmem:[%s3674 + $0x84] sm:$0xf]
        %v4131 = vld [vmem:[%s3674 + $0x88] sm:$0xf]
        %v4132 = vld [vmem:[%s3674 + $0x8c] sm:$0x1]
        %v4133 = vld [vmem:[%s3674 + $0x90] sm:$0xf]
        %v4134 = vld [vmem:[%s3674 + $0x94] sm:$0xf]
        %v4135 = vld [vmem:[%s3674 + $0x98] sm:$0x1]
        %v4136 = vld [vmem:[%s3674 + $0x9c] sm:$0xf]
        %v4137 = vld [vmem:[%s3674 + $0xa0] sm:$0xf]
        %v4138 = vld [vmem:[%s3674 + $0xa4] sm:$0x1]
        %v4139 = vld [vmem:[%s3674 + $0xa8] sm:$0xf]
        %v4140 = vld [vmem:[%s3674 + $0xac] sm:$0xf]
        %v4141 = vld [vmem:[%s3674 + $0xb0] sm:$0x1]
        %v4142 = vld [vmem:[%s3674 + $0xb4] sm:$0xf]
        %v4143 = vld [vmem:[%s3674 + $0xb8] sm:$0xf]
        %v4144 = vld [vmem:[%s3674 + $0xbc] sm:$0x1]
        %v4146 = vshrl.u32 %v4097, 16
        %v4148 = vrot.slane %v4146, 4
        %v4149 = vshll.u32 %v4097, 16
        %v4151 = vrot.slane %v4149, 5
        %v4152 = vor.u32 %v4148, %v4151
        %v4153 = vrot.slane %v4152, 4
        %v4155 = vshll.u32 %v4098, 16
        %v4157 = vrot.slane %v4155, 5
        %v4158 = vsel %vm583, %v4153, %v4157
        %v4159 = vshrl.u32 %v4098, 16
        %v4161 = vrot.slane %v4159, 4
        %v4162 = vor.u32 %v4161, %v4157
        %v4163 = vrot.slane %v4162, 4
        %v4165 = vshll.u32 %v4099, 16
        %v4167 = vrot.slane %v4165, 5
        %v4168 = vsel %vm583, %v4163, %v4167
        %v4170 = vshrl.u32 %v4100, 16
        %v4172 = vrot.slane %v4170, 4
        %v4173 = vshll.u32 %v4100, 16
        %v4175 = vrot.slane %v4173, 5
        %v4176 = vor.u32 %v4172, %v4175
        %v4177 = vrot.slane %v4176, 4
        %v4179 = vshll.u32 %v4101, 16
        %v4181 = vrot.slane %v4179, 5
        %v4182 = vsel %vm583, %v4177, %v4181
        %v4183 = vshrl.u32 %v4101, 16
        %v4185 = vrot.slane %v4183, 4
        %v4186 = vor.u32 %v4185, %v4181
        %v4187 = vrot.slane %v4186, 4
        %v4189 = vshll.u32 %v4102, 16
        %v4191 = vrot.slane %v4189, 5
        %v4192 = vsel %vm583, %v4187, %v4191
        %v4194 = vshrl.u32 %v4103, 16
        %v4196 = vrot.slane %v4194, 4
        %v4197 = vshll.u32 %v4103, 16
        %v4199 = vrot.slane %v4197, 5
        %v4200 = vor.u32 %v4196, %v4199
        %v4201 = vrot.slane %v4200, 4
        %v4203 = vshll.u32 %v4104, 16
        %v4205 = vrot.slane %v4203, 5
        %v4206 = vsel %vm583, %v4201, %v4205
        %v4207 = vshrl.u32 %v4104, 16
        %v4209 = vrot.slane %v4207, 4
        %v4210 = vor.u32 %v4209, %v4205
        %v4211 = vrot.slane %v4210, 4
        %v4213 = vshll.u32 %v4105, 16
        %v4215 = vrot.slane %v4213, 5
        %v4216 = vsel %vm583, %v4211, %v4215
        %v4218 = vshrl.u32 %v4106, 16
        %v4220 = vrot.slane %v4218, 4
        %v4221 = vshll.u32 %v4106, 16
        %v4223 = vrot.slane %v4221, 5
        %v4224 = vor.u32 %v4220, %v4223
        %v4225 = vrot.slane %v4224, 4
        %v4227 = vshll.u32 %v4107, 16
        %v4229 = vrot.slane %v4227, 5
        %v4230 = vsel %vm583, %v4225, %v4229
        %v4231 = vshrl.u32 %v4107, 16
        %v4233 = vrot.slane %v4231, 4
        %v4234 = vor.u32 %v4233, %v4229
        %v4235 = vrot.slane %v4234, 4
        %v4237 = vshll.u32 %v4108, 16
        %v4239 = vrot.slane %v4237, 5
        %v4240 = vsel %vm583, %v4235, %v4239
        %v4242 = vshrl.u32 %v4109, 16
        %v4244 = vrot.slane %v4242, 4
        %v4245 = vshll.u32 %v4109, 16
        %v4247 = vrot.slane %v4245, 5
        %v4248 = vor.u32 %v4244, %v4247
        %v4249 = vrot.slane %v4248, 4
        %v4251 = vshll.u32 %v4110, 16
        %v4253 = vrot.slane %v4251, 5
        %v4254 = vsel %vm583, %v4249, %v4253
        %v4255 = vshrl.u32 %v4110, 16
        %v4257 = vrot.slane %v4255, 4
        %v4258 = vor.u32 %v4257, %v4253
        %v4259 = vrot.slane %v4258, 4
        %v4261 = vshll.u32 %v4111, 16
        %v4263 = vrot.slane %v4261, 5
        %v4264 = vsel %vm583, %v4259, %v4263
        %v4266 = vshrl.u32 %v4112, 16
        %v4268 = vrot.slane %v4266, 4
        %v4269 = vshll.u32 %v4112, 16
        %v4271 = vrot.slane %v4269, 5
        %v4272 = vor.u32 %v4268, %v4271
        %v4273 = vrot.slane %v4272, 4
        %v4275 = vshll.u32 %v4113, 16
        %v4277 = vrot.slane %v4275, 5
        %v4278 = vsel %vm583, %v4273, %v4277
        %v4279 = vshrl.u32 %v4113, 16
        %v4281 = vrot.slane %v4279, 4
        %v4282 = vor.u32 %v4281, %v4277
        %v4283 = vrot.slane %v4282, 4
        %v4285 = vshll.u32 %v4114, 16
        %v4287 = vrot.slane %v4285, 5
        %v4288 = vsel %vm583, %v4283, %v4287
        %v4290 = vshrl.u32 %v4115, 16
        %v4292 = vrot.slane %v4290, 4
        %v4293 = vshll.u32 %v4115, 16
        %v4295 = vrot.slane %v4293, 5
        %v4296 = vor.u32 %v4292, %v4295
        %v4297 = vrot.slane %v4296, 4
        %v4299 = vshll.u32 %v4116, 16
        %v4301 = vrot.slane %v4299, 5
        %v4302 = vsel %vm583, %v4297, %v4301
        %v4303 = vshrl.u32 %v4116, 16
        %v4305 = vrot.slane %v4303, 4
        %v4306 = vor.u32 %v4305, %v4301
        %v4307 = vrot.slane %v4306, 4
        %v4309 = vshll.u32 %v4117, 16
        %v4311 = vrot.slane %v4309, 5
        %v4312 = vsel %vm583, %v4307, %v4311
        %v4314 = vshrl.u32 %v4118, 16
        %v4316 = vrot.slane %v4314, 4
        %v4317 = vshll.u32 %v4118, 16
        %v4319 = vrot.slane %v4317, 5
        %v4320 = vor.u32 %v4316, %v4319
        %v4321 = vrot.slane %v4320, 4
        %v4323 = vshll.u32 %v4119, 16
        %v4325 = vrot.slane %v4323, 5
        %v4326 = vsel %vm583, %v4321, %v4325
        %v4327 = vshrl.u32 %v4119, 16
        %v4329 = vrot.slane %v4327, 4
        %v4330 = vor.u32 %v4329, %v4325
        %v4331 = vrot.slane %v4330, 4
        %v4333 = vshll.u32 %v4120, 16
        %v4335 = vrot.slane %v4333, 5
        %v4336 = vsel %vm583, %v4331, %v4335
        %v4338 = vshrl.u32 %v4121, 16
        %v4340 = vrot.slane %v4338, 4
        %v4341 = vshll.u32 %v4121, 16
        %v4343 = vrot.slane %v4341, 5
        %v4344 = vor.u32 %v4340, %v4343
        %v4345 = vrot.slane %v4344, 4
        %v4347 = vshll.u32 %v4122, 16
        %v4349 = vrot.slane %v4347, 5
        %v4350 = vsel %vm583, %v4345, %v4349
        %v4351 = vshrl.u32 %v4122, 16
        %v4353 = vrot.slane %v4351, 4
        %v4354 = vor.u32 %v4353, %v4349
        %v4355 = vrot.slane %v4354, 4
        %v4357 = vshll.u32 %v4123, 16
        %v4359 = vrot.slane %v4357, 5
        %v4360 = vsel %vm583, %v4355, %v4359
        %v4362 = vshrl.u32 %v4124, 16
        %v4364 = vrot.slane %v4362, 4
        %v4365 = vshll.u32 %v4124, 16
        %v4367 = vrot.slane %v4365, 5
        %v4368 = vor.u32 %v4364, %v4367
        %v4369 = vrot.slane %v4368, 4
        %v4371 = vshll.u32 %v4125, 16
        %v4373 = vrot.slane %v4371, 5
        %v4374 = vsel %vm583, %v4369, %v4373
        %v4375 = vshrl.u32 %v4125, 16
        %v4377 = vrot.slane %v4375, 4
        %v4378 = vor.u32 %v4377, %v4373
        %v4379 = vrot.slane %v4378, 4
        %v4381 = vshll.u32 %v4126, 16
        %v4383 = vrot.slane %v4381, 5
        %v4384 = vsel %vm583, %v4379, %v4383
        %v4386 = vshrl.u32 %v4127, 16
        %v4388 = vrot.slane %v4386, 4
        %v4389 = vshll.u32 %v4127, 16
        %v4391 = vrot.slane %v4389, 5
        %v4392 = vor.u32 %v4388, %v4391
        %v4393 = vrot.slane %v4392, 4
        %v4395 = vshll.u32 %v4128, 16
        %v4397 = vrot.slane %v4395, 5
        %v4398 = vsel %vm583, %v4393, %v4397
        %v4399 = vshrl.u32 %v4128, 16
        %v4401 = vrot.slane %v4399, 4
        %v4402 = vor.u32 %v4401, %v4397
        %v4403 = vrot.slane %v4402, 4
        %v4405 = vshll.u32 %v4129, 16
        %v4407 = vrot.slane %v4405, 5
        %v4408 = vsel %vm583, %v4403, %v4407
        %v4410 = vshrl.u32 %v4130, 16
        %v4412 = vrot.slane %v4410, 4
        %v4413 = vshll.u32 %v4130, 16
        %v4415 = vrot.slane %v4413, 5
        %v4416 = vor.u32 %v4412, %v4415
        %v4417 = vrot.slane %v4416, 4
        %v4419 = vshll.u32 %v4131, 16
        %v4421 = vrot.slane %v4419, 5
        %v4422 = vsel %vm583, %v4417, %v4421
        %v4423 = vshrl.u32 %v4131, 16
        %v4425 = vrot.slane %v4423, 4
        %v4426 = vor.u32 %v4425, %v4421
        %v4427 = vrot.slane %v4426, 4
        %v4429 = vshll.u32 %v4132, 16
        %v4431 = vrot.slane %v4429, 5
        %v4432 = vsel %vm583, %v4427, %v4431
        %v4434 = vshrl.u32 %v4133, 16
        %v4436 = vrot.slane %v4434, 4
        %v4437 = vshll.u32 %v4133, 16
        %v4439 = vrot.slane %v4437, 5
        %v4440 = vor.u32 %v4436, %v4439
        %v4441 = vrot.slane %v4440, 4
        %v4443 = vshll.u32 %v4134, 16
        %v4445 = vrot.slane %v4443, 5
        %v4446 = vsel %vm583, %v4441, %v4445
        %v4447 = vshrl.u32 %v4134, 16
        %v4449 = vrot.slane %v4447, 4
        %v4450 = vor.u32 %v4449, %v4445
        %v4451 = vrot.slane %v4450, 4
        %v4453 = vshll.u32 %v4135, 16
        %v4455 = vrot.slane %v4453, 5
        %v4456 = vsel %vm583, %v4451, %v4455
        %v4458 = vshrl.u32 %v4136, 16
        %v4460 = vrot.slane %v4458, 4
        %v4461 = vshll.u32 %v4136, 16
        %v4463 = vrot.slane %v4461, 5
        %v4464 = vor.u32 %v4460, %v4463
        %v4465 = vrot.slane %v4464, 4
        %v4467 = vshll.u32 %v4137, 16
        %v4469 = vrot.slane %v4467, 5
        %v4470 = vsel %vm583, %v4465, %v4469
        %v4471 = vshrl.u32 %v4137, 16
        %v4473 = vrot.slane %v4471, 4
        %v4474 = vor.u32 %v4473, %v4469
        %v4475 = vrot.slane %v4474, 4
        %v4477 = vshll.u32 %v4138, 16
        %v4479 = vrot.slane %v4477, 5
        %v4480 = vsel %vm583, %v4475, %v4479
        %v4482 = vshrl.u32 %v4139, 16
        %v4484 = vrot.slane %v4482, 4
        %v4485 = vshll.u32 %v4139, 16
        %v4487 = vrot.slane %v4485, 5
        %v4488 = vor.u32 %v4484, %v4487
        %v4489 = vrot.slane %v4488, 4
        %v4491 = vshll.u32 %v4140, 16
        %v4493 = vrot.slane %v4491, 5
        %v4494 = vsel %vm583, %v4489, %v4493
        %v4495 = vshrl.u32 %v4140, 16
        %v4497 = vrot.slane %v4495, 4
        %v4498 = vor.u32 %v4497, %v4493
        %v4499 = vrot.slane %v4498, 4
        %v4501 = vshll.u32 %v4141, 16
        %v4503 = vrot.slane %v4501, 5
        %v4504 = vsel %vm583, %v4499, %v4503
        %v4506 = vshrl.u32 %v4142, 16
        %v4508 = vrot.slane %v4506, 4
        %v4509 = vshll.u32 %v4142, 16
        %v4511 = vrot.slane %v4509, 5
        %v4512 = vor.u32 %v4508, %v4511
        %v4513 = vrot.slane %v4512, 4
        %v4515 = vshll.u32 %v4143, 16
        %v4517 = vrot.slane %v4515, 5
        %v4518 = vsel %vm583, %v4513, %v4517
        %v4519 = vshrl.u32 %v4143, 16
        %v4521 = vrot.slane %v4519, 4
        %v4522 = vor.u32 %v4521, %v4517
        %v4523 = vrot.slane %v4522, 4
        %v4525 = vshll.u32 %v4144, 16
        %v4527 = vrot.slane %v4525, 5
        %v4528 = vsel %vm583, %v4523, %v4527
        %s4529 = scalar_lea.vmem %s172, 14
        %v4530 = vld [vmem:[%s4529] sm:$0x3]
        %v4531 = vunpack.c.l.b16 %v4158
        %v4532 = vunpack.c.l.b16 %v4168
        %v4533 = vunpack.c.l.b16 %v4182
        %v4534 = vunpack.c.l.b16 %v4192
        %v4535 = vunpack.c.l.b16 %v4206
        %v4536 = vunpack.c.l.b16 %v4216
        %v4537 = vunpack.c.l.b16 %v4230
        %v4538 = vunpack.c.l.b16 %v4240
        %v4539 = vunpack.c.l.b16 %v4254
        %v4540 = vunpack.c.l.b16 %v4264
        %v4541 = vunpack.c.l.b16 %v4278
        %v4542 = vunpack.c.l.b16 %v4288
        %v4543 = vunpack.c.l.b16 %v4302
        %v4544 = vunpack.c.l.b16 %v4312
        %v4545 = vunpack.c.l.b16 %v4326
        %v4546 = vunpack.c.l.b16 %v4336
        %v4547 = vunpack.c.l.b16 %v4350
        %v4548 = vunpack.c.l.b16 %v4360
        %v4549 = vunpack.c.l.b16 %v4374
        %v4550 = vunpack.c.l.b16 %v4384
        %v4551 = vunpack.c.l.b16 %v4398
        %v4552 = vunpack.c.l.b16 %v4408
        %v4553 = vunpack.c.l.b16 %v4422
        %v4554 = vunpack.c.l.b16 %v4432
        %v4555 = vunpack.c.l.b16 %v4446
        %v4556 = vunpack.c.l.b16 %v4456
        %v4557 = vunpack.c.l.b16 %v4470
        %v4558 = vunpack.c.l.b16 %v4480
        %v4559 = vunpack.c.l.b16 %v4494
        %v4560 = vunpack.c.l.b16 %v4504
        %v4561 = vunpack.c.l.b16 %v4518
        %v4562 = vunpack.c.l.b16 %v4528
        %v4563 = vpack.c.b16 %v4532, %v4531
        %v4564 = vpack.c.b16 %v4534, %v4533
        %v4565 = vpack.c.b16 %v4536, %v4535
        %v4566 = vpack.c.b16 %v4538, %v4537
        %v4567 = vpack.c.b16 %v4540, %v4539
        %v4568 = vpack.c.b16 %v4542, %v4541
        %v4569 = vpack.c.b16 %v4544, %v4543
        %v4570 = vpack.c.b16 %v4546, %v4545
        %v4571 = vpack.c.b16 %v4548, %v4547
        %v4572 = vpack.c.b16 %v4550, %v4549
        %v4573 = vpack.c.b16 %v4552, %v4551
        %v4574 = vpack.c.b16 %v4554, %v4553
        %v4575 = vpack.c.b16 %v4556, %v4555
        %v4576 = vpack.c.b16 %v4558, %v4557
        %v4577 = vpack.c.b16 %v4560, %v4559
        %v4578 = vpack.c.b16 %v4562, %v4561
        %v4580 = vsel %vm287, %v4563, 0
        %v4583 = vsel %vm287, %v4564, 0
        %v4586 = vsel %vm287, %v4565, 0
        %v4589 = vsel %vm287, %v4566, 0
        %v4592 = vsel %vm287, %v4567, 0
        %v4595 = vsel %vm287, %v4568, 0
        %v4598 = vsel %vm287, %v4569, 0
        %v4601 = vsel %vm287, %v4570, 0
        %v4604 = vsel %vm287, %v4571, 0
        %v4607 = vsel %vm287, %v4572, 0
        %v4610 = vsel %vm287, %v4573, 0
        %v4613 = vsel %vm287, %v4574, 0
        %v4616 = vsel %vm287, %v4575, 0
        %v4619 = vsel %vm287, %v4576, 0
        %v4622 = vsel %vm287, %v4577, 0
        %v4625 = vsel %vm287, %v4578, 0
        %v4628 = vsel %vm336, %v4530, 0
        %4630 = vmatprep.subr.bf16.mxu0 0
        %4631 = vmatpush1.bf16.msra.mxu0 %v4628
        %4632 = vmatprep.subr.bf16.mxu0 0
        %4633 = vmatpush1.bf16.msra.mxu0 0
        %4634 = vmatprep.subr.bf16.mxu0 0
        %4635 = vmatpush1.bf16.msra.mxu0 0
        %4636 = vmatprep.subr.bf16.mxu0 0
        %4637 = vmatpush1.bf16.msra.mxu0 0
        %4638 = vmatprep.subr.bf16.mxu0 0
        %4639 = vmatpush1.bf16.msra.mxu0 0
        %4640 = vmatprep.subr.bf16.mxu0 0
        %4641 = vmatpush1.bf16.msra.mxu0 0
        %4642 = vmatprep.subr.bf16.mxu0 0
        %4643 = vmatpush1.bf16.msra.mxu0 0
        %4644 = vmatprep.subr.bf16.mxu0 0
        %4645 = vmatpush1.bf16.msra.mxu0 0
        %4646 = vmatprep.subr.bf16.mxu0 0
        %4647 = vmatpush1.bf16.msra.mxu0 0
        %4648 = vmatprep.subr.bf16.mxu0 0
        %4649 = vmatpush1.bf16.msra.mxu0 0
        %4650 = vmatprep.subr.bf16.mxu0 0
        %4651 = vmatpush1.bf16.msra.mxu0 0
        %4652 = vmatprep.subr.bf16.mxu0 0
        %4653 = vmatpush1.bf16.msra.mxu0 0
        %4654 = vmatprep.subr.bf16.mxu0 0
        %4655 = vmatpush1.bf16.msra.mxu0 0
        %4656 = vmatprep.subr.bf16.mxu0 0
        %4657 = vmatpush1.bf16.msra.mxu0 0
        %4658 = vmatprep.subr.bf16.mxu0 0
        %4659 = vmatpush1.bf16.msra.mxu0 0
        %4660 = vmatprep.subr.bf16.mxu0 0
        %4661 = vmatpush1.bf16.msra.mxu0 0
        %4662 = vmatprep.mubr.bf16.mxu0 0
        %4663 = vmatmul.mubr.bf16.gmra.mrb[0].mxu0 %v4580
        %v4664 = vpop.f32.mrb[0].mxu0
        %v4665 = vadd.f32 0.0, %v4664
        %v4666 = vpop.f32.mrb[0].mxu0
        %v4667 = vpop.f32.mrb[0].mxu0
        %v4668 = vadd.f32 0.0, %v4667
        %v4669 = vpop.f32.mrb[0].mxu0
        %4670 = vmatprep.mubr.bf16.mxu0 0
        %4671 = vmatmul.mubr.bf16.gmra.mrb[0].mxu0 %v4583
        %v4672 = vpop.f32.mrb[0].mxu0
        %v4673 = vadd.f32 0.0, %v4672
        %v4674 = vpop.f32.mrb[0].mxu0
        %v4675 = vpop.f32.mrb[0].mxu0
        %v4676 = vadd.f32 0.0, %v4675
        %v4677 = vpop.f32.mrb[0].mxu0
        %4678 = vmatprep.mubr.bf16.mxu0 0
        %4679 = vmatmul.mubr.bf16.gmra.mrb[0].mxu0 %v4586
        %v4680 = vpop.f32.mrb[0].mxu0
        %v4681 = vadd.f32 0.0, %v4680
        %v4682 = vpop.f32.mrb[0].mxu0
        %v4683 = vpop.f32.mrb[0].mxu0
        %v4684 = vadd.f32 0.0, %v4683
        %v4685 = vpop.f32.mrb[0].mxu0
        %4686 = vmatprep.mubr.bf16.mxu0 0
        %4687 = vmatmul.mubr.bf16.gmra.mrb[0].mxu0 %v4589
        %v4688 = vpop.f32.mrb[0].mxu0
        %v4689 = vadd.f32 0.0, %v4688
        %v4690 = vpop.f32.mrb[0].mxu0
        %v4691 = vpop.f32.mrb[0].mxu0
        %v4692 = vadd.f32 0.0, %v4691
        %v4693 = vpop.f32.mrb[0].mxu0
        %4694 = vmatprep.mubr.bf16.mxu0 0
        %4695 = vmatmul.mubr.bf16.gmra.mrb[0].mxu0 %v4592
        %v4696 = vpop.f32.mrb[0].mxu0
        %v4697 = vadd.f32 0.0, %v4696
        %v4698 = vpop.f32.mrb[0].mxu0
        %v4699 = vpop.f32.mrb[0].mxu0
        %v4700 = vadd.f32 0.0, %v4699
        %v4701 = vpop.f32.mrb[0].mxu0
        %4702 = vmatprep.mubr.bf16.mxu0 0
        %4703 = vmatmul.mubr.bf16.gmra.mrb[0].mxu0 %v4595
        %v4704 = vpop.f32.mrb[0].mxu0
        %v4705 = vadd.f32 0.0, %v4704
        %v4706 = vpop.f32.mrb[0].mxu0
        %v4707 = vpop.f32.mrb[0].mxu0
        %v4708 = vadd.f32 0.0, %v4707
        %v4709 = vpop.f32.mrb[0].mxu0
        %4710 = vmatprep.mubr.bf16.mxu0 0
        %4711 = vmatmul.mubr.bf16.gmra.mrb[0].mxu0 %v4598
        %v4712 = vpop.f32.mrb[0].mxu0
        %v4713 = vadd.f32 0.0, %v4712
        %v4714 = vpop.f32.mrb[0].mxu0
        %v4715 = vpop.f32.mrb[0].mxu0
        %v4716 = vadd.f32 0.0, %v4715
        %v4717 = vpop.f32.mrb[0].mxu0
        %4718 = vmatprep.mubr.bf16.mxu0 0
        %4719 = vmatmul.mubr.bf16.gmra.mrb[0].mxu0 %v4601
        %v4720 = vpop.f32.mrb[0].mxu0
        %v4721 = vadd.f32 0.0, %v4720
        %v4722 = vpop.f32.mrb[0].mxu0
        %v4723 = vpop.f32.mrb[0].mxu0
        %v4724 = vadd.f32 0.0, %v4723
        %v4725 = vpop.f32.mrb[0].mxu0
        %4726 = vmatprep.mubr.bf16.mxu0 0
        %4727 = vmatmul.mubr.bf16.gmra.mrb[0].mxu0 %v4604
        %v4728 = vpop.f32.mrb[0].mxu0
        %v4729 = vadd.f32 0.0, %v4728
        %v4730 = vpop.f32.mrb[0].mxu0
        %v4731 = vpop.f32.mrb[0].mxu0
        %v4732 = vadd.f32 0.0, %v4731
        %v4733 = vpop.f32.mrb[0].mxu0
        %4734 = vmatprep.mubr.bf16.mxu0 0
        %4735 = vmatmul.mubr.bf16.gmra.mrb[0].mxu0 %v4607
        %v4736 = vpop.f32.mrb[0].mxu0
        %v4737 = vadd.f32 0.0, %v4736
        %v4738 = vpop.f32.mrb[0].mxu0
        %v4739 = vpop.f32.mrb[0].mxu0
        %v4740 = vadd.f32 0.0, %v4739
        %v4741 = vpop.f32.mrb[0].mxu0
        %4742 = vmatprep.mubr.bf16.mxu0 0
        %4743 = vmatmul.mubr.bf16.gmra.mrb[0].mxu0 %v4610
        %v4744 = vpop.f32.mrb[0].mxu0
        %v4745 = vadd.f32 0.0, %v4744
        %v4746 = vpop.f32.mrb[0].mxu0
        %v4747 = vpop.f32.mrb[0].mxu0
        %v4748 = vadd.f32 0.0, %v4747
        %v4749 = vpop.f32.mrb[0].mxu0
        %4750 = vmatprep.mubr.bf16.mxu0 0
        %4751 = vmatmul.mubr.bf16.gmra.mrb[0].mxu0 %v4613
        %v4752 = vpop.f32.mrb[0].mxu0
        %v4753 = vadd.f32 0.0, %v4752
        %v4754 = vpop.f32.mrb[0].mxu0
        %v4755 = vpop.f32.mrb[0].mxu0
        %v4756 = vadd.f32 0.0, %v4755
        %v4757 = vpop.f32.mrb[0].mxu0
        %4758 = vmatprep.mubr.bf16.mxu0 0
        %4759 = vmatmul.mubr.bf16.gmra.mrb[0].mxu0 %v4616
        %v4760 = vpop.f32.mrb[0].mxu0
        %v4761 = vadd.f32 0.0, %v4760
        %v4762 = vpop.f32.mrb[0].mxu0
        %v4763 = vpop.f32.mrb[0].mxu0
        %v4764 = vadd.f32 0.0, %v4763
        %v4765 = vpop.f32.mrb[0].mxu0
        %4766 = vmatprep.mubr.bf16.mxu0 0
        %4767 = vmatmul.mubr.bf16.gmra.mrb[0].mxu0 %v4619
        %v4768 = vpop.f32.mrb[0].mxu0
        %v4769 = vadd.f32 0.0, %v4768
        %v4770 = vpop.f32.mrb[0].mxu0
        %v4771 = vpop.f32.mrb[0].mxu0
        %v4772 = vadd.f32 0.0, %v4771
        %v4773 = vpop.f32.mrb[0].mxu0
        %4774 = vmatprep.mubr.bf16.mxu0 0
        %4775 = vmatmul.mubr.bf16.gmra.mrb[0].mxu0 %v4622
        %v4776 = vpop.f32.mrb[0].mxu0
        %v4777 = vadd.f32 0.0, %v4776
        %v4778 = vpop.f32.mrb[0].mxu0
        %v4779 = vpop.f32.mrb[0].mxu0
        %v4780 = vadd.f32 0.0, %v4779
        %v4781 = vpop.f32.mrb[0].mxu0
        %4782 = vmatprep.mubr.bf16.mxu0 0
        %4783 = vmatmul.mubr.bf16.gmra.mrb[0].mxu0 %v4625
        %v4784 = vpop.f32.mrb[0].mxu0
        %v4785 = vadd.f32 0.0, %v4784
        %v4786 = vpop.f32.mrb[0].mxu0
        %v4787 = vpop.f32.mrb[0].mxu0
        %v4788 = vadd.f32 0.0, %v4787
        %v4789 = vpop.f32.mrb[0].mxu0
        %4790 = vdwg.mxu0
        %v4791 = vld [vmem:[%s163] sm:$0xff]
        %v4792 = vld [vmem:[%s163 + $0x8] sm:$0xff]
        %v4793 = vld [vmem:[%s163 + $0x10] sm:$0xff]
        %v4794 = vld [vmem:[%s163 + $0x18] sm:$0xff]
        %v4795 = vld [vmem:[%s163 + $0x20] sm:$0xff]
        %v4796 = vld [vmem:[%s163 + $0x28] sm:$0xff]
        %v4797 = vld [vmem:[%s163 + $0x30] sm:$0xff]
        %v4798 = vld [vmem:[%s163 + $0x38] sm:$0xff]
        %v4799 = vld [vmem:[%s163 + $0x40] sm:$0xff]
        %v4800 = vld [vmem:[%s163 + $0x48] sm:$0xff]
        %v4801 = vld [vmem:[%s163 + $0x50] sm:$0xff]
        %v4802 = vld [vmem:[%s163 + $0x58] sm:$0xff]
        %v4803 = vld [vmem:[%s163 + $0x60] sm:$0xff]
        %v4804 = vld [vmem:[%s163 + $0x68] sm:$0xff]
        %v4805 = vld [vmem:[%s163 + $0x70] sm:$0xff]
        %v4806 = vld [vmem:[%s163 + $0x78] sm:$0xff]
        %v4807 = vld [vmem:[%s163 + $0x80] sm:$0xff]
        %v4808 = vld [vmem:[%s163 + $0x88] sm:$0xff]
        %v4809 = vld [vmem:[%s163 + $0x90] sm:$0xff]
        %v4810 = vld [vmem:[%s163 + $0x98] sm:$0xff]
        %v4811 = vld [vmem:[%s163 + $0xa0] sm:$0xff]
        %v4812 = vld [vmem:[%s163 + $0xa8] sm:$0xff]
        %v4813 = vld [vmem:[%s163 + $0xb0] sm:$0xff]
        %v4814 = vld [vmem:[%s163 + $0xb8] sm:$0xff]
        %v4815 = vld [vmem:[%s163 + $0xc0] sm:$0xff]
        %v4816 = vld [vmem:[%s163 + $0xc8] sm:$0xff]
        %v4817 = vld [vmem:[%s163 + $0xd0] sm:$0xff]
        %v4818 = vld [vmem:[%s163 + $0xd8] sm:$0xff]
        %v4819 = vld [vmem:[%s163 + $0xe0] sm:$0xff]
        %v4820 = vld [vmem:[%s163 + $0xe8] sm:$0xff]
        %v4821 = vld [vmem:[%s163 + $0xf0] sm:$0xff]
        %v4822 = vld [vmem:[%s163 + $0xf8] sm:$0xff]
        %v4823 = vadd.f32 %v4791, %v4665
        %v4824 = vadd.f32 %v4792, %v4668
        %v4825 = vadd.f32 %v4793, %v4673
        %v4826 = vadd.f32 %v4794, %v4676
        %v4827 = vadd.f32 %v4795, %v4681
        %v4828 = vadd.f32 %v4796, %v4684
        %v4829 = vadd.f32 %v4797, %v4689
        %v4830 = vadd.f32 %v4798, %v4692
        %v4831 = vadd.f32 %v4799, %v4697
        %v4832 = vadd.f32 %v4800, %v4700
        %v4833 = vadd.f32 %v4801, %v4705
        %v4834 = vadd.f32 %v4802, %v4708
        %v4835 = vadd.f32 %v4803, %v4713
        %v4836 = vadd.f32 %v4804, %v4716
        %v4837 = vadd.f32 %v4805, %v4721
        %v4838 = vadd.f32 %v4806, %v4724
        %v4839 = vadd.f32 %v4807, %v4729
        %v4840 = vadd.f32 %v4808, %v4732
        %v4841 = vadd.f32 %v4809, %v4737
        %v4842 = vadd.f32 %v4810, %v4740
        %v4843 = vadd.f32 %v4811, %v4745
        %v4844 = vadd.f32 %v4812, %v4748
        %v4845 = vadd.f32 %v4813, %v4753
        %v4846 = vadd.f32 %v4814, %v4756
        %v4847 = vadd.f32 %v4815, %v4761
        %v4848 = vadd.f32 %v4816, %v4764
        %v4849 = vadd.f32 %v4817, %v4769
        %v4850 = vadd.f32 %v4818, %v4772
        %v4851 = vadd.f32 %v4819, %v4777
        %v4852 = vadd.f32 %v4820, %v4780
        %v4853 = vadd.f32 %v4821, %v4785
        %v4854 = vadd.f32 %v4822, %v4788
        %4855 = vst [vmem:[%s163] sm:$0xff] %v4823
        %4856 = vst [vmem:[%s163 + $0x8] sm:$0xff] %v4824
        %4857 = vst [vmem:[%s163 + $0x10] sm:$0xff] %v4825
        %4858 = vst [vmem:[%s163 + $0x18] sm:$0xff] %v4826
        %4859 = vst [vmem:[%s163 + $0x20] sm:$0xff] %v4827
        %4860 = vst [vmem:[%s163 + $0x28] sm:$0xff] %v4828
        %4861 = vst [vmem:[%s163 + $0x30] sm:$0xff] %v4829
        %4862 = vst [vmem:[%s163 + $0x38] sm:$0xff] %v4830
        %4863 = vst [vmem:[%s163 + $0x40] sm:$0xff] %v4831
        %4864 = vst [vmem:[%s163 + $0x48] sm:$0xff] %v4832
        %4865 = vst [vmem:[%s163 + $0x50] sm:$0xff] %v4833
        %4866 = vst [vmem:[%s163 + $0x58] sm:$0xff] %v4834
        %4867 = vst [vmem:[%s163 + $0x60] sm:$0xff] %v4835
        %4868 = vst [vmem:[%s163 + $0x68] sm:$0xff] %v4836
        %4869 = vst [vmem:[%s163 + $0x70] sm:$0xff] %v4837
        %4870 = vst [vmem:[%s163 + $0x78] sm:$0xff] %v4838
        %4871 = vst [vmem:[%s163 + $0x80] sm:$0xff] %v4839
        %4872 = vst [vmem:[%s163 + $0x88] sm:$0xff] %v4840
        %4873 = vst [vmem:[%s163 + $0x90] sm:$0xff] %v4841
        %4874 = vst [vmem:[%s163 + $0x98] sm:$0xff] %v4842
        %4875 = vst [vmem:[%s163 + $0xa0] sm:$0xff] %v4843
        %4876 = vst [vmem:[%s163 + $0xa8] sm:$0xff] %v4844
        %4877 = vst [vmem:[%s163 + $0xb0] sm:$0xff] %v4845
        %4878 = vst [vmem:[%s163 + $0xb8] sm:$0xff] %v4846
        %4879 = vst [vmem:[%s163 + $0xc0] sm:$0xff] %v4847
        %4880 = vst [vmem:[%s163 + $0xc8] sm:$0xff] %v4848
        %4881 = vst [vmem:[%s163 + $0xd0] sm:$0xff] %v4849
        %4882 = vst [vmem:[%s163 + $0xd8] sm:$0xff] %v4850
        %4883 = vst [vmem:[%s163 + $0xe0] sm:$0xff] %v4851
        %4884 = vst [vmem:[%s163 + $0xe8] sm:$0xff] %v4852
        %4885 = vst [vmem:[%s163 + $0xf0] sm:$0xff] %v4853
        %4886 = vst [vmem:[%s163 + $0xf8] sm:$0xff] %v4854
        %v4887 = vld [vmem:[%s3674] sm:$0xe]
        %v4888 = vld [vmem:[%s3674 + $0x4] sm:$0xf]
        %v4889 = vld [vmem:[%s3674 + $0x8] sm:$0x1]
        %v4890 = vld [vmem:[%s3674 + $0xc] sm:$0xe]
        %v4891 = vld [vmem:[%s3674 + $0x10] sm:$0xf]
        %v4892 = vld [vmem:[%s3674 + $0x14] sm:$0x1]
        %v4893 = vld [vmem:[%s3674 + $0x18] sm:$0xe]
        %v4894 = vld [vmem:[%s3674 + $0x1c] sm:$0xf]
        %v4895 = vld [vmem:[%s3674 + $0x20] sm:$0x1]
        %v4896 = vld [vmem:[%s3674 + $0x24] sm:$0xe]
        %v4897 = vld [vmem:[%s3674 + $0x28] sm:$0xf]
        %v4898 = vld [vmem:[%s3674 + $0x2c] sm:$0x1]
        %v4899 = vld [vmem:[%s3674 + $0x30] sm:$0xe]
        %v4900 = vld [vmem:[%s3674 + $0x34] sm:$0xf]
        %v4901 = vld [vmem:[%s3674 + $0x38] sm:$0x1]
        %v4902 = vld [vmem:[%s3674 + $0x3c] sm:$0xe]
        %v4903 = vld [vmem:[%s3674 + $0x40] sm:$0xf]
        %v4904 = vld [vmem:[%s3674 + $0x44] sm:$0x1]
        %v4905 = vld [vmem:[%s3674 + $0x48] sm:$0xe]
        %v4906 = vld [vmem:[%s3674 + $0x4c] sm:$0xf]
        %v4907 = vld [vmem:[%s3674 + $0x50] sm:$0x1]
        %v4908 = vld [vmem:[%s3674 + $0x54] sm:$0xe]
        %v4909 = vld [vmem:[%s3674 + $0x58] sm:$0xf]
        %v4910 = vld [vmem:[%s3674 + $0x5c] sm:$0x1]
        %v4911 = vld [vmem:[%s3674 + $0x60] sm:$0xe]
        %v4912 = vld [vmem:[%s3674 + $0x64] sm:$0xf]
        %v4913 = vld [vmem:[%s3674 + $0x68] sm:$0x1]
        %v4914 = vld [vmem:[%s3674 + $0x6c] sm:$0xe]
        %v4915 = vld [vmem:[%s3674 + $0x70] sm:$0xf]
        %v4916 = vld [vmem:[%s3674 + $0x74] sm:$0x1]
        %v4917 = vld [vmem:[%s3674 + $0x78] sm:$0xe]
        %v4918 = vld [vmem:[%s3674 + $0x7c] sm:$0xf]
        %v4919 = vld [vmem:[%s3674 + $0x80] sm:$0x1]
        %v4920 = vld [vmem:[%s3674 + $0x84] sm:$0xe]
        %v4921 = vld [vmem:[%s3674 + $0x88] sm:$0xf]
        %v4922 = vld [vmem:[%s3674 + $0x8c] sm:$0x1]
        %v4923 = vld [vmem:[%s3674 + $0x90] sm:$0xe]
        %v4924 = vld [vmem:[%s3674 + $0x94] sm:$0xf]
        %v4925 = vld [vmem:[%s3674 + $0x98] sm:$0x1]
        %v4926 = vld [vmem:[%s3674 + $0x9c] sm:$0xe]
        %v4927 = vld [vmem:[%s3674 + $0xa0] sm:$0xf]
        %v4928 = vld [vmem:[%s3674 + $0xa4] sm:$0x1]
        %v4929 = vld [vmem:[%s3674 + $0xa8] sm:$0xe]
        %v4930 = vld [vmem:[%s3674 + $0xac] sm:$0xf]
        %v4931 = vld [vmem:[%s3674 + $0xb0] sm:$0x1]
        %v4932 = vld [vmem:[%s3674 + $0xb4] sm:$0xe]
        %v4933 = vld [vmem:[%s3674 + $0xb8] sm:$0xf]
        %v4934 = vld [vmem:[%s3674 + $0xbc] sm:$0x1]
        %v4983 = vrot.slane %v4887, 5
        %v4984 = vrot.slane %v4983, 4
        %v4985 = vrot.slane %v4888, 5
        %v4986 = vsel %vm1424, %v4984, %v4985
        %v4987 = vrot.slane %v4985, 4
        %v4988 = vrot.slane %v4889, 5
        %v4989 = vsel %vm1424, %v4987, %v4988
        %v4990 = vrot.slane %v4890, 5
        %v4991 = vrot.slane %v4990, 4
        %v4992 = vrot.slane %v4891, 5
        %v4993 = vsel %vm1424, %v4991, %v4992
        %v4994 = vrot.slane %v4992, 4
        %v4995 = vrot.slane %v4892, 5
        %v4996 = vsel %vm1424, %v4994, %v4995
        %v4997 = vrot.slane %v4893, 5
        %v4998 = vrot.slane %v4997, 4
        %v4999 = vrot.slane %v4894, 5
        %v5000 = vsel %vm1424, %v4998, %v4999
        %v5001 = vrot.slane %v4999, 4
        %v5002 = vrot.slane %v4895, 5
        %v5003 = vsel %vm1424, %v5001, %v5002
        %v5004 = vrot.slane %v4896, 5
        %v5005 = vrot.slane %v5004, 4
        %v5006 = vrot.slane %v4897, 5
        %v5007 = vsel %vm1424, %v5005, %v5006
        %v5008 = vrot.slane %v5006, 4
        %v5009 = vrot.slane %v4898, 5
        %v5010 = vsel %vm1424, %v5008, %v5009
        %v5011 = vrot.slane %v4899, 5
        %v5012 = vrot.slane %v5011, 4
        %v5013 = vrot.slane %v4900, 5
        %v5014 = vsel %vm1424, %v5012, %v5013
        %v5015 = vrot.slane %v5013, 4
        %v5016 = vrot.slane %v4901, 5
        %v5017 = vsel %vm1424, %v5015, %v5016
        %v5018 = vrot.slane %v4902, 5
        %v5019 = vrot.slane %v5018, 4
        %v5020 = vrot.slane %v4903, 5
        %v5021 = vsel %vm1424, %v5019, %v5020
        %v5022 = vrot.slane %v5020, 4
        %v5023 = vrot.slane %v4904, 5
        %v5024 = vsel %vm1424, %v5022, %v5023
        %v5025 = vrot.slane %v4905, 5
        %v5026 = vrot.slane %v5025, 4
        %v5027 = vrot.slane %v4906, 5
        %v5028 = vsel %vm1424, %v5026, %v5027
        %v5029 = vrot.slane %v5027, 4
        %v5030 = vrot.slane %v4907, 5
        %v5031 = vsel %vm1424, %v5029, %v5030
        %v5032 = vrot.slane %v4908, 5
        %v5033 = vrot.slane %v5032, 4
        %v5034 = vrot.slane %v4909, 5
        %v5035 = vsel %vm1424, %v5033, %v5034
        %v5036 = vrot.slane %v5034, 4
        %v5037 = vrot.slane %v4910, 5
        %v5038 = vsel %vm1424, %v5036, %v5037
        %v5039 = vrot.slane %v4911, 5
        %v5040 = vrot.slane %v5039, 4
        %v5041 = vrot.slane %v4912, 5
        %v5042 = vsel %vm1424, %v5040, %v5041
        %v5043 = vrot.slane %v5041, 4
        %v5044 = vrot.slane %v4913, 5
        %v5045 = vsel %vm1424, %v5043, %v5044
        %v5046 = vrot.slane %v4914, 5
        %v5047 = vrot.slane %v5046, 4
        %v5048 = vrot.slane %v4915, 5
        %v5049 = vsel %vm1424, %v5047, %v5048
        %v5050 = vrot.slane %v5048, 4
        %v5051 = vrot.slane %v4916, 5
        %v5052 = vsel %vm1424, %v5050, %v5051
        %v5053 = vrot.slane %v4917, 5
        %v5054 = vrot.slane %v5053, 4
        %v5055 = vrot.slane %v4918, 5
        %v5056 = vsel %vm1424, %v5054, %v5055
        %v5057 = vrot.slane %v5055, 4
        %v5058 = vrot.slane %v4919, 5
        %v5059 = vsel %vm1424, %v5057, %v5058
        %v5060 = vrot.slane %v4920, 5
        %v5061 = vrot.slane %v5060, 4
        %v5062 = vrot.slane %v4921, 5
        %v5063 = vsel %vm1424, %v5061, %v5062
        %v5064 = vrot.slane %v5062, 4
        %v5065 = vrot.slane %v4922, 5
        %v5066 = vsel %vm1424, %v5064, %v5065
        %v5067 = vrot.slane %v4923, 5
        %v5068 = vrot.slane %v5067, 4
        %v5069 = vrot.slane %v4924, 5
        %v5070 = vsel %vm1424, %v5068, %v5069
        %v5071 = vrot.slane %v5069, 4
        %v5072 = vrot.slane %v4925, 5
        %v5073 = vsel %vm1424, %v5071, %v5072
        %v5074 = vrot.slane %v4926, 5
        %v5075 = vrot.slane %v5074, 4
        %v5076 = vrot.slane %v4927, 5
        %v5077 = vsel %vm1424, %v5075, %v5076
        %v5078 = vrot.slane %v5076, 4
        %v5079 = vrot.slane %v4928, 5
        %v5080 = vsel %vm1424, %v5078, %v5079
        %v5081 = vrot.slane %v4929, 5
        %v5082 = vrot.slane %v5081, 4
        %v5083 = vrot.slane %v4930, 5
        %v5084 = vsel %vm1424, %v5082, %v5083
        %v5085 = vrot.slane %v5083, 4
        %v5086 = vrot.slane %v4931, 5
        %v5087 = vsel %vm1424, %v5085, %v5086
        %v5088 = vrot.slane %v4932, 5
        %v5089 = vrot.slane %v5088, 4
        %v5090 = vrot.slane %v4933, 5
        %v5091 = vsel %vm1424, %v5089, %v5090
        %v5092 = vrot.slane %v5090, 4
        %v5093 = vrot.slane %v4934, 5
        %v5094 = vsel %vm1424, %v5092, %v5093
        %s5095 = scalar_lea.vmem %s172, 16
        %v5096 = vld [vmem:[%s5095] sm:$0x3]
        %v5097 = vunpack.c.l.b16 %v4986
        %v5098 = vunpack.c.l.b16 %v4989
        %v5099 = vunpack.c.l.b16 %v4993
        %v5100 = vunpack.c.l.b16 %v4996
        %v5101 = vunpack.c.l.b16 %v5000
        %v5102 = vunpack.c.l.b16 %v5003
        %v5103 = vunpack.c.l.b16 %v5007
        %v5104 = vunpack.c.l.b16 %v5010
        %v5105 = vunpack.c.l.b16 %v5014
        %v5106 = vunpack.c.l.b16 %v5017
        %v5107 = vunpack.c.l.b16 %v5021
        %v5108 = vunpack.c.l.b16 %v5024
        %v5109 = vunpack.c.l.b16 %v5028
        %v5110 = vunpack.c.l.b16 %v5031
        %v5111 = vunpack.c.l.b16 %v5035
        %v5112 = vunpack.c.l.b16 %v5038
        %v5113 = vunpack.c.l.b16 %v5042
        %v5114 = vunpack.c.l.b16 %v5045
        %v5115 = vunpack.c.l.b16 %v5049
        %v5116 = vunpack.c.l.b16 %v5052
        %v5117 = vunpack.c.l.b16 %v5056
        %v5118 = vunpack.c.l.b16 %v5059
        %v5119 = vunpack.c.l.b16 %v5063
        %v5120 = vunpack.c.l.b16 %v5066
        %v5121 = vunpack.c.l.b16 %v5070
        %v5122 = vunpack.c.l.b16 %v5073
        %v5123 = vunpack.c.l.b16 %v5077
        %v5124 = vunpack.c.l.b16 %v5080
        %v5125 = vunpack.c.l.b16 %v5084
        %v5126 = vunpack.c.l.b16 %v5087
        %v5127 = vunpack.c.l.b16 %v5091
        %v5128 = vunpack.c.l.b16 %v5094
        %v5129 = vpack.c.b16 %v5098, %v5097
        %v5130 = vpack.c.b16 %v5100, %v5099
        %v5131 = vpack.c.b16 %v5102, %v5101
        %v5132 = vpack.c.b16 %v5104, %v5103
        %v5133 = vpack.c.b16 %v5106, %v5105
        %v5134 = vpack.c.b16 %v5108, %v5107
        %v5135 = vpack.c.b16 %v5110, %v5109
        %v5136 = vpack.c.b16 %v5112, %v5111
        %v5137 = vpack.c.b16 %v5114, %v5113
        %v5138 = vpack.c.b16 %v5116, %v5115
        %v5139 = vpack.c.b16 %v5118, %v5117
        %v5140 = vpack.c.b16 %v5120, %v5119
        %v5141 = vpack.c.b16 %v5122, %v5121
        %v5142 = vpack.c.b16 %v5124, %v5123
        %v5143 = vpack.c.b16 %v5126, %v5125
        %v5144 = vpack.c.b16 %v5128, %v5127
        %v5146 = vsel %vm287, %v5129, 0
        %v5149 = vsel %vm287, %v5130, 0
        %v5152 = vsel %vm287, %v5131, 0
        %v5155 = vsel %vm287, %v5132, 0
        %v5158 = vsel %vm287, %v5133, 0
        %v5161 = vsel %vm287, %v5134, 0
        %v5164 = vsel %vm287, %v5135, 0
        %v5167 = vsel %vm287, %v5136, 0
        %v5170 = vsel %vm287, %v5137, 0
        %v5173 = vsel %vm287, %v5138, 0
        %v5176 = vsel %vm287, %v5139, 0
        %v5179 = vsel %vm287, %v5140, 0
        %v5182 = vsel %vm287, %v5141, 0
        %v5185 = vsel %vm287, %v5142, 0
        %v5188 = vsel %vm287, %v5143, 0
        %v5191 = vsel %vm287, %v5144, 0
        %v5194 = vsel %vm336, %v5096, 0
        %5196 = vmatprep.subr.bf16.mxu0 0
        %5197 = vmatpush1.bf16.msra.mxu0 %v5194
        %5198 = vmatprep.subr.bf16.mxu0 0
        %5199 = vmatpush1.bf16.msra.mxu0 0
        %5200 = vmatprep.subr.bf16.mxu0 0
        %5201 = vmatpush1.bf16.msra.mxu0 0
        %5202 = vmatprep.subr.bf16.mxu0 0
        %5203 = vmatpush1.bf16.msra.mxu0 0
        %5204 = vmatprep.subr.bf16.mxu0 0
        %5205 = vmatpush1.bf16.msra.mxu0 0
        %5206 = vmatprep.subr.bf16.mxu0 0
        %5207 = vmatpush1.bf16.msra.mxu0 0
        %5208 = vmatprep.subr.bf16.mxu0 0
        %5209 = vmatpush1.bf16.msra.mxu0 0
        %5210 = vmatprep.subr.bf16.mxu0 0
        %5211 = vmatpush1.bf16.msra.mxu0 0
        %5212 = vmatprep.subr.bf16.mxu0 0
        %5213 = vmatpush1.bf16.msra.mxu0 0
        %5214 = vmatprep.subr.bf16.mxu0 0
        %5215 = vmatpush1.bf16.msra.mxu0 0
        %5216 = vmatprep.subr.bf16.mxu0 0
        %5217 = vmatpush1.bf16.msra.mxu0 0
        %5218 = vmatprep.subr.bf16.mxu0 0
        %5219 = vmatpush1.bf16.msra.mxu0 0
        %5220 = vmatprep.subr.bf16.mxu0 0
        %5221 = vmatpush1.bf16.msra.mxu0 0
        %5222 = vmatprep.subr.bf16.mxu0 0
        %5223 = vmatpush1.bf16.msra.mxu0 0
        %5224 = vmatprep.subr.bf16.mxu0 0
        %5225 = vmatpush1.bf16.msra.mxu0 0
        %5226 = vmatprep.subr.bf16.mxu0 0
        %5227 = vmatpush1.bf16.msra.mxu0 0
        %5228 = vmatprep.mubr.bf16.mxu0 0
        %5229 = vmatmul.mubr.bf16.gmra.mrb[0].mxu0 %v5146
        %v5230 = vpop.f32.mrb[0].mxu0
        %v5231 = vadd.f32 0.0, %v5230
        %v5232 = vpop.f32.mrb[0].mxu0
        %v5233 = vpop.f32.mrb[0].mxu0
        %v5234 = vadd.f32 0.0, %v5233
        %v5235 = vpop.f32.mrb[0].mxu0
        %5236 = vmatprep.mubr.bf16.mxu0 0
        %5237 = vmatmul.mubr.bf16.gmra.mrb[0].mxu0 %v5149
        %v5238 = vpop.f32.mrb[0].mxu0
        %v5239 = vadd.f32 0.0, %v5238
        %v5240 = vpop.f32.mrb[0].mxu0
        %v5241 = vpop.f32.mrb[0].mxu0
        %v5242 = vadd.f32 0.0, %v5241
        %v5243 = vpop.f32.mrb[0].mxu0
        %5244 = vmatprep.mubr.bf16.mxu0 0
        %5245 = vmatmul.mubr.bf16.gmra.mrb[0].mxu0 %v5152
        %v5246 = vpop.f32.mrb[0].mxu0
        %v5247 = vadd.f32 0.0, %v5246
        %v5248 = vpop.f32.mrb[0].mxu0
        %v5249 = vpop.f32.mrb[0].mxu0
        %v5250 = vadd.f32 0.0, %v5249
        %v5251 = vpop.f32.mrb[0].mxu0
        %5252 = vmatprep.mubr.bf16.mxu0 0
        %5253 = vmatmul.mubr.bf16.gmra.mrb[0].mxu0 %v5155
        %v5254 = vpop.f32.mrb[0].mxu0
        %v5255 = vadd.f32 0.0, %v5254
        %v5256 = vpop.f32.mrb[0].mxu0
        %v5257 = vpop.f32.mrb[0].mxu0
        %v5258 = vadd.f32 0.0, %v5257
        %v5259 = vpop.f32.mrb[0].mxu0
        %5260 = vmatprep.mubr.bf16.mxu0 0
        %5261 = vmatmul.mubr.bf16.gmra.mrb[0].mxu0 %v5158
        %v5262 = vpop.f32.mrb[0].mxu0
        %v5263 = vadd.f32 0.0, %v5262
        %v5264 = vpop.f32.mrb[0].mxu0
        %v5265 = vpop.f32.mrb[0].mxu0
        %v5266 = vadd.f32 0.0, %v5265
        %v5267 = vpop.f32.mrb[0].mxu0
        %5268 = vmatprep.mubr.bf16.mxu0 0
        %5269 = vmatmul.mubr.bf16.gmra.mrb[0].mxu0 %v5161
        %v5270 = vpop.f32.mrb[0].mxu0
        %v5271 = vadd.f32 0.0, %v5270
        %v5272 = vpop.f32.mrb[0].mxu0
        %v5273 = vpop.f32.mrb[0].mxu0
        %v5274 = vadd.f32 0.0, %v5273
        %v5275 = vpop.f32.mrb[0].mxu0
        %5276 = vmatprep.mubr.bf16.mxu0 0
        %5277 = vmatmul.mubr.bf16.gmra.mrb[0].mxu0 %v5164
        %v5278 = vpop.f32.mrb[0].mxu0
        %v5279 = vadd.f32 0.0, %v5278
        %v5280 = vpop.f32.mrb[0].mxu0
        %v5281 = vpop.f32.mrb[0].mxu0
        %v5282 = vadd.f32 0.0, %v5281
        %v5283 = vpop.f32.mrb[0].mxu0
        %5284 = vmatprep.mubr.bf16.mxu0 0
        %5285 = vmatmul.mubr.bf16.gmra.mrb[0].mxu0 %v5167
        %v5286 = vpop.f32.mrb[0].mxu0
        %v5287 = vadd.f32 0.0, %v5286
        %v5288 = vpop.f32.mrb[0].mxu0
        %v5289 = vpop.f32.mrb[0].mxu0
        %v5290 = vadd.f32 0.0, %v5289
        %v5291 = vpop.f32.mrb[0].mxu0
        %5292 = vmatprep.mubr.bf16.mxu0 0
        %5293 = vmatmul.mubr.bf16.gmra.mrb[0].mxu0 %v5170
        %v5294 = vpop.f32.mrb[0].mxu0
        %v5295 = vadd.f32 0.0, %v5294
        %v5296 = vpop.f32.mrb[0].mxu0
        %v5297 = vpop.f32.mrb[0].mxu0
        %v5298 = vadd.f32 0.0, %v5297
        %v5299 = vpop.f32.mrb[0].mxu0
        %5300 = vmatprep.mubr.bf16.mxu0 0
        %5301 = vmatmul.mubr.bf16.gmra.mrb[0].mxu0 %v5173
        %v5302 = vpop.f32.mrb[0].mxu0
        %v5303 = vadd.f32 0.0, %v5302
        %v5304 = vpop.f32.mrb[0].mxu0
        %v5305 = vpop.f32.mrb[0].mxu0
        %v5306 = vadd.f32 0.0, %v5305
        %v5307 = vpop.f32.mrb[0].mxu0
        %5308 = vmatprep.mubr.bf16.mxu0 0
        %5309 = vmatmul.mubr.bf16.gmra.mrb[0].mxu0 %v5176
        %v5310 = vpop.f32.mrb[0].mxu0
        %v5311 = vadd.f32 0.0, %v5310
        %v5312 = vpop.f32.mrb[0].mxu0
        %v5313 = vpop.f32.mrb[0].mxu0
        %v5314 = vadd.f32 0.0, %v5313
        %v5315 = vpop.f32.mrb[0].mxu0
        %5316 = vmatprep.mubr.bf16.mxu0 0
        %5317 = vmatmul.mubr.bf16.gmra.mrb[0].mxu0 %v5179
        %v5318 = vpop.f32.mrb[0].mxu0
        %v5319 = vadd.f32 0.0, %v5318
        %v5320 = vpop.f32.mrb[0].mxu0
        %v5321 = vpop.f32.mrb[0].mxu0
        %v5322 = vadd.f32 0.0, %v5321
        %v5323 = vpop.f32.mrb[0].mxu0
        %5324 = vmatprep.mubr.bf16.mxu0 0
        %5325 = vmatmul.mubr.bf16.gmra.mrb[0].mxu0 %v5182
        %v5326 = vpop.f32.mrb[0].mxu0
        %v5327 = vadd.f32 0.0, %v5326
        %v5328 = vpop.f32.mrb[0].mxu0
        %v5329 = vpop.f32.mrb[0].mxu0
        %v5330 = vadd.f32 0.0, %v5329
        %v5331 = vpop.f32.mrb[0].mxu0
        %5332 = vmatprep.mubr.bf16.mxu0 0
        %5333 = vmatmul.mubr.bf16.gmra.mrb[0].mxu0 %v5185
        %v5334 = vpop.f32.mrb[0].mxu0
        %v5335 = vadd.f32 0.0, %v5334
        %v5336 = vpop.f32.mrb[0].mxu0
        %v5337 = vpop.f32.mrb[0].mxu0
        %v5338 = vadd.f32 0.0, %v5337
        %v5339 = vpop.f32.mrb[0].mxu0
        %5340 = vmatprep.mubr.bf16.mxu0 0
        %5341 = vmatmul.mubr.bf16.gmra.mrb[0].mxu0 %v5188
        %v5342 = vpop.f32.mrb[0].mxu0
        %v5343 = vadd.f32 0.0, %v5342
        %v5344 = vpop.f32.mrb[0].mxu0
        %v5345 = vpop.f32.mrb[0].mxu0
        %v5346 = vadd.f32 0.0, %v5345
        %v5347 = vpop.f32.mrb[0].mxu0
        %5348 = vmatprep.mubr.bf16.mxu0 0
        %5349 = vmatmul.mubr.bf16.gmra.mrb[0].mxu0 %v5191
        %v5350 = vpop.f32.mrb[0].mxu0
        %v5351 = vadd.f32 0.0, %v5350
        %v5352 = vpop.f32.mrb[0].mxu0
        %v5353 = vpop.f32.mrb[0].mxu0
        %v5354 = vadd.f32 0.0, %v5353
        %v5355 = vpop.f32.mrb[0].mxu0
        %5356 = vdwg.mxu0
        %v5357 = vld [vmem:[%s163] sm:$0xff]
        %v5358 = vld [vmem:[%s163 + $0x8] sm:$0xff]
        %v5359 = vld [vmem:[%s163 + $0x10] sm:$0xff]
        %v5360 = vld [vmem:[%s163 + $0x18] sm:$0xff]
        %v5361 = vld [vmem:[%s163 + $0x20] sm:$0xff]
        %v5362 = vld [vmem:[%s163 + $0x28] sm:$0xff]
        %v5363 = vld [vmem:[%s163 + $0x30] sm:$0xff]
        %v5364 = vld [vmem:[%s163 + $0x38] sm:$0xff]
        %v5365 = vld [vmem:[%s163 + $0x40] sm:$0xff]
        %v5366 = vld [vmem:[%s163 + $0x48] sm:$0xff]
        %v5367 = vld [vmem:[%s163 + $0x50] sm:$0xff]
        %v5368 = vld [vmem:[%s163 + $0x58] sm:$0xff]
        %v5369 = vld [vmem:[%s163 + $0x60] sm:$0xff]
        %v5370 = vld [vmem:[%s163 + $0x68] sm:$0xff]
        %v5371 = vld [vmem:[%s163 + $0x70] sm:$0xff]
        %v5372 = vld [vmem:[%s163 + $0x78] sm:$0xff]
        %v5373 = vld [vmem:[%s163 + $0x80] sm:$0xff]
        %v5374 = vld [vmem:[%s163 + $0x88] sm:$0xff]
        %v5375 = vld [vmem:[%s163 + $0x90] sm:$0xff]
        %v5376 = vld [vmem:[%s163 + $0x98] sm:$0xff]
        %v5377 = vld [vmem:[%s163 + $0xa0] sm:$0xff]
        %v5378 = vld [vmem:[%s163 + $0xa8] sm:$0xff]
        %v5379 = vld [vmem:[%s163 + $0xb0] sm:$0xff]
        %v5380 = vld [vmem:[%s163 + $0xb8] sm:$0xff]
        %v5381 = vld [vmem:[%s163 + $0xc0] sm:$0xff]
        %v5382 = vld [vmem:[%s163 + $0xc8] sm:$0xff]
        %v5383 = vld [vmem:[%s163 + $0xd0] sm:$0xff]
        %v5384 = vld [vmem:[%s163 + $0xd8] sm:$0xff]
        %v5385 = vld [vmem:[%s163 + $0xe0] sm:$0xff]
        %v5386 = vld [vmem:[%s163 + $0xe8] sm:$0xff]
        %v5387 = vld [vmem:[%s163 + $0xf0] sm:$0xff]
        %v5388 = vld [vmem:[%s163 + $0xf8] sm:$0xff]
        %v5389 = vadd.f32 %v5357, %v5231
        %v5390 = vadd.f32 %v5358, %v5234
        %v5391 = vadd.f32 %v5359, %v5239
        %v5392 = vadd.f32 %v5360, %v5242
        %v5393 = vadd.f32 %v5361, %v5247
        %v5394 = vadd.f32 %v5362, %v5250
        %v5395 = vadd.f32 %v5363, %v5255
        %v5396 = vadd.f32 %v5364, %v5258
        %v5397 = vadd.f32 %v5365, %v5263
        %v5398 = vadd.f32 %v5366, %v5266
        %v5399 = vadd.f32 %v5367, %v5271
        %v5400 = vadd.f32 %v5368, %v5274
        %v5401 = vadd.f32 %v5369, %v5279
        %v5402 = vadd.f32 %v5370, %v5282
        %v5403 = vadd.f32 %v5371, %v5287
        %v5404 = vadd.f32 %v5372, %v5290
        %v5405 = vadd.f32 %v5373, %v5295
        %v5406 = vadd.f32 %v5374, %v5298
        %v5407 = vadd.f32 %v5375, %v5303
        %v5408 = vadd.f32 %v5376, %v5306
        %v5409 = vadd.f32 %v5377, %v5311
        %v5410 = vadd.f32 %v5378, %v5314
        %v5411 = vadd.f32 %v5379, %v5319
        %v5412 = vadd.f32 %v5380, %v5322
        %v5413 = vadd.f32 %v5381, %v5327
        %v5414 = vadd.f32 %v5382, %v5330
        %v5415 = vadd.f32 %v5383, %v5335
        %v5416 = vadd.f32 %v5384, %v5338
        %v5417 = vadd.f32 %v5385, %v5343
        %v5418 = vadd.f32 %v5386, %v5346
        %v5419 = vadd.f32 %v5387, %v5351
        %v5420 = vadd.f32 %v5388, %v5354
        %5421 = vst [vmem:[%s163] sm:$0xff] %v5389
        %5422 = vst [vmem:[%s163 + $0x8] sm:$0xff] %v5390
        %5423 = vst [vmem:[%s163 + $0x10] sm:$0xff] %v5391
        %5424 = vst [vmem:[%s163 + $0x18] sm:$0xff] %v5392
        %5425 = vst [vmem:[%s163 + $0x20] sm:$0xff] %v5393
        %5426 = vst [vmem:[%s163 + $0x28] sm:$0xff] %v5394
        %5427 = vst [vmem:[%s163 + $0x30] sm:$0xff] %v5395
        %5428 = vst [vmem:[%s163 + $0x38] sm:$0xff] %v5396
        %5429 = vst [vmem:[%s163 + $0x40] sm:$0xff] %v5397
        %5430 = vst [vmem:[%s163 + $0x48] sm:$0xff] %v5398
        %5431 = vst [vmem:[%s163 + $0x50] sm:$0xff] %v5399
        %5432 = vst [vmem:[%s163 + $0x58] sm:$0xff] %v5400
        %5433 = vst [vmem:[%s163 + $0x60] sm:$0xff] %v5401
        %5434 = vst [vmem:[%s163 + $0x68] sm:$0xff] %v5402
        %5435 = vst [vmem:[%s163 + $0x70] sm:$0xff] %v5403
        %5436 = vst [vmem:[%s163 + $0x78] sm:$0xff] %v5404
        %5437 = vst [vmem:[%s163 + $0x80] sm:$0xff] %v5405
        %5438 = vst [vmem:[%s163 + $0x88] sm:$0xff] %v5406
        %5439 = vst [vmem:[%s163 + $0x90] sm:$0xff] %v5407
        %5440 = vst [vmem:[%s163 + $0x98] sm:$0xff] %v5408
        %5441 = vst [vmem:[%s163 + $0xa0] sm:$0xff] %v5409
        %5442 = vst [vmem:[%s163 + $0xa8] sm:$0xff] %v5410
        %5443 = vst [vmem:[%s163 + $0xb0] sm:$0xff] %v5411
        %5444 = vst [vmem:[%s163 + $0xb8] sm:$0xff] %v5412
        %5445 = vst [vmem:[%s163 + $0xc0] sm:$0xff] %v5413
        %5446 = vst [vmem:[%s163 + $0xc8] sm:$0xff] %v5414
        %5447 = vst [vmem:[%s163 + $0xd0] sm:$0xff] %v5415
        %5448 = vst [vmem:[%s163 + $0xd8] sm:$0xff] %v5416
        %5449 = vst [vmem:[%s163 + $0xe0] sm:$0xff] %v5417
        %5450 = vst [vmem:[%s163 + $0xe8] sm:$0xff] %v5418
        %5451 = vst [vmem:[%s163 + $0xf0] sm:$0xff] %v5419
        %5452 = vst [vmem:[%s163 + $0xf8] sm:$0xff] %v5420
        %s5453 = sand.u32 %s90, 1
        %s5454 = scalar_lea.sflag [#allocation3], %s5453
        %s5455 = sand.u32 %s90, 1
        %s5456 = smul.addr %s5455, 256
        %s5457 = scalar_lea.vmem [#allocation2], %s5456
        // Predicated region
        $region29: #{tpu_custom_call.1} parent=27 // pred_check
          %p5458 = pneg %p100
        $region30: #{tpu_custom_call.1} parent=27 // pred_check_branch
          %5460 = sbr.rel (%p5458) target = $region32
        $region31: #{tpu_custom_call.1} parent=27 // pred_region
          %s5462 = ssub.s32 4096, 4096
          %5463 = vsyncadd %s5454, %s5462
          %s5464 = smul.addr %s21, 32
          %s5465 = sadd.s32 %s20, %s5464
          %s5466 = smul.addr %s5465, 128
          %s5467 = scalar_lea.hbm %s2, %s5466
          %s5468 = sshll.u32 %s5457, 4
          %s5469 = int_to_ptr.vmem [resolvable:$true] %s5468
          %5474 = dma.vmem_to_hbm [thread:$0]  %s5469, 4096, %s5467, %s5454, 128, 128, 8
        $region32: #{tpu_custom_call.1} parent=27 // pred_fallthru
          _
      $region28: #{tpu_custom_call.1} parent=5 // pred_fallthru
        _
      %p5475 = scmp.le.s32.totalorder 2, %s11
      // Predicated region
      $region33: #{tpu_custom_call.1} parent=5 // pred_check
        %p5476 = pneg %p5475
      $region34: #{tpu_custom_call.1} parent=5 // pred_check_branch
        %5478 = sbr.rel (%p5476) target = $region36
      $region35: #{tpu_custom_call.1} parent=5 // pred_region
        %s5479 = ssub.s32 %s11, 2
        // Predicated region
        $region37: #{tpu_custom_call.1} parent=35 // pred_check
          %p5480 = pneg %p106
        $region38: #{tpu_custom_call.1} parent=35 // pred_check_branch
          %5482 = sbr.rel (%p5480) target = $region40
        $region39: #{tpu_custom_call.1} parent=35 // pred_region
          %s5483 = sand.u32 %s91, 1
          %s5484 = scalar_lea.sflag [#allocation3], %s5483
          %s5485 = sand.u32 %s91, 1
          %s5486 = smul.addr %s5485, 256
          %s5487 = scalar_lea.vmem [#allocation2], %s5486
          %5488 = dma.done %s5484, 4096
        $region40: #{tpu_custom_call.1} parent=35 // pred_fallthru
          _
      $region36: #{tpu_custom_call.1} parent=5 // pred_fallthru
        _
    $region6: #{tpu_custom_call.1} parent=1 // loop_footer
      %s15 = sadd.s32 1, %s11
    $region7: #{tpu_custom_call.1} parent=1 // loop_footer_branch
      %10 = sbr.rel target = $region3
    $region8: #{tpu_custom_call.1} parent=1 // loop_exit
      _
    %5489 = vsyncpa [#allocation3], 1
    %s5490 = scalar_lea.sflag [#allocation3], 1
    %5491 = vsyncpa %s5490, 1

</llo_original>
